<compile_context>
chip_gen: v7x
topology: tpu7x:2x2x1
jax: 0.10.0
libtpu: 0.0.40
codegen_flags: <defaults>
</compile_context>

<pallas_src>
import functools
import math

import jax
import jax.numpy as jnp
from jax.experimental import pallas as pl
from jax.experimental.pallas import tpu as pltpu

# ----------------------------- model config ---------------------------------
B, S = 2, 8          # batch, sequence
D = 32               # hidden dim
H = 4                # attention heads
DH = D // H          # head dim
FFN = 64             # MLP hidden dim
V = 36               # vocab size (ESM-like)
L = 2                # transformer layers
N_TOK = B * S

V_PAD = 128          # lane-dense logits width (>= V, multiple of 128)
D_PAD = 128          # lane-dense hidden width (>= D, multiple of 128)

PAD_ID, BOS_ID, EOS_ID, MASK_ID, X_ID = 1, 0, 2, 32, 33


# --------------------------- fused forward kernel ----------------------------
def _dplm_fused_kernel(
    # inputs
    ids_ref, kbias_ref, emb_ref, emb_t_ref,
    ln1_g_ref, ln1_b_ref,
    w_q_ref, b_q_ref, w_k_ref, b_k_ref, w_v_ref, b_v_ref,
    w_o_ref, b_o_ref,
    ln2_g_ref, ln2_b_ref, w1_ref, b1_ref, w2_ref, b2_ref,
    lnf_g_ref, lnf_b_ref,
    lm_dense_w_ref, lm_dense_b_ref, lm_ln_g_ref, lm_ln_b_ref, lm_bias_ref,
    # outputs
    logits_ref, hidden_ref,
    *, pad_id,
):
    s_len = ids_ref.shape[0]
    v_sz, d = emb_ref.shape
    n_layers, num_heads = w_q_ref.shape[0], w_q_ref.shape[1]

    def layer_norm(h, g, b):
        mu = jnp.mean(h, axis=-1, keepdims=True)
        var = jnp.mean((h - mu) ** 2, axis=-1, keepdims=True)
        return (h - mu) * jax.lax.rsqrt(var + 1e-5) * g + b

    def mxu(a, w):
        # bf16 MXU inputs, f32 accumulation
        return jnp.dot(a.astype(jnp.bfloat16), w, preferred_element_type=jnp.float32)

    def bmm(eq, a, b):
        # head-leading batched matmul, bf16 inputs, f32 accumulation
        return jnp.einsum(eq, a.astype(jnp.bfloat16), b.astype(jnp.bfloat16),
                          preferred_element_type=jnp.float32)

    # ---- embedding: iota one-hot (pad mask folded in) -> MXU matmul ----
    ids = ids_ref[...]                                                  # (S, 1) int32
    is_tok = ids != pad_id                                              # (S, 1)
    vocab_iota = jax.lax.broadcasted_iota(jnp.int32, (s_len, v_sz), 1)
    one_hot = ((ids == vocab_iota) & is_tok).astype(jnp.bfloat16)       # (S, V)
    x = jnp.dot(one_hot, emb_ref[...], preferred_element_type=jnp.float32)  # (S, D) f32

    key_bias = kbias_ref[...]                                           # (S, S) f32

    for l in range(n_layers):
        # -------- self-attention (pre-LN): all heads in batched einsums --------
        h = layer_norm(x, ln1_g_ref[l], ln1_b_ref[l])
        hb = jnp.broadcast_to(h.astype(jnp.bfloat16)[None, :, :],
                              (num_heads, s_len, d))                    # (H, S, D)
        q = bmm('hsd,hdf->hsf', hb, w_q_ref[l]) + b_q_ref[l]            # (H,S,DH) (1/sqrt(dh) folded)
        k = bmm('hsd,hdf->hsf', hb, w_k_ref[l]) + b_k_ref[l]
        v = bmm('hsd,hdf->hsf', hb, w_v_ref[l]) + b_v_ref[l]
        # TODO(synk): ESM-2 / DPLM apply rotary position embeddings to q,k here.

        scores = bmm('hqd,hkd->hqk', q, k) + key_bias                   # (H, S, S)
        m = jnp.max(scores, axis=-1, keepdims=True)
        p = jnp.exp(scores - m)
        p = p * pl.reciprocal(jnp.sum(p, axis=-1, keepdims=True), approx=True)
        o = bmm('hqk,hkd->hqd', p, v)                                   # (H, S, DH)

        # per-head output projection + head sum == concat(heads) @ W_o
        ctx = bmm('hsf,hfe->hse', o, w_o_ref[l])                        # (H, S, D)
        x = x + jnp.sum(ctx, axis=0) + b_o_ref[l]

        # -------- MLP (pre-LN, GELU) --------
        h = layer_norm(x, ln2_g_ref[l], ln2_b_ref[l])
        h = mxu(h, w1_ref[l]) + b1_ref[l]
        # TODO(synk): ESM uses exact erf GELU; tanh approximation used here.
        h = jax.nn.gelu(h, approximate=True)
        x = x + mxu(h, w2_ref[l]) + b2_ref[l]

    # ---- final LN -> last_hidden_state (zero-padded to a lane-dense slab) ----
    h = layer_norm(x, lnf_g_ref[...], lnf_b_ref[...])
    pad_w = hidden_ref.shape[1] - d
    hidden_ref[...] = jnp.concatenate(
        [h, jnp.zeros((s_len, pad_w), jnp.float32)], axis=-1).astype(hidden_ref.dtype)

    # ---- ESM LM head: dense -> GELU -> LN -> tied decoder + bias ----
    z = mxu(h, lm_dense_w_ref[...]) + lm_dense_b_ref[...]
    z = jax.nn.gelu(z, approximate=True)
    z = layer_norm(z, lm_ln_g_ref[...], lm_ln_b_ref[...])
    logits = mxu(z, emb_t_ref[...]) + lm_bias_ref[...]                  # (S, V_PAD)
    logits_ref[...] = logits.astype(logits_ref.dtype)


# ----------------------------- wrapper ---------------------------------------
def _resident(shape):
    nd = len(shape)
    return pl.BlockSpec(tuple(shape), lambda i, _nd=nd: (0,) * _nd)


@functools.partial(jax.jit, static_argnames=("return_last_hidden_state",))
def dplm_forward(params, input_ids, return_last_hidden_state=False):
    """DiffusionProteinLanguageModel.forward: input_ids (B,S) int32 -> logits (B,S,V)."""
    b, s = input_ids.shape
    n = b * s
    scale = 1.0 / math.sqrt(DH)

    ids_col = input_ids.reshape(n, 1).astype(jnp.int32)
    # key-padding bias, replicated per query row so the per-batch kernel tile is (S, S)
    kb = jnp.where(input_ids == PAD_ID, -1e9, 0.0).astype(jnp.float32)      # (B, S)
    key_bias = jnp.repeat(kb, s, axis=0)                                    # (N, S)

    emb_bf = params["emb"].astype(jnp.bfloat16)
    # tied decoder weights / bias zero-padded to a lane-dense (·, V_PAD) slab
    emb_t_pad = jnp.zeros((D, V_PAD), jnp.bfloat16).at[:, :V].set(emb_bf.T)
    lm_bias_pad = jnp.zeros((1, V_PAD), jnp.float32).at[:, :V].set(params["lm_bias"])

    # split fused QKV into per-head weights (L,H,D,DH); fold 1/sqrt(dh) into q
    w_qkv, b_qkv = params["w_qkv"], params["b_qkv"]

    def per_head(w, bias, sc=1.0):
        w = (w * sc).reshape(L, D, H, DH).transpose(0, 2, 1, 3)             # (L,H,D,DH)
        bias = (bias * sc).reshape(L, 1, H, DH).transpose(0, 2, 1, 3)       # (L,H,1,DH)
        return w.astype(jnp.bfloat16), bias.astype(jnp.float32)

    w_q, b_q = per_head(w_qkv[:, :, 0:D], b_qkv[:, :, 0:D], scale)
    w_k, b_k = per_head(w_qkv[:, :, D:2 * D], b_qkv[:, :, D:2 * D])
    w_v, b_v = per_head(w_qkv[:, :, 2 * D:3 * D], b_qkv[:, :, 2 * D:3 * D])
    # output projection as (L,H,DH,D): per-head context projections summed == concat @ W_o
    w_o = params["w_o"].reshape(L, H, DH, D).astype(jnp.bfloat16)

    inputs = (
        ids_col, key_bias, emb_bf, emb_t_pad,
        params["ln1_g"], params["ln1_b"],
        w_q, b_q, w_k, b_k, w_v, b_v,
        w_o, params["b_o"],
        params["ln2_g"], params["ln2_b"],
        params["w1"].astype(jnp.bfloat16), params["b1"],
        params["w2"].astype(jnp.bfloat16), params["b2"],
        params["lnf_g"], params["lnf_b"],
        params["lm_dense_w"].astype(jnp.bfloat16), params["lm_dense_b"],
        params["lm_ln_g"], params["lm_ln_b"], lm_bias_pad,
    )

    in_specs = [
        pl.BlockSpec((s, 1), lambda i: (i, 0)),        # ids per batch
        pl.BlockSpec((s, s), lambda i: (i, 0)),        # key-padding bias per batch
    ] + [_resident(a.shape) for a in inputs[2:]]       # all weights: resident in VMEM

    out_specs = (
        pl.BlockSpec((s, V_PAD), lambda i: (i, 0)),    # lane-dense logits slab
        pl.BlockSpec((s, D_PAD), lambda i: (i, 0)),    # lane-dense hidden slab
    )

    kern = functools.partial(_dplm_fused_kernel, pad_id=PAD_ID)
    logits_pad, hidden_pad = pl.pallas_call(
        kern,
        out_shape=(jax.ShapeDtypeStruct((n, V_PAD), jnp.float32),
                   jax.ShapeDtypeStruct((n, D_PAD), jnp.float32)),
        grid=(b,),
        in_specs=in_specs,
        out_specs=out_specs,
        compiler_params=pltpu.CompilerParams(
            dimension_semantics=("parallel",),          # batches split across TCs on v7x
            vmem_limit_bytes=32 * 1024 * 1024),
        # TODO(synk): at real DPLM sizes, stream per-layer weights (layer grid axis /
        # emit_pipeline from pl.ANY) instead of keeping all L layers resident.
    )(*inputs)

    logits = logits_pad[:, :V].reshape(b, s, V)
    if return_last_hidden_state:
        return logits, hidden_pad[:, :D].reshape(b, s, D)
    return logits


# ----------------------------- parameters ------------------------------------
def init_params(key):
    ks = jax.random.split(key, 8)
    std = 0.02

    def nrm(k, shape):
        return std * jax.random.normal(k, shape, jnp.float32)

    return {
        "emb": nrm(ks[0], (V, D)),
        "ln1_g": jnp.ones((L, 1, D), jnp.float32),
        "ln1_b": jnp.zeros((L, 1, D), jnp.float32),
        "w_qkv": nrm(ks[1], (L, D, 3 * D)),
        "b_qkv": jnp.zeros((L, 1, 3 * D), jnp.float32),
        "w_o": nrm(ks[2], (L, D, D)),
        "b_o": jnp.zeros((L, 1, D), jnp.float32),
        "ln2_g": jnp.ones((L, 1, D), jnp.float32),
        "ln2_b": jnp.zeros((L, 1, D), jnp.float32),
        "w1": nrm(ks[3], (L, D, FFN)),
        "b1": jnp.zeros((L, 1, FFN), jnp.float32),
        "w2": nrm(ks[4], (L, FFN, D)),
        "b2": jnp.zeros((L, 1, D), jnp.float32),
        "lnf_g": jnp.ones((1, D), jnp.float32),
        "lnf_b": jnp.zeros((1, D), jnp.float32),
        "lm_dense_w": nrm(ks[5], (D, D)),
        "lm_dense_b": jnp.zeros((1, D), jnp.float32),
        "lm_ln_g": jnp.ones((1, D), jnp.float32),
        "lm_ln_b": jnp.zeros((1, D), jnp.float32),
        "lm_bias": jnp.zeros((1, V), jnp.float32),
    }


# ----------------------------- main -------------------------------------------
if __name__ == "__main__":
    key = jax.random.PRNGKey(0)
    pkey, ikey = jax.random.split(key)
    params = init_params(pkey)

    # deterministic example input: token ids avoiding special symbols, plus one pad
    input_ids = jax.random.randint(ikey, (B, S), 4, 30, dtype=jnp.int32)
    input_ids = input_ids.at[1, S - 1].set(PAD_ID)   # exercise key-padding mask

    logits, last_hidden = dplm_forward(params, input_ids, return_last_hidden_state=True)
    jax.block_until_ready(logits)
    jax.block_until_ready(last_hidden)

    assert logits.shape == (B, S, V), logits.shape
    assert last_hidden.shape == (B, S, D), last_hidden.shape
    assert logits.dtype == jnp.float32
    assert bool(jnp.isfinite(logits).all())
    assert bool(jnp.isfinite(last_hidden).all())

    print("KERNEL_OK")
</pallas_src>

<mosaic_0001>
module attributes {stable_mosaic.version = 11 : i64} {
  func.func @_dplm_fused_kernel(%arg0: i32, %arg1: memref<8x1xi32, #tpu.memory_space<vmem>>, %arg2: memref<8x8xf32, #tpu.memory_space<vmem>>, %arg3: memref<36x32xbf16, #tpu.memory_space<vmem>>, %arg4: memref<32x128xbf16, #tpu.memory_space<vmem>>, %arg5: memref<2x1x32xf32, #tpu.memory_space<vmem>>, %arg6: memref<2x1x32xf32, #tpu.memory_space<vmem>>, %arg7: memref<2x4x32x8xbf16, #tpu.memory_space<vmem>>, %arg8: memref<2x4x1x8xf32, #tpu.memory_space<vmem>>, %arg9: memref<2x4x32x8xbf16, #tpu.memory_space<vmem>>, %arg10: memref<2x4x1x8xf32, #tpu.memory_space<vmem>>, %arg11: memref<2x4x32x8xbf16, #tpu.memory_space<vmem>>, %arg12: memref<2x4x1x8xf32, #tpu.memory_space<vmem>>, %arg13: memref<2x4x8x32xbf16, #tpu.memory_space<vmem>>, %arg14: memref<2x1x32xf32, #tpu.memory_space<vmem>>, %arg15: memref<2x1x32xf32, #tpu.memory_space<vmem>>, %arg16: memref<2x1x32xf32, #tpu.memory_space<vmem>>, %arg17: memref<2x32x64xbf16, #tpu.memory_space<vmem>>, %arg18: memref<2x1x64xf32, #tpu.memory_space<vmem>>, %arg19: memref<2x64x32xbf16, #tpu.memory_space<vmem>>, %arg20: memref<2x1x32xf32, #tpu.memory_space<vmem>>, %arg21: memref<1x32xf32, #tpu.memory_space<vmem>>, %arg22: memref<1x32xf32, #tpu.memory_space<vmem>>, %arg23: memref<32x32xbf16, #tpu.memory_space<vmem>>, %arg24: memref<1x32xf32, #tpu.memory_space<vmem>>, %arg25: memref<1x32xf32, #tpu.memory_space<vmem>>, %arg26: memref<1x32xf32, #tpu.memory_space<vmem>>, %arg27: memref<1x128xf32, #tpu.memory_space<vmem>>, %arg28: memref<8x128xf32, #tpu.memory_space<vmem>>, %arg29: memref<8x128xf32, #tpu.memory_space<vmem>>) attributes {dimension_semantics = [#tpu.dimension_semantics<parallel>], iteration_bounds = array<i64: 2>, scalar_prefetch = 0 : i64, scratch_operands = 0 : i64, tpu.core_type = #tpu.core_type<tc>, window_params = [{transform_indices = @transform_0, window_bounds = array<i64: 8, 1>}, {transform_indices = @transform_1, window_bounds = array<i64: 8, 8>}, {pipeline_mode = #tpu.pipeline_mode<synchronous>, transform_indices = @transform_2, window_bounds = array<i64: 36, 32>}, {pipeline_mode = #tpu.pipeline_mode<synchronous>, transform_indices = @transform_3, window_bounds = array<i64: 32, 128>}, {pipeline_mode = #tpu.pipeline_mode<synchronous>, transform_indices = @transform_4, window_bounds = array<i64: 2, 1, 32>}, {pipeline_mode = #tpu.pipeline_mode<synchronous>, transform_indices = @transform_5, window_bounds = array<i64: 2, 1, 32>}, {pipeline_mode = #tpu.pipeline_mode<synchronous>, transform_indices = @transform_6, window_bounds = array<i64: 2, 4, 32, 8>}, {pipeline_mode = #tpu.pipeline_mode<synchronous>, transform_indices = @transform_7, window_bounds = array<i64: 2, 4, 1, 8>}, {pipeline_mode = #tpu.pipeline_mode<synchronous>, transform_indices = @transform_8, window_bounds = array<i64: 2, 4, 32, 8>}, {pipeline_mode = #tpu.pipeline_mode<synchronous>, transform_indices = @transform_9, window_bounds = array<i64: 2, 4, 1, 8>}, {pipeline_mode = #tpu.pipeline_mode<synchronous>, transform_indices = @transform_10, window_bounds = array<i64: 2, 4, 32, 8>}, {pipeline_mode = #tpu.pipeline_mode<synchronous>, transform_indices = @transform_11, window_bounds = array<i64: 2, 4, 1, 8>}, {pipeline_mode = #tpu.pipeline_mode<synchronous>, transform_indices = @transform_12, window_bounds = array<i64: 2, 4, 8, 32>}, {pipeline_mode = #tpu.pipeline_mode<synchronous>, transform_indices = @transform_13, window_bounds = array<i64: 2, 1, 32>}, {pipeline_mode = #tpu.pipeline_mode<synchronous>, transform_indices = @transform_14, window_bounds = array<i64: 2, 1, 32>}, {pipeline_mode = #tpu.pipeline_mode<synchronous>, transform_indices = @transform_15, window_bounds = array<i64: 2, 1, 32>}, {pipeline_mode = #tpu.pipeline_mode<synchronous>, transform_indices = @transform_16, window_bounds = array<i64: 2, 32, 64>}, {pipeline_mode = #tpu.pipeline_mode<synchronous>, transform_indices = @transform_17, window_bounds = array<i64: 2, 1, 64>}, {pipeline_mode = #tpu.pipeline_mode<synchronous>, transform_indices = @transform_18, window_bounds = array<i64: 2, 64, 32>}, {pipeline_mode = #tpu.pipeline_mode<synchronous>, transform_indices = @transform_19, window_bounds = array<i64: 2, 1, 32>}, {pipeline_mode = #tpu.pipeline_mode<synchronous>, transform_indices = @transform_20, window_bounds = array<i64: 1, 32>}, {pipeline_mode = #tpu.pipeline_mode<synchronous>, transform_indices = @transform_21, window_bounds = array<i64: 1, 32>}, {pipeline_mode = #tpu.pipeline_mode<synchronous>, transform_indices = @transform_22, window_bounds = array<i64: 32, 32>}, {pipeline_mode = #tpu.pipeline_mode<synchronous>, transform_indices = @transform_23, window_bounds = array<i64: 1, 32>}, {pipeline_mode = #tpu.pipeline_mode<synchronous>, transform_indices = @transform_24, window_bounds = array<i64: 1, 32>}, {pipeline_mode = #tpu.pipeline_mode<synchronous>, transform_indices = @transform_25, window_bounds = array<i64: 1, 32>}, {pipeline_mode = #tpu.pipeline_mode<synchronous>, transform_indices = @transform_26, window_bounds = array<i64: 1, 128>}, {transform_indices = @transform_27, window_bounds = array<i64: 8, 128>}, {transform_indices = @transform_28, window_bounds = array<i64: 8, 128>}]} {
    %c0 = arith.constant 0 : index
    %c0_0 = arith.constant 0 : index
    %0 = vector.load %arg1[%c0, %c0_0] : memref<8x1xi32, #tpu.memory_space<vmem>>, vector<8x1xi32>
    %c1_i32 = arith.constant 1 : i32
    %1 = vector.broadcast %c1_i32 : i32 to vector<8x1xi32>
    %2 = arith.cmpi ne, %0, %1 : vector<8x1xi32>
    %3 = tpu.iota {dimensions = array<i32: 1>} : vector<8x36xi32>
    %4 = vector.broadcast %0 : vector<8x1xi32> to vector<8x36xi32>
    %5 = arith.cmpi eq, %4, %3 : vector<8x36xi32>
    %6 = vector.broadcast %2 : vector<8x1xi1> to vector<8x36xi1>
    %7 = arith.andi %5, %6 : vector<8x36xi1>
    %8 = arith.extui %7 : vector<8x36xi1> to vector<8x36xi32>
    %9 = arith.sitofp %8 : vector<8x36xi32> to vector<8x36xf32>
    %10 = arith.truncf %9 : vector<8x36xf32> to vector<8x36xbf16>
    %c0_1 = arith.constant 0 : index
    %c0_2 = arith.constant 0 : index
    %11 = vector.load %arg3[%c0_1, %c0_2] : memref<36x32xbf16, #tpu.memory_space<vmem>>, vector<36x32xbf16>
    %cst = arith.constant dense<0.000000e+00> : vector<8x32xf32>
    %12 = tpu.matmul %10, %11, %cst {dimension_numbers = #tpu.dot_dimension_numbers<[1], [0], [0], [1], [0, 0, 1, 1], [], []>} : vector<8x36xbf16>, vector<36x32xbf16>, vector<8x32xf32> -> vector<8x32xf32>
    %c0_3 = arith.constant 0 : index
    %c0_4 = arith.constant 0 : index
    %13 = vector.load %arg2[%c0_3, %c0_4] : memref<8x8xf32, #tpu.memory_space<vmem>>, vector<8x8xf32>
    %c0_5 = arith.constant 0 : index
    %c0_6 = arith.constant 0 : index
    %c0_7 = arith.constant 0 : index
    %14 = vector.load %arg5[%c0_5, %c0_6, %c0_7] : memref<2x1x32xf32, #tpu.memory_space<vmem>>, vector<1x1x32xf32>
    %15 = vector.shape_cast %14 : vector<1x1x32xf32> to vector<1x32xf32>
    %c0_8 = arith.constant 0 : index
    %c0_9 = arith.constant 0 : index
    %c0_10 = arith.constant 0 : index
    %16 = vector.load %arg6[%c0_8, %c0_9, %c0_10] : memref<2x1x32xf32, #tpu.memory_space<vmem>>, vector<1x1x32xf32>
    %17 = vector.shape_cast %16 : vector<1x1x32xf32> to vector<1x32xf32>
    %cst_11 = arith.constant dense<0.000000e+00> : vector<8xf32>
    %18 = vector.multi_reduction <add>, %12, %cst_11 [1] : vector<8x32xf32> to vector<8xf32>
    %19 = vector.shape_cast %18 : vector<8xf32> to vector<8x1xf32>
    %cst_12 = arith.constant 3.200000e+01 : f32
    %20 = vector.broadcast %cst_12 : f32 to vector<8x1xf32>
    %21 = arith.divf %19, %20 : vector<8x1xf32>
    %22 = vector.broadcast %21 : vector<8x1xf32> to vector<8x32xf32>
    %23 = arith.subf %12, %22 : vector<8x32xf32>
    %24 = arith.mulf %23, %23 : vector<8x32xf32>
    %cst_13 = arith.constant dense<0.000000e+00> : vector<8xf32>
    %25 = vector.multi_reduction <add>, %24, %cst_13 [1] : vector<8x32xf32> to vector<8xf32>
    %26 = vector.shape_cast %25 : vector<8xf32> to vector<8x1xf32>
    %cst_14 = arith.constant 3.200000e+01 : f32
    %27 = vector.broadcast %cst_14 : f32 to vector<8x1xf32>
    %28 = arith.divf %26, %27 : vector<8x1xf32>
    %29 = vector.broadcast %21 : vector<8x1xf32> to vector<8x32xf32>
    %30 = arith.subf %12, %29 : vector<8x32xf32>
    %cst_15 = arith.constant 9.99999974E-6 : f32
    %31 = vector.broadcast %cst_15 : f32 to vector<8x1xf32>
    %32 = arith.addf %28, %31 : vector<8x1xf32>
    %33 = math.rsqrt %32 : vector<8x1xf32>
    %34 = vector.broadcast %33 : vector<8x1xf32> to vector<8x32xf32>
    %35 = arith.mulf %30, %34 : vector<8x32xf32>
    %36 = vector.broadcast %15 : vector<1x32xf32> to vector<8x32xf32>
    %37 = arith.mulf %35, %36 : vector<8x32xf32>
    %38 = vector.broadcast %17 : vector<1x32xf32> to vector<8x32xf32>
    %39 = arith.addf %37, %38 : vector<8x32xf32>
    %40 = arith.truncf %39 : vector<8x32xf32> to vector<8x32xbf16>
    %41 = vector.shape_cast %40 : vector<8x32xbf16> to vector<1x8x32xbf16>
    %42 = vector.shape_cast %41 : vector<1x8x32xbf16> to vector<1x8x32xbf16>
    %43 = vector.broadcast %42 : vector<1x8x32xbf16> to vector<4x8x32xbf16>
    %c0_16 = arith.constant 0 : index
    %c0_17 = arith.constant 0 : index
    %c0_18 = arith.constant 0 : index
    %c0_19 = arith.constant 0 : index
    %44 = vector.load %arg7[%c0_16, %c0_17, %c0_18, %c0_19] : memref<2x4x32x8xbf16, #tpu.memory_space<vmem>>, vector<1x4x32x8xbf16>
    %45 = vector.shape_cast %44 : vector<1x4x32x8xbf16> to vector<4x32x8xbf16>
    "tpu.trace_start"() <{level = 10 : i32, message = "hsd,hdf->hsf"}> : () -> ()
    %cst_20 = arith.constant dense<0.000000e+00> : vector<4x8x8xf32>
    %46 = tpu.matmul %43, %45, %cst_20 {dimension_numbers = #tpu.dot_dimension_numbers<[2], [1], [1], [2], [0, 0, 0, 1, 1, 2], [0], [0]>} : vector<4x8x32xbf16>, vector<4x32x8xbf16>, vector<4x8x8xf32> -> vector<4x8x8xf32>
    "tpu.trace_stop"() : () -> ()
    %c0_21 = arith.constant 0 : index
    %c0_22 = arith.constant 0 : index
    %c0_23 = arith.constant 0 : index
    %c0_24 = arith.constant 0 : index
    %47 = vector.load %arg8[%c0_21, %c0_22, %c0_23, %c0_24] : memref<2x4x1x8xf32, #tpu.memory_space<vmem>>, vector<1x4x1x8xf32>
    %48 = vector.shape_cast %47 : vector<1x4x1x8xf32> to vector<4x1x8xf32>
    %49 = vector.broadcast %48 : vector<4x1x8xf32> to vector<4x8x8xf32>
    %50 = arith.addf %46, %49 : vector<4x8x8xf32>
    %c0_25 = arith.constant 0 : index
    %c0_26 = arith.constant 0 : index
    %c0_27 = arith.constant 0 : index
    %c0_28 = arith.constant 0 : index
    %51 = vector.load %arg9[%c0_25, %c0_26, %c0_27, %c0_28] : memref<2x4x32x8xbf16, #tpu.memory_space<vmem>>, vector<1x4x32x8xbf16>
    %52 = vector.shape_cast %51 : vector<1x4x32x8xbf16> to vector<4x32x8xbf16>
    "tpu.trace_start"() <{level = 10 : i32, message = "hsd,hdf->hsf"}> : () -> ()
    %cst_29 = arith.constant dense<0.000000e+00> : vector<4x8x8xf32>
    %53 = tpu.matmul %43, %52, %cst_29 {dimension_numbers = #tpu.dot_dimension_numbers<[2], [1], [1], [2], [0, 0, 0, 1, 1, 2], [0], [0]>} : vector<4x8x32xbf16>, vector<4x32x8xbf16>, vector<4x8x8xf32> -> vector<4x8x8xf32>
    "tpu.trace_stop"() : () -> ()
    %c0_30 = arith.constant 0 : index
    %c0_31 = arith.constant 0 : index
    %c0_32 = arith.constant 0 : index
    %c0_33 = arith.constant 0 : index
    %54 = vector.load %arg10[%c0_30, %c0_31, %c0_32, %c0_33] : memref<2x4x1x8xf32, #tpu.memory_space<vmem>>, vector<1x4x1x8xf32>
    %55 = vector.shape_cast %54 : vector<1x4x1x8xf32> to vector<4x1x8xf32>
    %56 = vector.broadcast %55 : vector<4x1x8xf32> to vector<4x8x8xf32>
    %57 = arith.addf %53, %56 : vector<4x8x8xf32>
    %c0_34 = arith.constant 0 : index
    %c0_35 = arith.constant 0 : index
    %c0_36 = arith.constant 0 : index
    %c0_37 = arith.constant 0 : index
    %58 = vector.load %arg11[%c0_34, %c0_35, %c0_36, %c0_37] : memref<2x4x32x8xbf16, #tpu.memory_space<vmem>>, vector<1x4x32x8xbf16>
    %59 = vector.shape_cast %58 : vector<1x4x32x8xbf16> to vector<4x32x8xbf16>
    "tpu.trace_start"() <{level = 10 : i32, message = "hsd,hdf->hsf"}> : () -> ()
    %cst_38 = arith.constant dense<0.000000e+00> : vector<4x8x8xf32>
    %60 = tpu.matmul %43, %59, %cst_38 {dimension_numbers = #tpu.dot_dimension_numbers<[2], [1], [1], [2], [0, 0, 0, 1, 1, 2], [0], [0]>} : vector<4x8x32xbf16>, vector<4x32x8xbf16>, vector<4x8x8xf32> -> vector<4x8x8xf32>
    "tpu.trace_stop"() : () -> ()
    %c0_39 = arith.constant 0 : index
    %c0_40 = arith.constant 0 : index
    %c0_41 = arith.constant 0 : index
    %c0_42 = arith.constant 0 : index
    %61 = vector.load %arg12[%c0_39, %c0_40, %c0_41, %c0_42] : memref<2x4x1x8xf32, #tpu.memory_space<vmem>>, vector<1x4x1x8xf32>
    %62 = vector.shape_cast %61 : vector<1x4x1x8xf32> to vector<4x1x8xf32>
    %63 = vector.broadcast %62 : vector<4x1x8xf32> to vector<4x8x8xf32>
    %64 = arith.addf %60, %63 : vector<4x8x8xf32>
    %65 = arith.truncf %50 : vector<4x8x8xf32> to vector<4x8x8xbf16>
    %66 = arith.truncf %57 : vector<4x8x8xf32> to vector<4x8x8xbf16>
    "tpu.trace_start"() <{level = 10 : i32, message = "hqd,hkd->hqk"}> : () -> ()
    %cst_43 = arith.constant dense<0.000000e+00> : vector<4x8x8xf32>
    %67 = tpu.matmul %65, %66, %cst_43 {dimension_numbers = #tpu.dot_dimension_numbers<[2], [2], [1], [1], [0, 0, 0, 1, 1, 1], [0], [0]>} : vector<4x8x8xbf16>, vector<4x8x8xbf16>, vector<4x8x8xf32> -> vector<4x8x8xf32>
    "tpu.trace_stop"() : () -> ()
    %68 = vector.shape_cast %13 : vector<8x8xf32> to vector<1x8x8xf32>
    %69 = vector.broadcast %68 : vector<1x8x8xf32> to vector<4x8x8xf32>
    %70 = arith.addf %67, %69 : vector<4x8x8xf32>
    %cst_44 = arith.constant dense<0xFF800000> : vector<4x8xf32>
    %71 = vector.multi_reduction <maximumf>, %70, %cst_44 [2] : vector<4x8x8xf32> to vector<4x8xf32>
    %72 = vector.shape_cast %71 : vector<4x8xf32> to vector<4x8x1xf32>
    %73 = vector.broadcast %72 : vector<4x8x1xf32> to vector<4x8x8xf32>
    %74 = arith.subf %70, %73 : vector<4x8x8xf32>
    %75 = math.exp %74 : vector<4x8x8xf32>
    %cst_45 = arith.constant dense<0.000000e+00> : vector<4x8xf32>
    %76 = vector.multi_reduction <add>, %75, %cst_45 [2] : vector<4x8x8xf32> to vector<4x8xf32>
    %77 = vector.shape_cast %76 : vector<4x8xf32> to vector<4x8x1xf32>
    %78 = tpu.reciprocal %77 {approx = true} : vector<4x8x1xf32> -> vector<4x8x1xf32>
    %79 = vector.broadcast %78 : vector<4x8x1xf32> to vector<4x8x8xf32>
    %80 = arith.mulf %75, %79 : vector<4x8x8xf32>
    %81 = arith.truncf %80 : vector<4x8x8xf32> to vector<4x8x8xbf16>
    %82 = arith.truncf %64 : vector<4x8x8xf32> to vector<4x8x8xbf16>
    "tpu.trace_start"() <{level = 10 : i32, message = "hqk,hkd->hqd"}> : () -> ()
    %cst_46 = arith.constant dense<0.000000e+00> : vector<4x8x8xf32>
    %83 = tpu.matmul %81, %82, %cst_46 {dimension_numbers = #tpu.dot_dimension_numbers<[2], [1], [1], [2], [0, 0, 0, 1, 1, 2], [0], [0]>} : vector<4x8x8xbf16>, vector<4x8x8xbf16>, vector<4x8x8xf32> -> vector<4x8x8xf32>
    "tpu.trace_stop"() : () -> ()
    %c0_47 = arith.constant 0 : index
    %c0_48 = arith.constant 0 : index
    %c0_49 = arith.constant 0 : index
    %c0_50 = arith.constant 0 : index
    %84 = vector.load %arg13[%c0_47, %c0_48, %c0_49, %c0_50] : memref<2x4x8x32xbf16, #tpu.memory_space<vmem>>, vector<1x4x8x32xbf16>
    %85 = vector.shape_cast %84 : vector<1x4x8x32xbf16> to vector<4x8x32xbf16>
    %86 = arith.truncf %83 : vector<4x8x8xf32> to vector<4x8x8xbf16>
    "tpu.trace_start"() <{level = 10 : i32, message = "hsf,hfe->hse"}> : () -> ()
    %cst_51 = arith.constant dense<0.000000e+00> : vector<4x8x32xf32>
    %87 = tpu.matmul %86, %85, %cst_51 {dimension_numbers = #tpu.dot_dimension_numbers<[2], [1], [1], [2], [0, 0, 0, 1, 1, 2], [0], [0]>} : vector<4x8x8xbf16>, vector<4x8x32xbf16>, vector<4x8x32xf32> -> vector<4x8x32xf32>
    "tpu.trace_stop"() : () -> ()
    %cst_52 = arith.constant dense<0.000000e+00> : vector<8x32xf32>
    %88 = vector.multi_reduction <add>, %87, %cst_52 [0] : vector<4x8x32xf32> to vector<8x32xf32>
    %89 = arith.addf %12, %88 : vector<8x32xf32>
    %c0_53 = arith.constant 0 : index
    %c0_54 = arith.constant 0 : index
    %c0_55 = arith.constant 0 : index
    %90 = vector.load %arg14[%c0_53, %c0_54, %c0_55] : memref<2x1x32xf32, #tpu.memory_space<vmem>>, vector<1x1x32xf32>
    %91 = vector.shape_cast %90 : vector<1x1x32xf32> to vector<1x32xf32>
    %92 = vector.broadcast %91 : vector<1x32xf32> to vector<8x32xf32>
    %93 = arith.addf %89, %92 : vector<8x32xf32>
    %c0_56 = arith.constant 0 : index
    %c0_57 = arith.constant 0 : index
    %c0_58 = arith.constant 0 : index
    %94 = vector.load %arg15[%c0_56, %c0_57, %c0_58] : memref<2x1x32xf32, #tpu.memory_space<vmem>>, vector<1x1x32xf32>
    %95 = vector.shape_cast %94 : vector<1x1x32xf32> to vector<1x32xf32>
    %c0_59 = arith.constant 0 : index
    %c0_60 = arith.constant 0 : index
    %c0_61 = arith.constant 0 : index
    %96 = vector.load %arg16[%c0_59, %c0_60, %c0_61] : memref<2x1x32xf32, #tpu.memory_space<vmem>>, vector<1x1x32xf32>
    %97 = vector.shape_cast %96 : vector<1x1x32xf32> to vector<1x32xf32>
    %cst_62 = arith.constant dense<0.000000e+00> : vector<8xf32>
    %98 = vector.multi_reduction <add>, %93, %cst_62 [1] : vector<8x32xf32> to vector<8xf32>
    %99 = vector.shape_cast %98 : vector<8xf32> to vector<8x1xf32>
    %cst_63 = arith.constant 3.200000e+01 : f32
    %100 = vector.broadcast %cst_63 : f32 to vector<8x1xf32>
    %101 = arith.divf %99, %100 : vector<8x1xf32>
    %102 = vector.broadcast %101 : vector<8x1xf32> to vector<8x32xf32>
    %103 = arith.subf %93, %102 : vector<8x32xf32>
    %104 = arith.mulf %103, %103 : vector<8x32xf32>
    %cst_64 = arith.constant dense<0.000000e+00> : vector<8xf32>
    %105 = vector.multi_reduction <add>, %104, %cst_64 [1] : vector<8x32xf32> to vector<8xf32>
    %106 = vector.shape_cast %105 : vector<8xf32> to vector<8x1xf32>
    %cst_65 = arith.constant 3.200000e+01 : f32
    %107 = vector.broadcast %cst_65 : f32 to vector<8x1xf32>
    %108 = arith.divf %106, %107 : vector<8x1xf32>
    %109 = vector.broadcast %101 : vector<8x1xf32> to vector<8x32xf32>
    %110 = arith.subf %93, %109 : vector<8x32xf32>
    %cst_66 = arith.constant 9.99999974E-6 : f32
    %111 = vector.broadcast %cst_66 : f32 to vector<8x1xf32>
    %112 = arith.addf %108, %111 : vector<8x1xf32>
    %113 = math.rsqrt %112 : vector<8x1xf32>
    %114 = vector.broadcast %113 : vector<8x1xf32> to vector<8x32xf32>
    %115 = arith.mulf %110, %114 : vector<8x32xf32>
    %116 = vector.broadcast %95 : vector<1x32xf32> to vector<8x32xf32>
    %117 = arith.mulf %115, %116 : vector<8x32xf32>
    %118 = vector.broadcast %97 : vector<1x32xf32> to vector<8x32xf32>
    %119 = arith.addf %117, %118 : vector<8x32xf32>
    %c0_67 = arith.constant 0 : index
    %c0_68 = arith.constant 0 : index
    %c0_69 = arith.constant 0 : index
    %120 = vector.load %arg17[%c0_67, %c0_68, %c0_69] : memref<2x32x64xbf16, #tpu.memory_space<vmem>>, vector<1x32x64xbf16>
    %121 = vector.shape_cast %120 : vector<1x32x64xbf16> to vector<32x64xbf16>
    %122 = arith.truncf %119 : vector<8x32xf32> to vector<8x32xbf16>
    %cst_70 = arith.constant dense<0.000000e+00> : vector<8x64xf32>
    %123 = tpu.matmul %122, %121, %cst_70 {dimension_numbers = #tpu.dot_dimension_numbers<[1], [0], [0], [1], [0, 0, 1, 1], [], []>} : vector<8x32xbf16>, vector<32x64xbf16>, vector<8x64xf32> -> vector<8x64xf32>
    %c0_71 = arith.constant 0 : index
    %c0_72 = arith.constant 0 : index
    %c0_73 = arith.constant 0 : index
    %124 = vector.load %arg18[%c0_71, %c0_72, %c0_73] : memref<2x1x64xf32, #tpu.memory_space<vmem>>, vector<1x1x64xf32>
    %125 = vector.shape_cast %124 : vector<1x1x64xf32> to vector<1x64xf32>
    %126 = vector.broadcast %125 : vector<1x64xf32> to vector<8x64xf32>
    %127 = arith.addf %123, %126 : vector<8x64xf32>
    %128 = arith.mulf %127, %127 : vector<8x64xf32>
    %129 = arith.mulf %127, %128 : vector<8x64xf32>
    %cst_74 = arith.constant 4.471500e-02 : f32
    %130 = vector.broadcast %cst_74 : f32 to vector<8x64xf32>
    %131 = arith.mulf %130, %129 : vector<8x64xf32>
    %132 = arith.addf %127, %131 : vector<8x64xf32>
    %cst_75 = arith.constant 0.797884583 : f32
    %133 = vector.broadcast %cst_75 : f32 to vector<8x64xf32>
    %134 = arith.mulf %133, %132 : vector<8x64xf32>
    %135 = math.tanh %134 : vector<8x64xf32>
    %cst_76 = arith.constant 1.000000e+00 : f32
    %136 = vector.broadcast %cst_76 : f32 to vector<8x64xf32>
    %137 = arith.addf %136, %135 : vector<8x64xf32>
    %cst_77 = arith.constant 5.000000e-01 : f32
    %138 = vector.broadcast %cst_77 : f32 to vector<8x64xf32>
    %139 = arith.mulf %138, %137 : vector<8x64xf32>
    %140 = arith.mulf %127, %139 : vector<8x64xf32>
    %c0_78 = arith.constant 0 : index
    %c0_79 = arith.constant 0 : index
    %c0_80 = arith.constant 0 : index
    %141 = vector.load %arg19[%c0_78, %c0_79, %c0_80] : memref<2x64x32xbf16, #tpu.memory_space<vmem>>, vector<1x64x32xbf16>
    %142 = vector.shape_cast %141 : vector<1x64x32xbf16> to vector<64x32xbf16>
    %143 = arith.truncf %140 : vector<8x64xf32> to vector<8x64xbf16>
    %cst_81 = arith.constant dense<0.000000e+00> : vector<8x32xf32>
    %144 = tpu.matmul %143, %142, %cst_81 {dimension_numbers = #tpu.dot_dimension_numbers<[1], [0], [0], [1], [0, 0, 1, 1], [], []>} : vector<8x64xbf16>, vector<64x32xbf16>, vector<8x32xf32> -> vector<8x32xf32>
    %145 = arith.addf %93, %144 : vector<8x32xf32>
    %c0_82 = arith.constant 0 : index
    %c0_83 = arith.constant 0 : index
    %c0_84 = arith.constant 0 : index
    %146 = vector.load %arg20[%c0_82, %c0_83, %c0_84] : memref<2x1x32xf32, #tpu.memory_space<vmem>>, vector<1x1x32xf32>
    %147 = vector.shape_cast %146 : vector<1x1x32xf32> to vector<1x32xf32>
    %148 = vector.broadcast %147 : vector<1x32xf32> to vector<8x32xf32>
    %149 = arith.addf %145, %148 : vector<8x32xf32>
    %c1 = arith.constant 1 : index
    %c0_85 = arith.constant 0 : index
    %c0_86 = arith.constant 0 : index
    %150 = vector.load %arg5[%c1, %c0_85, %c0_86] : memref<2x1x32xf32, #tpu.memory_space<vmem>>, vector<1x1x32xf32>
    %151 = vector.shape_cast %150 : vector<1x1x32xf32> to vector<1x32xf32>
    %c1_87 = arith.constant 1 : index
    %c0_88 = arith.constant 0 : index
    %c0_89 = arith.constant 0 : index
    %152 = vector.load %arg6[%c1_87, %c0_88, %c0_89] : memref<2x1x32xf32, #tpu.memory_space<vmem>>, vector<1x1x32xf32>
    %153 = vector.shape_cast %152 : vector<1x1x32xf32> to vector<1x32xf32>
    %cst_90 = arith.constant dense<0.000000e+00> : vector<8xf32>
    %154 = vector.multi_reduction <add>, %149, %cst_90 [1] : vector<8x32xf32> to vector<8xf32>
    %155 = vector.shape_cast %154 : vector<8xf32> to vector<8x1xf32>
    %cst_91 = arith.constant 3.200000e+01 : f32
    %156 = vector.broadcast %cst_91 : f32 to vector<8x1xf32>
    %157 = arith.divf %155, %156 : vector<8x1xf32>
    %158 = vector.broadcast %157 : vector<8x1xf32> to vector<8x32xf32>
    %159 = arith.subf %149, %158 : vector<8x32xf32>
    %160 = arith.mulf %159, %159 : vector<8x32xf32>
    %cst_92 = arith.constant dense<0.000000e+00> : vector<8xf32>
    %161 = vector.multi_reduction <add>, %160, %cst_92 [1] : vector<8x32xf32> to vector<8xf32>
    %162 = vector.shape_cast %161 : vector<8xf32> to vector<8x1xf32>
    %cst_93 = arith.constant 3.200000e+01 : f32
    %163 = vector.broadcast %cst_93 : f32 to vector<8x1xf32>
    %164 = arith.divf %162, %163 : vector<8x1xf32>
    %165 = vector.broadcast %157 : vector<8x1xf32> to vector<8x32xf32>
    %166 = arith.subf %149, %165 : vector<8x32xf32>
    %cst_94 = arith.constant 9.99999974E-6 : f32
    %167 = vector.broadcast %cst_94 : f32 to vector<8x1xf32>
    %168 = arith.addf %164, %167 : vector<8x1xf32>
    %169 = math.rsqrt %168 : vector<8x1xf32>
    %170 = vector.broadcast %169 : vector<8x1xf32> to vector<8x32xf32>
    %171 = arith.mulf %166, %170 : vector<8x32xf32>
    %172 = vector.broadcast %151 : vector<1x32xf32> to vector<8x32xf32>
    %173 = arith.mulf %171, %172 : vector<8x32xf32>
    %174 = vector.broadcast %153 : vector<1x32xf32> to vector<8x32xf32>
    %175 = arith.addf %173, %174 : vector<8x32xf32>
    %176 = arith.truncf %175 : vector<8x32xf32> to vector<8x32xbf16>
    %177 = vector.shape_cast %176 : vector<8x32xbf16> to vector<1x8x32xbf16>
    %178 = vector.shape_cast %177 : vector<1x8x32xbf16> to vector<1x8x32xbf16>
    %179 = vector.broadcast %178 : vector<1x8x32xbf16> to vector<4x8x32xbf16>
    %c1_95 = arith.constant 1 : index
    %c0_96 = arith.constant 0 : index
    %c0_97 = arith.constant 0 : index
    %c0_98 = arith.constant 0 : index
    %180 = vector.load %arg7[%c1_95, %c0_96, %c0_97, %c0_98] : memref<2x4x32x8xbf16, #tpu.memory_space<vmem>>, vector<1x4x32x8xbf16>
    %181 = vector.shape_cast %180 : vector<1x4x32x8xbf16> to vector<4x32x8xbf16>
    "tpu.trace_start"() <{level = 10 : i32, message = "hsd,hdf->hsf"}> : () -> ()
    %cst_99 = arith.constant dense<0.000000e+00> : vector<4x8x8xf32>
    %182 = tpu.matmul %179, %181, %cst_99 {dimension_numbers = #tpu.dot_dimension_numbers<[2], [1], [1], [2], [0, 0, 0, 1, 1, 2], [0], [0]>} : vector<4x8x32xbf16>, vector<4x32x8xbf16>, vector<4x8x8xf32> -> vector<4x8x8xf32>
    "tpu.trace_stop"() : () -> ()
    %c1_100 = arith.constant 1 : index
    %c0_101 = arith.constant 0 : index
    %c0_102 = arith.constant 0 : index
    %c0_103 = arith.constant 0 : index
    %183 = vector.load %arg8[%c1_100, %c0_101, %c0_102, %c0_103] : memref<2x4x1x8xf32, #tpu.memory_space<vmem>>, vector<1x4x1x8xf32>
    %184 = vector.shape_cast %183 : vector<1x4x1x8xf32> to vector<4x1x8xf32>
    %185 = vector.broadcast %184 : vector<4x1x8xf32> to vector<4x8x8xf32>
    %186 = arith.addf %182, %185 : vector<4x8x8xf32>
    %c1_104 = arith.constant 1 : index
    %c0_105 = arith.constant 0 : index
    %c0_106 = arith.constant 0 : index
    %c0_107 = arith.constant 0 : index
    %187 = vector.load %arg9[%c1_104, %c0_105, %c0_106, %c0_107] : memref<2x4x32x8xbf16, #tpu.memory_space<vmem>>, vector<1x4x32x8xbf16>
    %188 = vector.shape_cast %187 : vector<1x4x32x8xbf16> to vector<4x32x8xbf16>
    "tpu.trace_start"() <{level = 10 : i32, message = "hsd,hdf->hsf"}> : () -> ()
    %cst_108 = arith.constant dense<0.000000e+00> : vector<4x8x8xf32>
    %189 = tpu.matmul %179, %188, %cst_108 {dimension_numbers = #tpu.dot_dimension_numbers<[2], [1], [1], [2], [0, 0, 0, 1, 1, 2], [0], [0]>} : vector<4x8x32xbf16>, vector<4x32x8xbf16>, vector<4x8x8xf32> -> vector<4x8x8xf32>
    "tpu.trace_stop"() : () -> ()
    %c1_109 = arith.constant 1 : index
    %c0_110 = arith.constant 0 : index
    %c0_111 = arith.constant 0 : index
    %c0_112 = arith.constant 0 : index
    %190 = vector.load %arg10[%c1_109, %c0_110, %c0_111, %c0_112] : memref<2x4x1x8xf32, #tpu.memory_space<vmem>>, vector<1x4x1x8xf32>
    %191 = vector.shape_cast %190 : vector<1x4x1x8xf32> to vector<4x1x8xf32>
    %192 = vector.broadcast %191 : vector<4x1x8xf32> to vector<4x8x8xf32>
    %193 = arith.addf %189, %192 : vector<4x8x8xf32>
    %c1_113 = arith.constant 1 : index
    %c0_114 = arith.constant 0 : index
    %c0_115 = arith.constant 0 : index
    %c0_116 = arith.constant 0 : index
    %194 = vector.load %arg11[%c1_113, %c0_114, %c0_115, %c0_116] : memref<2x4x32x8xbf16, #tpu.memory_space<vmem>>, vector<1x4x32x8xbf16>
    %195 = vector.shape_cast %194 : vector<1x4x32x8xbf16> to vector<4x32x8xbf16>
    "tpu.trace_start"() <{level = 10 : i32, message = "hsd,hdf->hsf"}> : () -> ()
    %cst_117 = arith.constant dense<0.000000e+00> : vector<4x8x8xf32>
    %196 = tpu.matmul %179, %195, %cst_117 {dimension_numbers = #tpu.dot_dimension_numbers<[2], [1], [1], [2], [0, 0, 0, 1, 1, 2], [0], [0]>} : vector<4x8x32xbf16>, vector<4x32x8xbf16>, vector<4x8x8xf32> -> vector<4x8x8xf32>
    "tpu.trace_stop"() : () -> ()
    %c1_118 = arith.constant 1 : index
    %c0_119 = arith.constant 0 : index
    %c0_120 = arith.constant 0 : index
    %c0_121 = arith.constant 0 : index
    %197 = vector.load %arg12[%c1_118, %c0_119, %c0_120, %c0_121] : memref<2x4x1x8xf32, #tpu.memory_space<vmem>>, vector<1x4x1x8xf32>
    %198 = vector.shape_cast %197 : vector<1x4x1x8xf32> to vector<4x1x8xf32>
    %199 = vector.broadcast %198 : vector<4x1x8xf32> to vector<4x8x8xf32>
    %200 = arith.addf %196, %199 : vector<4x8x8xf32>
    %201 = arith.truncf %186 : vector<4x8x8xf32> to vector<4x8x8xbf16>
    %202 = arith.truncf %193 : vector<4x8x8xf32> to vector<4x8x8xbf16>
    "tpu.trace_start"() <{level = 10 : i32, message = "hqd,hkd->hqk"}> : () -> ()
    %cst_122 = arith.constant dense<0.000000e+00> : vector<4x8x8xf32>
    %203 = tpu.matmul %201, %202, %cst_122 {dimension_numbers = #tpu.dot_dimension_numbers<[2], [2], [1], [1], [0, 0, 0, 1, 1, 1], [0], [0]>} : vector<4x8x8xbf16>, vector<4x8x8xbf16>, vector<4x8x8xf32> -> vector<4x8x8xf32>
    "tpu.trace_stop"() : () -> ()
    %204 = vector.shape_cast %13 : vector<8x8xf32> to vector<1x8x8xf32>
    %205 = vector.broadcast %204 : vector<1x8x8xf32> to vector<4x8x8xf32>
    %206 = arith.addf %203, %205 : vector<4x8x8xf32>
    %cst_123 = arith.constant dense<0xFF800000> : vector<4x8xf32>
    %207 = vector.multi_reduction <maximumf>, %206, %cst_123 [2] : vector<4x8x8xf32> to vector<4x8xf32>
    %208 = vector.shape_cast %207 : vector<4x8xf32> to vector<4x8x1xf32>
    %209 = vector.broadcast %208 : vector<4x8x1xf32> to vector<4x8x8xf32>
    %210 = arith.subf %206, %209 : vector<4x8x8xf32>
    %211 = math.exp %210 : vector<4x8x8xf32>
    %cst_124 = arith.constant dense<0.000000e+00> : vector<4x8xf32>
    %212 = vector.multi_reduction <add>, %211, %cst_124 [2] : vector<4x8x8xf32> to vector<4x8xf32>
    %213 = vector.shape_cast %212 : vector<4x8xf32> to vector<4x8x1xf32>
    %214 = tpu.reciprocal %213 {approx = true} : vector<4x8x1xf32> -> vector<4x8x1xf32>
    %215 = vector.broadcast %214 : vector<4x8x1xf32> to vector<4x8x8xf32>
    %216 = arith.mulf %211, %215 : vector<4x8x8xf32>
    %217 = arith.truncf %216 : vector<4x8x8xf32> to vector<4x8x8xbf16>
    %218 = arith.truncf %200 : vector<4x8x8xf32> to vector<4x8x8xbf16>
    "tpu.trace_start"() <{level = 10 : i32, message = "hqk,hkd->hqd"}> : () -> ()
    %cst_125 = arith.constant dense<0.000000e+00> : vector<4x8x8xf32>
    %219 = tpu.matmul %217, %218, %cst_125 {dimension_numbers = #tpu.dot_dimension_numbers<[2], [1], [1], [2], [0, 0, 0, 1, 1, 2], [0], [0]>} : vector<4x8x8xbf16>, vector<4x8x8xbf16>, vector<4x8x8xf32> -> vector<4x8x8xf32>
    "tpu.trace_stop"() : () -> ()
    %c1_126 = arith.constant 1 : index
    %c0_127 = arith.constant 0 : index
    %c0_128 = arith.constant 0 : index
    %c0_129 = arith.constant 0 : index
    %220 = vector.load %arg13[%c1_126, %c0_127, %c0_128, %c0_129] : memref<2x4x8x32xbf16, #tpu.memory_space<vmem>>, vector<1x4x8x32xbf16>
    %221 = vector.shape_cast %220 : vector<1x4x8x32xbf16> to vector<4x8x32xbf16>
    %222 = arith.truncf %219 : vector<4x8x8xf32> to vector<4x8x8xbf16>
    "tpu.trace_start"() <{level = 10 : i32, message = "hsf,hfe->hse"}> : () -> ()
    %cst_130 = arith.constant dense<0.000000e+00> : vector<4x8x32xf32>
    %223 = tpu.matmul %222, %221, %cst_130 {dimension_numbers = #tpu.dot_dimension_numbers<[2], [1], [1], [2], [0, 0, 0, 1, 1, 2], [0], [0]>} : vector<4x8x8xbf16>, vector<4x8x32xbf16>, vector<4x8x32xf32> -> vector<4x8x32xf32>
    "tpu.trace_stop"() : () -> ()
    %cst_131 = arith.constant dense<0.000000e+00> : vector<8x32xf32>
    %224 = vector.multi_reduction <add>, %223, %cst_131 [0] : vector<4x8x32xf32> to vector<8x32xf32>
    %225 = arith.addf %149, %224 : vector<8x32xf32>
    %c1_132 = arith.constant 1 : index
    %c0_133 = arith.constant 0 : index
    %c0_134 = arith.constant 0 : index
    %226 = vector.load %arg14[%c1_132, %c0_133, %c0_134] : memref<2x1x32xf32, #tpu.memory_space<vmem>>, vector<1x1x32xf32>
    %227 = vector.shape_cast %226 : vector<1x1x32xf32> to vector<1x32xf32>
    %228 = vector.broadcast %227 : vector<1x32xf32> to vector<8x32xf32>
    %229 = arith.addf %225, %228 : vector<8x32xf32>
    %c1_135 = arith.constant 1 : index
    %c0_136 = arith.constant 0 : index
    %c0_137 = arith.constant 0 : index
    %230 = vector.load %arg15[%c1_135, %c0_136, %c0_137] : memref<2x1x32xf32, #tpu.memory_space<vmem>>, vector<1x1x32xf32>
    %231 = vector.shape_cast %230 : vector<1x1x32xf32> to vector<1x32xf32>
    %c1_138 = arith.constant 1 : index
    %c0_139 = arith.constant 0 : index
    %c0_140 = arith.constant 0 : index
    %232 = vector.load %arg16[%c1_138, %c0_139, %c0_140] : memref<2x1x32xf32, #tpu.memory_space<vmem>>, vector<1x1x32xf32>
    %233 = vector.shape_cast %232 : vector<1x1x32xf32> to vector<1x32xf32>
    %cst_141 = arith.constant dense<0.000000e+00> : vector<8xf32>
    %234 = vector.multi_reduction <add>, %229, %cst_141 [1] : vector<8x32xf32> to vector<8xf32>
    %235 = vector.shape_cast %234 : vector<8xf32> to vector<8x1xf32>
    %cst_142 = arith.constant 3.200000e+01 : f32
    %236 = vector.broadcast %cst_142 : f32 to vector<8x1xf32>
    %237 = arith.divf %235, %236 : vector<8x1xf32>
    %238 = vector.broadcast %237 : vector<8x1xf32> to vector<8x32xf32>
    %239 = arith.subf %229, %238 : vector<8x32xf32>
    %240 = arith.mulf %239, %239 : vector<8x32xf32>
    %cst_143 = arith.constant dense<0.000000e+00> : vector<8xf32>
    %241 = vector.multi_reduction <add>, %240, %cst_143 [1] : vector<8x32xf32> to vector<8xf32>
    %242 = vector.shape_cast %241 : vector<8xf32> to vector<8x1xf32>
    %cst_144 = arith.constant 3.200000e+01 : f32
    %243 = vector.broadcast %cst_144 : f32 to vector<8x1xf32>
    %244 = arith.divf %242, %243 : vector<8x1xf32>
    %245 = vector.broadcast %237 : vector<8x1xf32> to vector<8x32xf32>
    %246 = arith.subf %229, %245 : vector<8x32xf32>
    %cst_145 = arith.constant 9.99999974E-6 : f32
    %247 = vector.broadcast %cst_145 : f32 to vector<8x1xf32>
    %248 = arith.addf %244, %247 : vector<8x1xf32>
    %249 = math.rsqrt %248 : vector<8x1xf32>
    %250 = vector.broadcast %249 : vector<8x1xf32> to vector<8x32xf32>
    %251 = arith.mulf %246, %250 : vector<8x32xf32>
    %252 = vector.broadcast %231 : vector<1x32xf32> to vector<8x32xf32>
    %253 = arith.mulf %251, %252 : vector<8x32xf32>
    %254 = vector.broadcast %233 : vector<1x32xf32> to vector<8x32xf32>
    %255 = arith.addf %253, %254 : vector<8x32xf32>
    %c1_146 = arith.constant 1 : index
    %c0_147 = arith.constant 0 : index
    %c0_148 = arith.constant 0 : index
    %256 = vector.load %arg17[%c1_146, %c0_147, %c0_148] : memref<2x32x64xbf16, #tpu.memory_space<vmem>>, vector<1x32x64xbf16>
    %257 = vector.shape_cast %256 : vector<1x32x64xbf16> to vector<32x64xbf16>
    %258 = arith.truncf %255 : vector<8x32xf32> to vector<8x32xbf16>
    %cst_149 = arith.constant dense<0.000000e+00> : vector<8x64xf32>
    %259 = tpu.matmul %258, %257, %cst_149 {dimension_numbers = #tpu.dot_dimension_numbers<[1], [0], [0], [1], [0, 0, 1, 1], [], []>} : vector<8x32xbf16>, vector<32x64xbf16>, vector<8x64xf32> -> vector<8x64xf32>
    %c1_150 = arith.constant 1 : index
    %c0_151 = arith.constant 0 : index
    %c0_152 = arith.constant 0 : index
    %260 = vector.load %arg18[%c1_150, %c0_151, %c0_152] : memref<2x1x64xf32, #tpu.memory_space<vmem>>, vector<1x1x64xf32>
    %261 = vector.shape_cast %260 : vector<1x1x64xf32> to vector<1x64xf32>
    %262 = vector.broadcast %261 : vector<1x64xf32> to vector<8x64xf32>
    %263 = arith.addf %259, %262 : vector<8x64xf32>
    %264 = arith.mulf %263, %263 : vector<8x64xf32>
    %265 = arith.mulf %263, %264 : vector<8x64xf32>
    %cst_153 = arith.constant 4.471500e-02 : f32
    %266 = vector.broadcast %cst_153 : f32 to vector<8x64xf32>
    %267 = arith.mulf %266, %265 : vector<8x64xf32>
    %268 = arith.addf %263, %267 : vector<8x64xf32>
    %cst_154 = arith.constant 0.797884583 : f32
    %269 = vector.broadcast %cst_154 : f32 to vector<8x64xf32>
    %270 = arith.mulf %269, %268 : vector<8x64xf32>
    %271 = math.tanh %270 : vector<8x64xf32>
    %cst_155 = arith.constant 1.000000e+00 : f32
    %272 = vector.broadcast %cst_155 : f32 to vector<8x64xf32>
    %273 = arith.addf %272, %271 : vector<8x64xf32>
    %cst_156 = arith.constant 5.000000e-01 : f32
    %274 = vector.broadcast %cst_156 : f32 to vector<8x64xf32>
    %275 = arith.mulf %274, %273 : vector<8x64xf32>
    %276 = arith.mulf %263, %275 : vector<8x64xf32>
    %c1_157 = arith.constant 1 : index
    %c0_158 = arith.constant 0 : index
    %c0_159 = arith.constant 0 : index
    %277 = vector.load %arg19[%c1_157, %c0_158, %c0_159] : memref<2x64x32xbf16, #tpu.memory_space<vmem>>, vector<1x64x32xbf16>
    %278 = vector.shape_cast %277 : vector<1x64x32xbf16> to vector<64x32xbf16>
    %279 = arith.truncf %276 : vector<8x64xf32> to vector<8x64xbf16>
    %cst_160 = arith.constant dense<0.000000e+00> : vector<8x32xf32>
    %280 = tpu.matmul %279, %278, %cst_160 {dimension_numbers = #tpu.dot_dimension_numbers<[1], [0], [0], [1], [0, 0, 1, 1], [], []>} : vector<8x64xbf16>, vector<64x32xbf16>, vector<8x32xf32> -> vector<8x32xf32>
    %281 = arith.addf %229, %280 : vector<8x32xf32>
    %c1_161 = arith.constant 1 : index
    %c0_162 = arith.constant 0 : index
    %c0_163 = arith.constant 0 : index
    %282 = vector.load %arg20[%c1_161, %c0_162, %c0_163] : memref<2x1x32xf32, #tpu.memory_space<vmem>>, vector<1x1x32xf32>
    %283 = vector.shape_cast %282 : vector<1x1x32xf32> to vector<1x32xf32>
    %284 = vector.broadcast %283 : vector<1x32xf32> to vector<8x32xf32>
    %285 = arith.addf %281, %284 : vector<8x32xf32>
    %c0_164 = arith.constant 0 : index
    %c0_165 = arith.constant 0 : index
    %286 = vector.load %arg21[%c0_164, %c0_165] : memref<1x32xf32, #tpu.memory_space<vmem>>, vector<1x32xf32>
    %c0_166 = arith.constant 0 : index
    %c0_167 = arith.constant 0 : index
    %287 = vector.load %arg22[%c0_166, %c0_167] : memref<1x32xf32, #tpu.memory_space<vmem>>, vector<1x32xf32>
    %cst_168 = arith.constant dense<0.000000e+00> : vector<8xf32>
    %288 = vector.multi_reduction <add>, %285, %cst_168 [1] : vector<8x32xf32> to vector<8xf32>
    %289 = vector.shape_cast %288 : vector<8xf32> to vector<8x1xf32>
    %cst_169 = arith.constant 3.200000e+01 : f32
    %290 = vector.broadcast %cst_169 : f32 to vector<8x1xf32>
    %291 = arith.divf %289, %290 : vector<8x1xf32>
    %292 = vector.broadcast %291 : vector<8x1xf32> to vector<8x32xf32>
    %293 = arith.subf %285, %292 : vector<8x32xf32>
    %294 = arith.mulf %293, %293 : vector<8x32xf32>
    %cst_170 = arith.constant dense<0.000000e+00> : vector<8xf32>
    %295 = vector.multi_reduction <add>, %294, %cst_170 [1] : vector<8x32xf32> to vector<8xf32>
    %296 = vector.shape_cast %295 : vector<8xf32> to vector<8x1xf32>
    %cst_171 = arith.constant 3.200000e+01 : f32
    %297 = vector.broadcast %cst_171 : f32 to vector<8x1xf32>
    %298 = arith.divf %296, %297 : vector<8x1xf32>
    %299 = vector.broadcast %291 : vector<8x1xf32> to vector<8x32xf32>
    %300 = arith.subf %285, %299 : vector<8x32xf32>
    %cst_172 = arith.constant 9.99999974E-6 : f32
    %301 = vector.broadcast %cst_172 : f32 to vector<8x1xf32>
    %302 = arith.addf %298, %301 : vector<8x1xf32>
    %303 = math.rsqrt %302 : vector<8x1xf32>
    %304 = vector.broadcast %303 : vector<8x1xf32> to vector<8x32xf32>
    %305 = arith.mulf %300, %304 : vector<8x32xf32>
    %306 = vector.broadcast %286 : vector<1x32xf32> to vector<8x32xf32>
    %307 = arith.mulf %305, %306 : vector<8x32xf32>
    %308 = vector.broadcast %287 : vector<1x32xf32> to vector<8x32xf32>
    %309 = arith.addf %307, %308 : vector<8x32xf32>
    %cst_173 = arith.constant 0.000000e+00 : f32
    %310 = vector.broadcast %cst_173 : f32 to vector<8x96xf32>
    %311 = tpu.concatenate %309, %310 in 1 : vector<8x32xf32>, vector<8x96xf32> -> vector<8x128xf32>
    %c0_174 = arith.constant 0 : index
    %c0_175 = arith.constant 0 : index
    %312 = vector.load %arg29[%c0_174, %c0_175] : memref<8x128xf32, #tpu.memory_space<vmem>>, vector<8x128xf32>
    tpu.vector_store %arg29[%c0_174, %c0_175], %311 {strides = array<i32>} : memref<8x128xf32, #tpu.memory_space<vmem>>, vector<8x128xf32>,
    %c0_176 = arith.constant 0 : index
    %c0_177 = arith.constant 0 : index
    %313 = vector.load %arg23[%c0_176, %c0_177] : memref<32x32xbf16, #tpu.memory_space<vmem>>, vector<32x32xbf16>
    %314 = arith.truncf %309 : vector<8x32xf32> to vector<8x32xbf16>
    %cst_178 = arith.constant dense<0.000000e+00> : vector<8x32xf32>
    %315 = tpu.matmul %314, %313, %cst_178 {dimension_numbers = #tpu.dot_dimension_numbers<[1], [0], [0], [1], [0, 0, 1, 1], [], []>} : vector<8x32xbf16>, vector<32x32xbf16>, vector<8x32xf32> -> vector<8x32xf32>
    %c0_179 = arith.constant 0 : index
    %c0_180 = arith.constant 0 : index
    %316 = vector.load %arg24[%c0_179, %c0_180] : memref<1x32xf32, #tpu.memory_space<vmem>>, vector<1x32xf32>
    %317 = vector.broadcast %316 : vector<1x32xf32> to vector<8x32xf32>
    %318 = arith.addf %315, %317 : vector<8x32xf32>
    %319 = arith.mulf %318, %318 : vector<8x32xf32>
    %320 = arith.mulf %318, %319 : vector<8x32xf32>
    %cst_181 = arith.constant 4.471500e-02 : f32
    %321 = vector.broadcast %cst_181 : f32 to vector<8x32xf32>
    %322 = arith.mulf %321, %320 : vector<8x32xf32>
    %323 = arith.addf %318, %322 : vector<8x32xf32>
    %cst_182 = arith.constant 0.797884583 : f32
    %324 = vector.broadcast %cst_182 : f32 to vector<8x32xf32>
    %325 = arith.mulf %324, %323 : vector<8x32xf32>
    %326 = math.tanh %325 : vector<8x32xf32>
    %cst_183 = arith.constant 1.000000e+00 : f32
    %327 = vector.broadcast %cst_183 : f32 to vector<8x32xf32>
    %328 = arith.addf %327, %326 : vector<8x32xf32>
    %cst_184 = arith.constant 5.000000e-01 : f32
    %329 = vector.broadcast %cst_184 : f32 to vector<8x32xf32>
    %330 = arith.mulf %329, %328 : vector<8x32xf32>
    %331 = arith.mulf %318, %330 : vector<8x32xf32>
    %c0_185 = arith.constant 0 : index
    %c0_186 = arith.constant 0 : index
    %332 = vector.load %arg25[%c0_185, %c0_186] : memref<1x32xf32, #tpu.memory_space<vmem>>, vector<1x32xf32>
    %c0_187 = arith.constant 0 : index
    %c0_188 = arith.constant 0 : index
    %333 = vector.load %arg26[%c0_187, %c0_188] : memref<1x32xf32, #tpu.memory_space<vmem>>, vector<1x32xf32>
    %cst_189 = arith.constant dense<0.000000e+00> : vector<8xf32>
    %334 = vector.multi_reduction <add>, %331, %cst_189 [1] : vector<8x32xf32> to vector<8xf32>
    %335 = vector.shape_cast %334 : vector<8xf32> to vector<8x1xf32>
    %cst_190 = arith.constant 3.200000e+01 : f32
    %336 = vector.broadcast %cst_190 : f32 to vector<8x1xf32>
    %337 = arith.divf %335, %336 : vector<8x1xf32>
    %338 = vector.broadcast %337 : vector<8x1xf32> to vector<8x32xf32>
    %339 = arith.subf %331, %338 : vector<8x32xf32>
    %340 = arith.mulf %339, %339 : vector<8x32xf32>
    %cst_191 = arith.constant dense<0.000000e+00> : vector<8xf32>
    %341 = vector.multi_reduction <add>, %340, %cst_191 [1] : vector<8x32xf32> to vector<8xf32>
    %342 = vector.shape_cast %341 : vector<8xf32> to vector<8x1xf32>
    %cst_192 = arith.constant 3.200000e+01 : f32
    %343 = vector.broadcast %cst_192 : f32 to vector<8x1xf32>
    %344 = arith.divf %342, %343 : vector<8x1xf32>
    %345 = vector.broadcast %337 : vector<8x1xf32> to vector<8x32xf32>
    %346 = arith.subf %331, %345 : vector<8x32xf32>
    %cst_193 = arith.constant 9.99999974E-6 : f32
    %347 = vector.broadcast %cst_193 : f32 to vector<8x1xf32>
    %348 = arith.addf %344, %347 : vector<8x1xf32>
    %349 = math.rsqrt %348 : vector<8x1xf32>
    %350 = vector.broadcast %349 : vector<8x1xf32> to vector<8x32xf32>
    %351 = arith.mulf %346, %350 : vector<8x32xf32>
    %352 = vector.broadcast %332 : vector<1x32xf32> to vector<8x32xf32>
    %353 = arith.mulf %351, %352 : vector<8x32xf32>
    %354 = vector.broadcast %333 : vector<1x32xf32> to vector<8x32xf32>
    %355 = arith.addf %353, %354 : vector<8x32xf32>
    %c0_194 = arith.constant 0 : index
    %c0_195 = arith.constant 0 : index
    %356 = vector.load %arg4[%c0_194, %c0_195] : memref<32x128xbf16, #tpu.memory_space<vmem>>, vector<32x128xbf16>
    %357 = arith.truncf %355 : vector<8x32xf32> to vector<8x32xbf16>
    %cst_196 = arith.constant dense<0.000000e+00> : vector<8x128xf32>
    %358 = tpu.matmul %357, %356, %cst_196 {dimension_numbers = #tpu.dot_dimension_numbers<[1], [0], [0], [1], [0, 0, 1, 1], [], []>} : vector<8x32xbf16>, vector<32x128xbf16>, vector<8x128xf32> -> vector<8x128xf32>
    %c0_197 = arith.constant 0 : index
    %c0_198 = arith.constant 0 : index
    %359 = vector.load %arg27[%c0_197, %c0_198] : memref<1x128xf32, #tpu.memory_space<vmem>>, vector<1x128xf32>
    %360 = vector.broadcast %359 : vector<1x128xf32> to vector<8x128xf32>
    %361 = arith.addf %358, %360 : vector<8x128xf32>
    %c0_199 = arith.constant 0 : index
    %c0_200 = arith.constant 0 : index
    %362 = vector.load %arg28[%c0_199, %c0_200] : memref<8x128xf32, #tpu.memory_space<vmem>>, vector<8x128xf32>
    tpu.vector_store %arg28[%c0_199, %c0_200], %361 {strides = array<i32>} : memref<8x128xf32, #tpu.memory_space<vmem>>, vector<8x128xf32>,
    return
  }
  func.func @transform_0(%arg0: i32) -> (i32, i32) {
    %c0_i32 = arith.constant 0 : i32
    %c0_i32_0 = arith.constant 0 : i32
    return %arg0, %c0_i32 : i32, i32
  }
  func.func @transform_1(%arg0: i32) -> (i32, i32) {
    %c0_i32 = arith.constant 0 : i32
    %c0_i32_0 = arith.constant 0 : i32
    return %arg0, %c0_i32 : i32, i32
  }
  func.func @transform_2(%arg0: i32) -> (i32, i32) {
    %c0_i32 = arith.constant 0 : i32
    %c0_i32_0 = arith.constant 0 : i32
    %c0_i32_1 = arith.constant 0 : i32
    return %c0_i32, %c0_i32_0 : i32, i32
  }
  func.func @transform_3(%arg0: i32) -> (i32, i32) {
    %c0_i32 = arith.constant 0 : i32
    %c0_i32_0 = arith.constant 0 : i32
    %c0_i32_1 = arith.constant 0 : i32
    return %c0_i32, %c0_i32_0 : i32, i32
  }
  func.func @transform_4(%arg0: i32) -> (i32, i32, i32) {
    %c0_i32 = arith.constant 0 : i32
    %c0_i32_0 = arith.constant 0 : i32
    %c0_i32_1 = arith.constant 0 : i32
    %c0_i32_2 = arith.constant 0 : i32
    return %c0_i32, %c0_i32_0, %c0_i32_1 : i32, i32, i32
  }
  func.func @transform_5(%arg0: i32) -> (i32, i32, i32) {
    %c0_i32 = arith.constant 0 : i32
    %c0_i32_0 = arith.constant 0 : i32
    %c0_i32_1 = arith.constant 0 : i32
    %c0_i32_2 = arith.constant 0 : i32
    return %c0_i32, %c0_i32_0, %c0_i32_1 : i32, i32, i32
  }
  func.func @transform_6(%arg0: i32) -> (i32, i32, i32, i32) {
    %c0_i32 = arith.constant 0 : i32
    %c0_i32_0 = arith.constant 0 : i32
    %c0_i32_1 = arith.constant 0 : i32
    %c0_i32_2 = arith.constant 0 : i32
    %c0_i32_3 = arith.constant 0 : i32
    return %c0_i32, %c0_i32_0, %c0_i32_1, %c0_i32_2 : i32, i32, i32, i32
  }
  func.func @transform_7(%arg0: i32) -> (i32, i32, i32, i32) {
    %c0_i32 = arith.constant 0 : i32
    %c0_i32_0 = arith.constant 0 : i32
    %c0_i32_1 = arith.constant 0 : i32
    %c0_i32_2 = arith.constant 0 : i32
    %c0_i32_3 = arith.constant 0 : i32
    return %c0_i32, %c0_i32_0, %c0_i32_1, %c0_i32_2 : i32, i32, i32, i32
  }
  func.func @transform_8(%arg0: i32) -> (i32, i32, i32, i32) {
    %c0_i32 = arith.constant 0 : i32
    %c0_i32_0 = arith.constant 0 : i32
    %c0_i32_1 = arith.constant 0 : i32
    %c0_i32_2 = arith.constant 0 : i32
    %c0_i32_3 = arith.constant 0 : i32
    return %c0_i32, %c0_i32_0, %c0_i32_1, %c0_i32_2 : i32, i32, i32, i32
  }
  func.func @transform_9(%arg0: i32) -> (i32, i32, i32, i32) {
    %c0_i32 = arith.constant 0 : i32
    %c0_i32_0 = arith.constant 0 : i32
    %c0_i32_1 = arith.constant 0 : i32
    %c0_i32_2 = arith.constant 0 : i32
    %c0_i32_3 = arith.constant 0 : i32
    return %c0_i32, %c0_i32_0, %c0_i32_1, %c0_i32_2 : i32, i32, i32, i32
  }
  func.func @transform_10(%arg0: i32) -> (i32, i32, i32, i32) {
    %c0_i32 = arith.constant 0 : i32
    %c0_i32_0 = arith.constant 0 : i32
    %c0_i32_1 = arith.constant 0 : i32
    %c0_i32_2 = arith.constant 0 : i32
    %c0_i32_3 = arith.constant 0 : i32
    return %c0_i32, %c0_i32_0, %c0_i32_1, %c0_i32_2 : i32, i32, i32, i32
  }
  func.func @transform_11(%arg0: i32) -> (i32, i32, i32, i32) {
    %c0_i32 = arith.constant 0 : i32
    %c0_i32_0 = arith.constant 0 : i32
    %c0_i32_1 = arith.constant 0 : i32
    %c0_i32_2 = arith.constant 0 : i32
    %c0_i32_3 = arith.constant 0 : i32
    return %c0_i32, %c0_i32_0, %c0_i32_1, %c0_i32_2 : i32, i32, i32, i32
  }
  func.func @transform_12(%arg0: i32) -> (i32, i32, i32, i32) {
    %c0_i32 = arith.constant 0 : i32
    %c0_i32_0 = arith.constant 0 : i32
    %c0_i32_1 = arith.constant 0 : i32
    %c0_i32_2 = arith.constant 0 : i32
    %c0_i32_3 = arith.constant 0 : i32
    return %c0_i32, %c0_i32_0, %c0_i32_1, %c0_i32_2 : i32, i32, i32, i32
  }
  func.func @transform_13(%arg0: i32) -> (i32, i32, i32) {
    %c0_i32 = arith.constant 0 : i32
    %c0_i32_0 = arith.constant 0 : i32
    %c0_i32_1 = arith.constant 0 : i32
    %c0_i32_2 = arith.constant 0 : i32
    return %c0_i32, %c0_i32_0, %c0_i32_1 : i32, i32, i32
  }
  func.func @transform_14(%arg0: i32) -> (i32, i32, i32) {
    %c0_i32 = arith.constant 0 : i32
    %c0_i32_0 = arith.constant 0 : i32
    %c0_i32_1 = arith.constant 0 : i32
    %c0_i32_2 = arith.constant 0 : i32
    return %c0_i32, %c0_i32_0, %c0_i32_1 : i32, i32, i32
  }
  func.func @transform_15(%arg0: i32) -> (i32, i32, i32) {
    %c0_i32 = arith.constant 0 : i32
    %c0_i32_0 = arith.constant 0 : i32
    %c0_i32_1 = arith.constant 0 : i32
    %c0_i32_2 = arith.constant 0 : i32
    return %c0_i32, %c0_i32_0, %c0_i32_1 : i32, i32, i32
  }
  func.func @transform_16(%arg0: i32) -> (i32, i32, i32) {
    %c0_i32 = arith.constant 0 : i32
    %c0_i32_0 = arith.constant 0 : i32
    %c0_i32_1 = arith.constant 0 : i32
    %c0_i32_2 = arith.constant 0 : i32
    return %c0_i32, %c0_i32_0, %c0_i32_1 : i32, i32, i32
  }
  func.func @transform_17(%arg0: i32) -> (i32, i32, i32) {
    %c0_i32 = arith.constant 0 : i32
    %c0_i32_0 = arith.constant 0 : i32
    %c0_i32_1 = arith.constant 0 : i32
    %c0_i32_2 = arith.constant 0 : i32
    return %c0_i32, %c0_i32_0, %c0_i32_1 : i32, i32, i32
  }
  func.func @transform_18(%arg0: i32) -> (i32, i32, i32) {
    %c0_i32 = arith.constant 0 : i32
    %c0_i32_0 = arith.constant 0 : i32
    %c0_i32_1 = arith.constant 0 : i32
    %c0_i32_2 = arith.constant 0 : i32
    return %c0_i32, %c0_i32_0, %c0_i32_1 : i32, i32, i32
  }
  func.func @transform_19(%arg0: i32) -> (i32, i32, i32) {
    %c0_i32 = arith.constant 0 : i32
    %c0_i32_0 = arith.constant 0 : i32
    %c0_i32_1 = arith.constant 0 : i32
    %c0_i32_2 = arith.constant 0 : i32
    return %c0_i32, %c0_i32_0, %c0_i32_1 : i32, i32, i32
  }
  func.func @transform_20(%arg0: i32) -> (i32, i32) {
    %c0_i32 = arith.constant 0 : i32
    %c0_i32_0 = arith.constant 0 : i32
    %c0_i32_1 = arith.constant 0 : i32
    return %c0_i32, %c0_i32_0 : i32, i32
  }
  func.func @transform_21(%arg0: i32) -> (i32, i32) {
    %c0_i32 = arith.constant 0 : i32
    %c0_i32_0 = arith.constant 0 : i32
    %c0_i32_1 = arith.constant 0 : i32
    return %c0_i32, %c0_i32_0 : i32, i32
  }
  func.func @transform_22(%arg0: i32) -> (i32, i32) {
    %c0_i32 = arith.constant 0 : i32
    %c0_i32_0 = arith.constant 0 : i32
    %c0_i32_1 = arith.constant 0 : i32
    return %c0_i32, %c0_i32_0 : i32, i32
  }
  func.func @transform_23(%arg0: i32) -> (i32, i32) {
    %c0_i32 = arith.constant 0 : i32
    %c0_i32_0 = arith.constant 0 : i32
    %c0_i32_1 = arith.constant 0 : i32
    return %c0_i32, %c0_i32_0 : i32, i32
  }
  func.func @transform_24(%arg0: i32) -> (i32, i32) {
    %c0_i32 = arith.constant 0 : i32
    %c0_i32_0 = arith.constant 0 : i32
    %c0_i32_1 = arith.constant 0 : i32
    return %c0_i32, %c0_i32_0 : i32, i32
  }
  func.func @transform_25(%arg0: i32) -> (i32, i32) {
    %c0_i32 = arith.constant 0 : i32
    %c0_i32_0 = arith.constant 0 : i32
    %c0_i32_1 = arith.constant 0 : i32
    return %c0_i32, %c0_i32_0 : i32, i32
  }
  func.func @transform_26(%arg0: i32) -> (i32, i32) {
    %c0_i32 = arith.constant 0 : i32
    %c0_i32_0 = arith.constant 0 : i32
    %c0_i32_1 = arith.constant 0 : i32
    return %c0_i32, %c0_i32_0 : i32, i32
  }
  func.func @transform_27(%arg0: i32) -> (i32, i32) {
    %c0_i32 = arith.constant 0 : i32
    %c0_i32_0 = arith.constant 0 : i32
    return %arg0, %c0_i32 : i32, i32
  }
  func.func @transform_28(%arg0: i32) -> (i32, i32) {
    %c0_i32 = arith.constant 0 : i32
    %c0_i32_0 = arith.constant 0 : i32
    return %arg0, %c0_i32 : i32, i32
  }
}

</mosaic_0001>

<llo_original>
// kernel: dplm_forward.1
$region0: #{dplm_forward.1}
  #allocation0 [shape = 'u32[]', space=smem, size = 0x4, offset = 0x4, fixed_abs, tag = 'smem constant byte address 0x4 - core index']
  #allocation1 [shape = 'u32[144,128]{1,0:T(1,128)}', space=vmem, size = 0x12000, scoped, tag = 'internal scratch']
  %s0 = inlined_call_operand.vmem [shape: s32[16,1], index: 0, kind: input, shape index: {}]
  %s1 = inlined_call_operand.vmem [shape: f32[16,8], index: 1, kind: input, shape index: {}]
  %s2 = inlined_call_operand.vmem [shape: bf16[36,32], index: 2, kind: input, shape index: {}]
  %s3 = inlined_call_operand.vmem [shape: bf16[32,128], index: 3, kind: input, shape index: {}]
  %s4 = inlined_call_operand.vmem [shape: f32[2,1,32], index: 4, kind: input, shape index: {}]
  %s5 = inlined_call_operand.vmem [shape: f32[2,1,32], index: 5, kind: input, shape index: {}]
  %s6 = inlined_call_operand.vmem [shape: bf16[2,4,32,8], index: 6, kind: input, shape index: {}]
  %s7 = inlined_call_operand.vmem [shape: f32[2,4,1,8], index: 7, kind: input, shape index: {}]
  %s8 = inlined_call_operand.vmem [shape: bf16[2,4,32,8], index: 8, kind: input, shape index: {}]
  %s9 = inlined_call_operand.vmem [shape: f32[2,4,1,8], index: 9, kind: input, shape index: {}]
  %s10 = inlined_call_operand.vmem [shape: bf16[2,4,32,8], index: 10, kind: input, shape index: {}]
  %s11 = inlined_call_operand.vmem [shape: f32[2,4,1,8], index: 11, kind: input, shape index: {}]
  %s12 = inlined_call_operand.vmem [shape: bf16[2,4,8,32], index: 12, kind: input, shape index: {}]
  %s13 = inlined_call_operand.vmem [shape: f32[2,1,32], index: 13, kind: input, shape index: {}]
  %s14 = inlined_call_operand.vmem [shape: f32[2,1,32], index: 14, kind: input, shape index: {}]
  %s15 = inlined_call_operand.vmem [shape: f32[2,1,32], index: 15, kind: input, shape index: {}]
  %s16 = inlined_call_operand.vmem [shape: bf16[2,32,64], index: 16, kind: input, shape index: {}]
  %s17 = inlined_call_operand.vmem [shape: f32[2,1,64], index: 17, kind: input, shape index: {}]
  %s18 = inlined_call_operand.vmem [shape: bf16[2,64,32], index: 18, kind: input, shape index: {}]
  %s19 = inlined_call_operand.vmem [shape: f32[2,1,32], index: 19, kind: input, shape index: {}]
  %s20 = inlined_call_operand.vmem [shape: f32[1,32], index: 20, kind: input, shape index: {}]
  %s21 = inlined_call_operand.vmem [shape: f32[1,32], index: 21, kind: input, shape index: {}]
  %s22 = inlined_call_operand.vmem [shape: bf16[32,32], index: 22, kind: input, shape index: {}]
  %s23 = inlined_call_operand.vmem [shape: f32[1,32], index: 23, kind: input, shape index: {}]
  %s24 = inlined_call_operand.vmem [shape: f32[1,32], index: 24, kind: input, shape index: {}]
  %s25 = inlined_call_operand.vmem [shape: f32[1,32], index: 25, kind: input, shape index: {}]
  %s26 = inlined_call_operand.vmem [shape: f32[1,128], index: 26, kind: input, shape index: {}]
  %s27 = inlined_call_operand.vmem [shape: f32[16,128], index: 27, kind: output, shape index: {0}]
  %s28 = inlined_call_operand.vmem [shape: f32[16,128], index: 28, kind: output, shape index: {1}]
  %29 = xla_tuple %s27, %s28
  %s30 = sld [smem:[#allocation0]]
  $region149: #{dplm_forward.1} parent=0
    _
  %s32 = ssub.s32 1, %s30
  %s33 = scalar_select 0, %s32, %s30
  loop: start=0, step=1, limit=4
  $region2: #{dplm_forward.1} parent=0 // loop_pre_header
    _
  $region3: #{dplm_forward.1} parent=0 // loop_header
    %s35 = sphi 0, %s39
    %p36 = scmp.ge.s32.totalorder %s35, 4
    %s45 = sphi 0, %s47
    %s48 = sphi 0, %s45
    %s49 = sphi 0, %s48
    %s65 = sphi 0, %s49
    %s71 = sphi 0, %s73
    %s74 = sphi 0, %s71
    %s75 = sphi 0, %s74
    %s91 = sphi 0, %s75
    %s95 = sphi 0, %s95
    %s97 = sphi 0, %s95
    %s98 = sphi 0, %s97
    %s112 = sphi 0, %s98
    %s116 = sphi 0, %s116
    %s118 = sphi 0, %s116
    %s119 = sphi 0, %s118
    %s133 = sphi 0, %s119
    %s137 = sphi 0, %s137
    %s139 = sphi 0, %s137
    %s140 = sphi 0, %s139
    %s154 = sphi 0, %s140
    %s158 = sphi 0, %s158
    %s160 = sphi 0, %s158
    %s161 = sphi 0, %s160
    %s175 = sphi 0, %s161
    %s179 = sphi 0, %s179
    %s181 = sphi 0, %s179
    %s182 = sphi 0, %s181
    %s196 = sphi 0, %s182
    %s200 = sphi 0, %s200
    %s202 = sphi 0, %s200
    %s203 = sphi 0, %s202
    %s217 = sphi 0, %s203
    %s221 = sphi 0, %s221
    %s223 = sphi 0, %s221
    %s224 = sphi 0, %s223
    %s238 = sphi 0, %s224
    %s242 = sphi 0, %s242
    %s244 = sphi 0, %s242
    %s245 = sphi 0, %s244
    %s259 = sphi 0, %s245
    %s263 = sphi 0, %s263
    %s265 = sphi 0, %s263
    %s266 = sphi 0, %s265
    %s280 = sphi 0, %s266
    %s284 = sphi 0, %s284
    %s286 = sphi 0, %s284
    %s287 = sphi 0, %s286
    %s301 = sphi 0, %s287
    %s305 = sphi 0, %s305
    %s307 = sphi 0, %s305
    %s308 = sphi 0, %s307
    %s322 = sphi 0, %s308
    %s326 = sphi 0, %s326
    %s328 = sphi 0, %s326
    %s329 = sphi 0, %s328
    %s343 = sphi 0, %s329
    %s347 = sphi 0, %s347
    %s349 = sphi 0, %s347
    %s350 = sphi 0, %s349
    %s364 = sphi 0, %s350
    %s368 = sphi 0, %s368
    %s370 = sphi 0, %s368
    %s371 = sphi 0, %s370
    %s385 = sphi 0, %s371
    %s389 = sphi 0, %s389
    %s391 = sphi 0, %s389
    %s392 = sphi 0, %s391
    %s406 = sphi 0, %s392
    %s410 = sphi 0, %s410
    %s412 = sphi 0, %s410
    %s413 = sphi 0, %s412
    %s427 = sphi 0, %s413
    %s431 = sphi 0, %s431
    %s433 = sphi 0, %s431
    %s434 = sphi 0, %s433
    %s448 = sphi 0, %s434
    %s452 = sphi 0, %s452
    %s454 = sphi 0, %s452
    %s455 = sphi 0, %s454
    %s469 = sphi 0, %s455
    %s473 = sphi 0, %s473
    %s475 = sphi 0, %s473
    %s476 = sphi 0, %s475
    %s490 = sphi 0, %s476
    %s494 = sphi 0, %s494
    %s496 = sphi 0, %s494
    %s497 = sphi 0, %s496
    %s511 = sphi 0, %s497
    %s515 = sphi 0, %s515
    %s517 = sphi 0, %s515
    %s518 = sphi 0, %s517
    %s532 = sphi 0, %s518
    %s536 = sphi 0, %s536
    %s538 = sphi 0, %s536
    %s539 = sphi 0, %s538
    %s553 = sphi 0, %s539
    %s557 = sphi 0, %s557
    %s559 = sphi 0, %s557
    %s560 = sphi 0, %s559
    %s574 = sphi 0, %s560
    %s578 = sphi 0, %s578
    %s580 = sphi 0, %s578
    %s581 = sphi 0, %s580
    %s595 = sphi 0, %s581
    %s599 = sphi 0, %s599
    %s601 = sphi 0, %s599
    %s602 = sphi 0, %s601
    %s616 = sphi 0, %s602
    %s622 = sphi 0, %s624
    %s625 = sphi 0, %s622
    %s626 = sphi 0, %s625
    %s642 = sphi 0, %s626
    %s648 = sphi 0, %s650
    %s651 = sphi 0, %s648
    %s652 = sphi 0, %s651
    %s668 = sphi 0, %s652
  $region4: #{dplm_forward.1} parent=0 // loop_header_branch
    %38 = sbr.rel (%p36) target = $region8
  $region5: #{dplm_forward.1} parent=0 // loop_body
    %s40 = ssub.s32 %s35, 1
    %s41 = ssub.s32 %s35, 2
    %s42 = sadd.s32 %s35, 1
    %s43 = ssub.s32 %s35, %s42
    %p44 = scmp.eq.s32.totalorder %s43, 0
    %s46 = sadd.s32 %s45, 1
    %s47 = scalar_select %p44, %s45, %s46
    %p50 = pneg %p44
    %p51 = scmp.eq.s32.totalorder %s35, 1
    %p52 = por %p50, %p51
    %p53 = scmp.ne.s32.totalorder %s45, %s48
    %p54 = scmp.eq.s32.totalorder %s35, 0
    %p55 = por %p53, %p54
    %p56 = scmp.ne.s32.totalorder %s45, %s48
    %p57 = scmp.eq.s32.totalorder %s40, 1
    %p58 = por %p56, %p57
    %p59 = scmp.ne.s32.totalorder %s48, %s49
    %p60 = scmp.eq.s32.totalorder %s40, 0
    %p61 = por %p59, %p60
    %p62 = scmp.ne.s32.totalorder %s48, %s49
    %p63 = scmp.eq.s32.totalorder %s41, 1
    %p64 = por %p62, %p63
    %p66 = scmp.ne.s32.totalorder %s49, %s65
    %p67 = scmp.eq.s32.totalorder %s41, 0
    %p68 = por %p66, %p67
    %s69 = ssub.s32 %s35, %s42
    %p70 = scmp.eq.s32.totalorder %s69, 0
    %s72 = sadd.s32 %s71, 1
    %s73 = scalar_select %p70, %s71, %s72
    %p76 = pneg %p70
    %p77 = scmp.eq.s32.totalorder %s35, 1
    %p78 = por %p76, %p77
    %p79 = scmp.ne.s32.totalorder %s71, %s74
    %p80 = scmp.eq.s32.totalorder %s35, 0
    %p81 = por %p79, %p80
    %p82 = scmp.ne.s32.totalorder %s71, %s74
    %p83 = scmp.eq.s32.totalorder %s40, 1
    %p84 = por %p82, %p83
    %p85 = scmp.ne.s32.totalorder %s74, %s75
    %p86 = scmp.eq.s32.totalorder %s40, 0
    %p87 = por %p85, %p86
    %p88 = scmp.ne.s32.totalorder %s74, %s75
    %p89 = scmp.eq.s32.totalorder %s41, 1
    %p90 = por %p88, %p89
    %p92 = scmp.ne.s32.totalorder %s75, %s91
    %p93 = scmp.eq.s32.totalorder %s41, 0
    %p94 = por %p92, %p93
    %s96 = sadd.s32 %s95, 1
    %p99 = scmp.eq.s32.totalorder %s35, 1
    %p100 = scmp.ne.s32.totalorder %s95, %s97
    %p101 = scmp.eq.s32.totalorder %s35, 0
    %p102 = por %p100, %p101
    %p103 = scmp.ne.s32.totalorder %s95, %s97
    %p104 = scmp.eq.s32.totalorder %s40, 1
    %p105 = por %p103, %p104
    %p106 = scmp.ne.s32.totalorder %s97, %s98
    %p107 = scmp.eq.s32.totalorder %s40, 0
    %p108 = por %p106, %p107
    %p109 = scmp.ne.s32.totalorder %s97, %s98
    %p110 = scmp.eq.s32.totalorder %s41, 1
    %p111 = por %p109, %p110
    %p113 = scmp.ne.s32.totalorder %s98, %s112
    %p114 = scmp.eq.s32.totalorder %s41, 0
    %p115 = por %p113, %p114
    %s117 = sadd.s32 %s116, 1
    %p120 = scmp.eq.s32.totalorder %s35, 1
    %p121 = scmp.ne.s32.totalorder %s116, %s118
    %p122 = scmp.eq.s32.totalorder %s35, 0
    %p123 = por %p121, %p122
    %p124 = scmp.ne.s32.totalorder %s116, %s118
    %p125 = scmp.eq.s32.totalorder %s40, 1
    %p126 = por %p124, %p125
    %p127 = scmp.ne.s32.totalorder %s118, %s119
    %p128 = scmp.eq.s32.totalorder %s40, 0
    %p129 = por %p127, %p128
    %p130 = scmp.ne.s32.totalorder %s118, %s119
    %p131 = scmp.eq.s32.totalorder %s41, 1
    %p132 = por %p130, %p131
    %p134 = scmp.ne.s32.totalorder %s119, %s133
    %p135 = scmp.eq.s32.totalorder %s41, 0
    %p136 = por %p134, %p135
    %s138 = sadd.s32 %s137, 1
    %p141 = scmp.eq.s32.totalorder %s35, 1
    %p142 = scmp.ne.s32.totalorder %s137, %s139
    %p143 = scmp.eq.s32.totalorder %s35, 0
    %p144 = por %p142, %p143
    %p145 = scmp.ne.s32.totalorder %s137, %s139
    %p146 = scmp.eq.s32.totalorder %s40, 1
    %p147 = por %p145, %p146
    %p148 = scmp.ne.s32.totalorder %s139, %s140
    %p149 = scmp.eq.s32.totalorder %s40, 0
    %p150 = por %p148, %p149
    %p151 = scmp.ne.s32.totalorder %s139, %s140
    %p152 = scmp.eq.s32.totalorder %s41, 1
    %p153 = por %p151, %p152
    %p155 = scmp.ne.s32.totalorder %s140, %s154
    %p156 = scmp.eq.s32.totalorder %s41, 0
    %p157 = por %p155, %p156
    %s159 = sadd.s32 %s158, 1
    %p162 = scmp.eq.s32.totalorder %s35, 1
    %p163 = scmp.ne.s32.totalorder %s158, %s160
    %p164 = scmp.eq.s32.totalorder %s35, 0
    %p165 = por %p163, %p164
    %p166 = scmp.ne.s32.totalorder %s158, %s160
    %p167 = scmp.eq.s32.totalorder %s40, 1
    %p168 = por %p166, %p167
    %p169 = scmp.ne.s32.totalorder %s160, %s161
    %p170 = scmp.eq.s32.totalorder %s40, 0
    %p171 = por %p169, %p170
    %p172 = scmp.ne.s32.totalorder %s160, %s161
    %p173 = scmp.eq.s32.totalorder %s41, 1
    %p174 = por %p172, %p173
    %p176 = scmp.ne.s32.totalorder %s161, %s175
    %p177 = scmp.eq.s32.totalorder %s41, 0
    %p178 = por %p176, %p177
    %s180 = sadd.s32 %s179, 1
    %p183 = scmp.eq.s32.totalorder %s35, 1
    %p184 = scmp.ne.s32.totalorder %s179, %s181
    %p185 = scmp.eq.s32.totalorder %s35, 0
    %p186 = por %p184, %p185
    %p187 = scmp.ne.s32.totalorder %s179, %s181
    %p188 = scmp.eq.s32.totalorder %s40, 1
    %p189 = por %p187, %p188
    %p190 = scmp.ne.s32.totalorder %s181, %s182
    %p191 = scmp.eq.s32.totalorder %s40, 0
    %p192 = por %p190, %p191
    %p193 = scmp.ne.s32.totalorder %s181, %s182
    %p194 = scmp.eq.s32.totalorder %s41, 1
    %p195 = por %p193, %p194
    %p197 = scmp.ne.s32.totalorder %s182, %s196
    %p198 = scmp.eq.s32.totalorder %s41, 0
    %p199 = por %p197, %p198
    %s201 = sadd.s32 %s200, 1
    %p204 = scmp.eq.s32.totalorder %s35, 1
    %p205 = scmp.ne.s32.totalorder %s200, %s202
    %p206 = scmp.eq.s32.totalorder %s35, 0
    %p207 = por %p205, %p206
    %p208 = scmp.ne.s32.totalorder %s200, %s202
    %p209 = scmp.eq.s32.totalorder %s40, 1
    %p210 = por %p208, %p209
    %p211 = scmp.ne.s32.totalorder %s202, %s203
    %p212 = scmp.eq.s32.totalorder %s40, 0
    %p213 = por %p211, %p212
    %p214 = scmp.ne.s32.totalorder %s202, %s203
    %p215 = scmp.eq.s32.totalorder %s41, 1
    %p216 = por %p214, %p215
    %p218 = scmp.ne.s32.totalorder %s203, %s217
    %p219 = scmp.eq.s32.totalorder %s41, 0
    %p220 = por %p218, %p219
    %s222 = sadd.s32 %s221, 1
    %p225 = scmp.eq.s32.totalorder %s35, 1
    %p226 = scmp.ne.s32.totalorder %s221, %s223
    %p227 = scmp.eq.s32.totalorder %s35, 0
    %p228 = por %p226, %p227
    %p229 = scmp.ne.s32.totalorder %s221, %s223
    %p230 = scmp.eq.s32.totalorder %s40, 1
    %p231 = por %p229, %p230
    %p232 = scmp.ne.s32.totalorder %s223, %s224
    %p233 = scmp.eq.s32.totalorder %s40, 0
    %p234 = por %p232, %p233
    %p235 = scmp.ne.s32.totalorder %s223, %s224
    %p236 = scmp.eq.s32.totalorder %s41, 1
    %p237 = por %p235, %p236
    %p239 = scmp.ne.s32.totalorder %s224, %s238
    %p240 = scmp.eq.s32.totalorder %s41, 0
    %p241 = por %p239, %p240
    %s243 = sadd.s32 %s242, 1
    %p246 = scmp.eq.s32.totalorder %s35, 1
    %p247 = scmp.ne.s32.totalorder %s242, %s244
    %p248 = scmp.eq.s32.totalorder %s35, 0
    %p249 = por %p247, %p248
    %p250 = scmp.ne.s32.totalorder %s242, %s244
    %p251 = scmp.eq.s32.totalorder %s40, 1
    %p252 = por %p250, %p251
    %p253 = scmp.ne.s32.totalorder %s244, %s245
    %p254 = scmp.eq.s32.totalorder %s40, 0
    %p255 = por %p253, %p254
    %p256 = scmp.ne.s32.totalorder %s244, %s245
    %p257 = scmp.eq.s32.totalorder %s41, 1
    %p258 = por %p256, %p257
    %p260 = scmp.ne.s32.totalorder %s245, %s259
    %p261 = scmp.eq.s32.totalorder %s41, 0
    %p262 = por %p260, %p261
    %s264 = sadd.s32 %s263, 1
    %p267 = scmp.eq.s32.totalorder %s35, 1
    %p268 = scmp.ne.s32.totalorder %s263, %s265
    %p269 = scmp.eq.s32.totalorder %s35, 0
    %p270 = por %p268, %p269
    %p271 = scmp.ne.s32.totalorder %s263, %s265
    %p272 = scmp.eq.s32.totalorder %s40, 1
    %p273 = por %p271, %p272
    %p274 = scmp.ne.s32.totalorder %s265, %s266
    %p275 = scmp.eq.s32.totalorder %s40, 0
    %p276 = por %p274, %p275
    %p277 = scmp.ne.s32.totalorder %s265, %s266
    %p278 = scmp.eq.s32.totalorder %s41, 1
    %p279 = por %p277, %p278
    %p281 = scmp.ne.s32.totalorder %s266, %s280
    %p282 = scmp.eq.s32.totalorder %s41, 0
    %p283 = por %p281, %p282
    %s285 = sadd.s32 %s284, 1
    %p288 = scmp.eq.s32.totalorder %s35, 1
    %p289 = scmp.ne.s32.totalorder %s284, %s286
    %p290 = scmp.eq.s32.totalorder %s35, 0
    %p291 = por %p289, %p290
    %p292 = scmp.ne.s32.totalorder %s284, %s286
    %p293 = scmp.eq.s32.totalorder %s40, 1
    %p294 = por %p292, %p293
    %p295 = scmp.ne.s32.totalorder %s286, %s287
    %p296 = scmp.eq.s32.totalorder %s40, 0
    %p297 = por %p295, %p296
    %p298 = scmp.ne.s32.totalorder %s286, %s287
    %p299 = scmp.eq.s32.totalorder %s41, 1
    %p300 = por %p298, %p299
    %p302 = scmp.ne.s32.totalorder %s287, %s301
    %p303 = scmp.eq.s32.totalorder %s41, 0
    %p304 = por %p302, %p303
    %s306 = sadd.s32 %s305, 1
    %p309 = scmp.eq.s32.totalorder %s35, 1
    %p310 = scmp.ne.s32.totalorder %s305, %s307
    %p311 = scmp.eq.s32.totalorder %s35, 0
    %p312 = por %p310, %p311
    %p313 = scmp.ne.s32.totalorder %s305, %s307
    %p314 = scmp.eq.s32.totalorder %s40, 1
    %p315 = por %p313, %p314
    %p316 = scmp.ne.s32.totalorder %s307, %s308
    %p317 = scmp.eq.s32.totalorder %s40, 0
    %p318 = por %p316, %p317
    %p319 = scmp.ne.s32.totalorder %s307, %s308
    %p320 = scmp.eq.s32.totalorder %s41, 1
    %p321 = por %p319, %p320
    %p323 = scmp.ne.s32.totalorder %s308, %s322
    %p324 = scmp.eq.s32.totalorder %s41, 0
    %p325 = por %p323, %p324
    %s327 = sadd.s32 %s326, 1
    %p330 = scmp.eq.s32.totalorder %s35, 1
    %p331 = scmp.ne.s32.totalorder %s326, %s328
    %p332 = scmp.eq.s32.totalorder %s35, 0
    %p333 = por %p331, %p332
    %p334 = scmp.ne.s32.totalorder %s326, %s328
    %p335 = scmp.eq.s32.totalorder %s40, 1
    %p336 = por %p334, %p335
    %p337 = scmp.ne.s32.totalorder %s328, %s329
    %p338 = scmp.eq.s32.totalorder %s40, 0
    %p339 = por %p337, %p338
    %p340 = scmp.ne.s32.totalorder %s328, %s329
    %p341 = scmp.eq.s32.totalorder %s41, 1
    %p342 = por %p340, %p341
    %p344 = scmp.ne.s32.totalorder %s329, %s343
    %p345 = scmp.eq.s32.totalorder %s41, 0
    %p346 = por %p344, %p345
    %s348 = sadd.s32 %s347, 1
    %p351 = scmp.eq.s32.totalorder %s35, 1
    %p352 = scmp.ne.s32.totalorder %s347, %s349
    %p353 = scmp.eq.s32.totalorder %s35, 0
    %p354 = por %p352, %p353
    %p355 = scmp.ne.s32.totalorder %s347, %s349
    %p356 = scmp.eq.s32.totalorder %s40, 1
    %p357 = por %p355, %p356
    %p358 = scmp.ne.s32.totalorder %s349, %s350
    %p359 = scmp.eq.s32.totalorder %s40, 0
    %p360 = por %p358, %p359
    %p361 = scmp.ne.s32.totalorder %s349, %s350
    %p362 = scmp.eq.s32.totalorder %s41, 1
    %p363 = por %p361, %p362
    %p365 = scmp.ne.s32.totalorder %s350, %s364
    %p366 = scmp.eq.s32.totalorder %s41, 0
    %p367 = por %p365, %p366
    %s369 = sadd.s32 %s368, 1
    %p372 = scmp.eq.s32.totalorder %s35, 1
    %p373 = scmp.ne.s32.totalorder %s368, %s370
    %p374 = scmp.eq.s32.totalorder %s35, 0
    %p375 = por %p373, %p374
    %p376 = scmp.ne.s32.totalorder %s368, %s370
    %p377 = scmp.eq.s32.totalorder %s40, 1
    %p378 = por %p376, %p377
    %p379 = scmp.ne.s32.totalorder %s370, %s371
    %p380 = scmp.eq.s32.totalorder %s40, 0
    %p381 = por %p379, %p380
    %p382 = scmp.ne.s32.totalorder %s370, %s371
    %p383 = scmp.eq.s32.totalorder %s41, 1
    %p384 = por %p382, %p383
    %p386 = scmp.ne.s32.totalorder %s371, %s385
    %p387 = scmp.eq.s32.totalorder %s41, 0
    %p388 = por %p386, %p387
    %s390 = sadd.s32 %s389, 1
    %p393 = scmp.eq.s32.totalorder %s35, 1
    %p394 = scmp.ne.s32.totalorder %s389, %s391
    %p395 = scmp.eq.s32.totalorder %s35, 0
    %p396 = por %p394, %p395
    %p397 = scmp.ne.s32.totalorder %s389, %s391
    %p398 = scmp.eq.s32.totalorder %s40, 1
    %p399 = por %p397, %p398
    %p400 = scmp.ne.s32.totalorder %s391, %s392
    %p401 = scmp.eq.s32.totalorder %s40, 0
    %p402 = por %p400, %p401
    %p403 = scmp.ne.s32.totalorder %s391, %s392
    %p404 = scmp.eq.s32.totalorder %s41, 1
    %p405 = por %p403, %p404
    %p407 = scmp.ne.s32.totalorder %s392, %s406
    %p408 = scmp.eq.s32.totalorder %s41, 0
    %p409 = por %p407, %p408
    %s411 = sadd.s32 %s410, 1
    %p414 = scmp.eq.s32.totalorder %s35, 1
    %p415 = scmp.ne.s32.totalorder %s410, %s412
    %p416 = scmp.eq.s32.totalorder %s35, 0
    %p417 = por %p415, %p416
    %p418 = scmp.ne.s32.totalorder %s410, %s412
    %p419 = scmp.eq.s32.totalorder %s40, 1
    %p420 = por %p418, %p419
    %p421 = scmp.ne.s32.totalorder %s412, %s413
    %p422 = scmp.eq.s32.totalorder %s40, 0
    %p423 = por %p421, %p422
    %p424 = scmp.ne.s32.totalorder %s412, %s413
    %p425 = scmp.eq.s32.totalorder %s41, 1
    %p426 = por %p424, %p425
    %p428 = scmp.ne.s32.totalorder %s413, %s427
    %p429 = scmp.eq.s32.totalorder %s41, 0
    %p430 = por %p428, %p429
    %s432 = sadd.s32 %s431, 1
    %p435 = scmp.eq.s32.totalorder %s35, 1
    %p436 = scmp.ne.s32.totalorder %s431, %s433
    %p437 = scmp.eq.s32.totalorder %s35, 0
    %p438 = por %p436, %p437
    %p439 = scmp.ne.s32.totalorder %s431, %s433
    %p440 = scmp.eq.s32.totalorder %s40, 1
    %p441 = por %p439, %p440
    %p442 = scmp.ne.s32.totalorder %s433, %s434
    %p443 = scmp.eq.s32.totalorder %s40, 0
    %p444 = por %p442, %p443
    %p445 = scmp.ne.s32.totalorder %s433, %s434
    %p446 = scmp.eq.s32.totalorder %s41, 1
    %p447 = por %p445, %p446
    %p449 = scmp.ne.s32.totalorder %s434, %s448
    %p450 = scmp.eq.s32.totalorder %s41, 0
    %p451 = por %p449, %p450
    %s453 = sadd.s32 %s452, 1
    %p456 = scmp.eq.s32.totalorder %s35, 1
    %p457 = scmp.ne.s32.totalorder %s452, %s454
    %p458 = scmp.eq.s32.totalorder %s35, 0
    %p459 = por %p457, %p458
    %p460 = scmp.ne.s32.totalorder %s452, %s454
    %p461 = scmp.eq.s32.totalorder %s40, 1
    %p462 = por %p460, %p461
    %p463 = scmp.ne.s32.totalorder %s454, %s455
    %p464 = scmp.eq.s32.totalorder %s40, 0
    %p465 = por %p463, %p464
    %p466 = scmp.ne.s32.totalorder %s454, %s455
    %p467 = scmp.eq.s32.totalorder %s41, 1
    %p468 = por %p466, %p467
    %p470 = scmp.ne.s32.totalorder %s455, %s469
    %p471 = scmp.eq.s32.totalorder %s41, 0
    %p472 = por %p470, %p471
    %s474 = sadd.s32 %s473, 1
    %p477 = scmp.eq.s32.totalorder %s35, 1
    %p478 = scmp.ne.s32.totalorder %s473, %s475
    %p479 = scmp.eq.s32.totalorder %s35, 0
    %p480 = por %p478, %p479
    %p481 = scmp.ne.s32.totalorder %s473, %s475
    %p482 = scmp.eq.s32.totalorder %s40, 1
    %p483 = por %p481, %p482
    %p484 = scmp.ne.s32.totalorder %s475, %s476
    %p485 = scmp.eq.s32.totalorder %s40, 0
    %p486 = por %p484, %p485
    %p487 = scmp.ne.s32.totalorder %s475, %s476
    %p488 = scmp.eq.s32.totalorder %s41, 1
    %p489 = por %p487, %p488
    %p491 = scmp.ne.s32.totalorder %s476, %s490
    %p492 = scmp.eq.s32.totalorder %s41, 0
    %p493 = por %p491, %p492
    %s495 = sadd.s32 %s494, 1
    %p498 = scmp.eq.s32.totalorder %s35, 1
    %p499 = scmp.ne.s32.totalorder %s494, %s496
    %p500 = scmp.eq.s32.totalorder %s35, 0
    %p501 = por %p499, %p500
    %p502 = scmp.ne.s32.totalorder %s494, %s496
    %p503 = scmp.eq.s32.totalorder %s40, 1
    %p504 = por %p502, %p503
    %p505 = scmp.ne.s32.totalorder %s496, %s497
    %p506 = scmp.eq.s32.totalorder %s40, 0
    %p507 = por %p505, %p506
    %p508 = scmp.ne.s32.totalorder %s496, %s497
    %p509 = scmp.eq.s32.totalorder %s41, 1
    %p510 = por %p508, %p509
    %p512 = scmp.ne.s32.totalorder %s497, %s511
    %p513 = scmp.eq.s32.totalorder %s41, 0
    %p514 = por %p512, %p513
    %s516 = sadd.s32 %s515, 1
    %p519 = scmp.eq.s32.totalorder %s35, 1
    %p520 = scmp.ne.s32.totalorder %s515, %s517
    %p521 = scmp.eq.s32.totalorder %s35, 0
    %p522 = por %p520, %p521
    %p523 = scmp.ne.s32.totalorder %s515, %s517
    %p524 = scmp.eq.s32.totalorder %s40, 1
    %p525 = por %p523, %p524
    %p526 = scmp.ne.s32.totalorder %s517, %s518
    %p527 = scmp.eq.s32.totalorder %s40, 0
    %p528 = por %p526, %p527
    %p529 = scmp.ne.s32.totalorder %s517, %s518
    %p530 = scmp.eq.s32.totalorder %s41, 1
    %p531 = por %p529, %p530
    %p533 = scmp.ne.s32.totalorder %s518, %s532
    %p534 = scmp.eq.s32.totalorder %s41, 0
    %p535 = por %p533, %p534
    %s537 = sadd.s32 %s536, 1
    %p540 = scmp.eq.s32.totalorder %s35, 1
    %p541 = scmp.ne.s32.totalorder %s536, %s538
    %p542 = scmp.eq.s32.totalorder %s35, 0
    %p543 = por %p541, %p542
    %p544 = scmp.ne.s32.totalorder %s536, %s538
    %p545 = scmp.eq.s32.totalorder %s40, 1
    %p546 = por %p544, %p545
    %p547 = scmp.ne.s32.totalorder %s538, %s539
    %p548 = scmp.eq.s32.totalorder %s40, 0
    %p549 = por %p547, %p548
    %p550 = scmp.ne.s32.totalorder %s538, %s539
    %p551 = scmp.eq.s32.totalorder %s41, 1
    %p552 = por %p550, %p551
    %p554 = scmp.ne.s32.totalorder %s539, %s553
    %p555 = scmp.eq.s32.totalorder %s41, 0
    %p556 = por %p554, %p555
    %s558 = sadd.s32 %s557, 1
    %p561 = scmp.eq.s32.totalorder %s35, 1
    %p562 = scmp.ne.s32.totalorder %s557, %s559
    %p563 = scmp.eq.s32.totalorder %s35, 0
    %p564 = por %p562, %p563
    %p565 = scmp.ne.s32.totalorder %s557, %s559
    %p566 = scmp.eq.s32.totalorder %s40, 1
    %p567 = por %p565, %p566
    %p568 = scmp.ne.s32.totalorder %s559, %s560
    %p569 = scmp.eq.s32.totalorder %s40, 0
    %p570 = por %p568, %p569
    %p571 = scmp.ne.s32.totalorder %s559, %s560
    %p572 = scmp.eq.s32.totalorder %s41, 1
    %p573 = por %p571, %p572
    %p575 = scmp.ne.s32.totalorder %s560, %s574
    %p576 = scmp.eq.s32.totalorder %s41, 0
    %p577 = por %p575, %p576
    %s579 = sadd.s32 %s578, 1
    %p582 = scmp.eq.s32.totalorder %s35, 1
    %p583 = scmp.ne.s32.totalorder %s578, %s580
    %p584 = scmp.eq.s32.totalorder %s35, 0
    %p585 = por %p583, %p584
    %p586 = scmp.ne.s32.totalorder %s578, %s580
    %p587 = scmp.eq.s32.totalorder %s40, 1
    %p588 = por %p586, %p587
    %p589 = scmp.ne.s32.totalorder %s580, %s581
    %p590 = scmp.eq.s32.totalorder %s40, 0
    %p591 = por %p589, %p590
    %p592 = scmp.ne.s32.totalorder %s580, %s581
    %p593 = scmp.eq.s32.totalorder %s41, 1
    %p594 = por %p592, %p593
    %p596 = scmp.ne.s32.totalorder %s581, %s595
    %p597 = scmp.eq.s32.totalorder %s41, 0
    %p598 = por %p596, %p597
    %s600 = sadd.s32 %s599, 1
    %p603 = scmp.eq.s32.totalorder %s35, 1
    %p604 = scmp.ne.s32.totalorder %s599, %s601
    %p605 = scmp.eq.s32.totalorder %s35, 0
    %p606 = por %p604, %p605
    %p607 = scmp.ne.s32.totalorder %s599, %s601
    %p608 = scmp.eq.s32.totalorder %s40, 1
    %p609 = por %p607, %p608
    %p610 = scmp.ne.s32.totalorder %s601, %s602
    %p611 = scmp.eq.s32.totalorder %s40, 0
    %p612 = por %p610, %p611
    %p613 = scmp.ne.s32.totalorder %s601, %s602
    %p614 = scmp.eq.s32.totalorder %s41, 1
    %p615 = por %p613, %p614
    %p617 = scmp.ne.s32.totalorder %s602, %s616
    %p618 = scmp.eq.s32.totalorder %s41, 0
    %p619 = por %p617, %p618
    %s620 = ssub.s32 %s35, %s42
    %p621 = scmp.eq.s32.totalorder %s620, 0
    %s623 = sadd.s32 %s622, 1
    %s624 = scalar_select %p621, %s622, %s623
    %p627 = pneg %p621
    %p628 = scmp.eq.s32.totalorder %s35, 1
    %p629 = por %p627, %p628
    %p630 = scmp.ne.s32.totalorder %s622, %s625
    %p631 = scmp.eq.s32.totalorder %s35, 0
    %p632 = por %p630, %p631
    %p633 = scmp.ne.s32.totalorder %s622, %s625
    %p634 = scmp.eq.s32.totalorder %s40, 1
    %p635 = por %p633, %p634
    %p636 = scmp.ne.s32.totalorder %s625, %s626
    %p637 = scmp.eq.s32.totalorder %s40, 0
    %p638 = por %p636, %p637
    %p639 = scmp.ne.s32.totalorder %s625, %s626
    %p640 = scmp.eq.s32.totalorder %s41, 1
    %p641 = por %p639, %p640
    %p643 = scmp.ne.s32.totalorder %s626, %s642
    %p644 = scmp.eq.s32.totalorder %s41, 0
    %p645 = por %p643, %p644
    %s646 = ssub.s32 %s35, %s42
    %p647 = scmp.eq.s32.totalorder %s646, 0
    %s649 = sadd.s32 %s648, 1
    %s650 = scalar_select %p647, %s648, %s649
    %p653 = pneg %p647
    %p654 = scmp.eq.s32.totalorder %s35, 1
    %p655 = por %p653, %p654
    %p656 = scmp.ne.s32.totalorder %s648, %s651
    %p657 = scmp.eq.s32.totalorder %s35, 0
    %p658 = por %p656, %p657
    %p659 = scmp.ne.s32.totalorder %s648, %s651
    %p660 = scmp.eq.s32.totalorder %s40, 1
    %p661 = por %p659, %p660
    %p662 = scmp.ne.s32.totalorder %s651, %s652
    %p663 = scmp.eq.s32.totalorder %s40, 0
    %p664 = por %p662, %p663
    %p665 = scmp.ne.s32.totalorder %s651, %s652
    %p666 = scmp.eq.s32.totalorder %s41, 1
    %p667 = por %p665, %p666
    %p669 = scmp.ne.s32.totalorder %s652, %s668
    %p670 = scmp.eq.s32.totalorder %s41, 0
    %p671 = por %p669, %p670
    %p672 = scmp.le.s32.totalorder 1, %s35
    %p673 = scmp.lt.s32.totalorder %s35, 3
    %p674 = pnand %p672, %p673
    %p675 = pneg %p674
    // Predicated region
    $region9: #{dplm_forward.1} parent=5 // pred_check
      _
    $region10: #{dplm_forward.1} parent=5 // pred_check_branch
      %677 = sbr.rel (%p674) target = $region12
    $region11: #{dplm_forward.1} parent=5 // pred_region
      %s678 = ssub.s32 %s35, 1
      // Predicated region
      $region13: #{dplm_forward.1} parent=11 // pred_check
        %p679 = pneg %p108
      $region14: #{dplm_forward.1} parent=11 // pred_check_branch
        %681 = sbr.rel (%p679) target = $region16
      $region15: #{dplm_forward.1} parent=11 // pred_region
        _
      $region16: #{dplm_forward.1} parent=11 // pred_fallthru
        _
      // Predicated region
      $region17: #{dplm_forward.1} parent=11 // pred_check
        %p682 = pneg %p129
      $region18: #{dplm_forward.1} parent=11 // pred_check_branch
        %684 = sbr.rel (%p682) target = $region20
      $region19: #{dplm_forward.1} parent=11 // pred_region
        _
      $region20: #{dplm_forward.1} parent=11 // pred_fallthru
        _
      // Predicated region
      $region21: #{dplm_forward.1} parent=11 // pred_check
        %p685 = pneg %p150
      $region22: #{dplm_forward.1} parent=11 // pred_check_branch
        %687 = sbr.rel (%p685) target = $region24
      $region23: #{dplm_forward.1} parent=11 // pred_region
        _
      $region24: #{dplm_forward.1} parent=11 // pred_fallthru
        _
      // Predicated region
      $region25: #{dplm_forward.1} parent=11 // pred_check
        %p688 = pneg %p171
      $region26: #{dplm_forward.1} parent=11 // pred_check_branch
        %690 = sbr.rel (%p688) target = $region28
      $region27: #{dplm_forward.1} parent=11 // pred_region
        _
      $region28: #{dplm_forward.1} parent=11 // pred_fallthru
        _
      // Predicated region
      $region29: #{dplm_forward.1} parent=11 // pred_check
        %p691 = pneg %p192
      $region30: #{dplm_forward.1} parent=11 // pred_check_branch
        %693 = sbr.rel (%p691) target = $region32
      $region31: #{dplm_forward.1} parent=11 // pred_region
        _
      $region32: #{dplm_forward.1} parent=11 // pred_fallthru
        _
      // Predicated region
      $region33: #{dplm_forward.1} parent=11 // pred_check
        %p694 = pneg %p213
      $region34: #{dplm_forward.1} parent=11 // pred_check_branch
        %696 = sbr.rel (%p694) target = $region36
      $region35: #{dplm_forward.1} parent=11 // pred_region
        _
      $region36: #{dplm_forward.1} parent=11 // pred_fallthru
        _
      // Predicated region
      $region37: #{dplm_forward.1} parent=11 // pred_check
        %p697 = pneg %p234
      $region38: #{dplm_forward.1} parent=11 // pred_check_branch
        %699 = sbr.rel (%p697) target = $region40
      $region39: #{dplm_forward.1} parent=11 // pred_region
        _
      $region40: #{dplm_forward.1} parent=11 // pred_fallthru
        _
      // Predicated region
      $region41: #{dplm_forward.1} parent=11 // pred_check
        %p700 = pneg %p255
      $region42: #{dplm_forward.1} parent=11 // pred_check_branch
        %702 = sbr.rel (%p700) target = $region44
      $region43: #{dplm_forward.1} parent=11 // pred_region
        _
      $region44: #{dplm_forward.1} parent=11 // pred_fallthru
        _
      // Predicated region
      $region45: #{dplm_forward.1} parent=11 // pred_check
        %p703 = pneg %p276
      $region46: #{dplm_forward.1} parent=11 // pred_check_branch
        %705 = sbr.rel (%p703) target = $region48
      $region47: #{dplm_forward.1} parent=11 // pred_region
        _
      $region48: #{dplm_forward.1} parent=11 // pred_fallthru
        _
      // Predicated region
      $region49: #{dplm_forward.1} parent=11 // pred_check
        %p706 = pneg %p297
      $region50: #{dplm_forward.1} parent=11 // pred_check_branch
        %708 = sbr.rel (%p706) target = $region52
      $region51: #{dplm_forward.1} parent=11 // pred_region
        _
      $region52: #{dplm_forward.1} parent=11 // pred_fallthru
        _
      // Predicated region
      $region53: #{dplm_forward.1} parent=11 // pred_check
        %p709 = pneg %p318
      $region54: #{dplm_forward.1} parent=11 // pred_check_branch
        %711 = sbr.rel (%p709) target = $region56
      $region55: #{dplm_forward.1} parent=11 // pred_region
        _
      $region56: #{dplm_forward.1} parent=11 // pred_fallthru
        _
      // Predicated region
      $region57: #{dplm_forward.1} parent=11 // pred_check
        %p712 = pneg %p339
      $region58: #{dplm_forward.1} parent=11 // pred_check_branch
        %714 = sbr.rel (%p712) target = $region60
      $region59: #{dplm_forward.1} parent=11 // pred_region
        _
      $region60: #{dplm_forward.1} parent=11 // pred_fallthru
        _
      // Predicated region
      $region61: #{dplm_forward.1} parent=11 // pred_check
        %p715 = pneg %p360
      $region62: #{dplm_forward.1} parent=11 // pred_check_branch
        %717 = sbr.rel (%p715) target = $region64
      $region63: #{dplm_forward.1} parent=11 // pred_region
        _
      $region64: #{dplm_forward.1} parent=11 // pred_fallthru
        _
      // Predicated region
      $region65: #{dplm_forward.1} parent=11 // pred_check
        %p718 = pneg %p381
      $region66: #{dplm_forward.1} parent=11 // pred_check_branch
        %720 = sbr.rel (%p718) target = $region68
      $region67: #{dplm_forward.1} parent=11 // pred_region
        _
      $region68: #{dplm_forward.1} parent=11 // pred_fallthru
        _
      // Predicated region
      $region69: #{dplm_forward.1} parent=11 // pred_check
        %p721 = pneg %p402
      $region70: #{dplm_forward.1} parent=11 // pred_check_branch
        %723 = sbr.rel (%p721) target = $region72
      $region71: #{dplm_forward.1} parent=11 // pred_region
        _
      $region72: #{dplm_forward.1} parent=11 // pred_fallthru
        _
      // Predicated region
      $region73: #{dplm_forward.1} parent=11 // pred_check
        %p724 = pneg %p423
      $region74: #{dplm_forward.1} parent=11 // pred_check_branch
        %726 = sbr.rel (%p724) target = $region76
      $region75: #{dplm_forward.1} parent=11 // pred_region
        _
      $region76: #{dplm_forward.1} parent=11 // pred_fallthru
        _
      // Predicated region
      $region77: #{dplm_forward.1} parent=11 // pred_check
        %p727 = pneg %p444
      $region78: #{dplm_forward.1} parent=11 // pred_check_branch
        %729 = sbr.rel (%p727) target = $region80
      $region79: #{dplm_forward.1} parent=11 // pred_region
        _
      $region80: #{dplm_forward.1} parent=11 // pred_fallthru
        _
      // Predicated region
      $region81: #{dplm_forward.1} parent=11 // pred_check
        %p730 = pneg %p465
      $region82: #{dplm_forward.1} parent=11 // pred_check_branch
        %732 = sbr.rel (%p730) target = $region84
      $region83: #{dplm_forward.1} parent=11 // pred_region
        _
      $region84: #{dplm_forward.1} parent=11 // pred_fallthru
        _
      // Predicated region
      $region85: #{dplm_forward.1} parent=11 // pred_check
        %p733 = pneg %p486
      $region86: #{dplm_forward.1} parent=11 // pred_check_branch
        %735 = sbr.rel (%p733) target = $region88
      $region87: #{dplm_forward.1} parent=11 // pred_region
        _
      $region88: #{dplm_forward.1} parent=11 // pred_fallthru
        _
      // Predicated region
      $region89: #{dplm_forward.1} parent=11 // pred_check
        %p736 = pneg %p507
      $region90: #{dplm_forward.1} parent=11 // pred_check_branch
        %738 = sbr.rel (%p736) target = $region92
      $region91: #{dplm_forward.1} parent=11 // pred_region
        _
      $region92: #{dplm_forward.1} parent=11 // pred_fallthru
        _
      // Predicated region
      $region93: #{dplm_forward.1} parent=11 // pred_check
        %p739 = pneg %p528
      $region94: #{dplm_forward.1} parent=11 // pred_check_branch
        %741 = sbr.rel (%p739) target = $region96
      $region95: #{dplm_forward.1} parent=11 // pred_region
        _
      $region96: #{dplm_forward.1} parent=11 // pred_fallthru
        _
      // Predicated region
      $region97: #{dplm_forward.1} parent=11 // pred_check
        %p742 = pneg %p549
      $region98: #{dplm_forward.1} parent=11 // pred_check_branch
        %744 = sbr.rel (%p742) target = $region100
      $region99: #{dplm_forward.1} parent=11 // pred_region
        _
      $region100: #{dplm_forward.1} parent=11 // pred_fallthru
        _
      // Predicated region
      $region101: #{dplm_forward.1} parent=11 // pred_check
        %p745 = pneg %p570
      $region102: #{dplm_forward.1} parent=11 // pred_check_branch
        %747 = sbr.rel (%p745) target = $region104
      $region103: #{dplm_forward.1} parent=11 // pred_region
        _
      $region104: #{dplm_forward.1} parent=11 // pred_fallthru
        _
      // Predicated region
      $region105: #{dplm_forward.1} parent=11 // pred_check
        %p748 = pneg %p591
      $region106: #{dplm_forward.1} parent=11 // pred_check_branch
        %750 = sbr.rel (%p748) target = $region108
      $region107: #{dplm_forward.1} parent=11 // pred_region
        _
      $region108: #{dplm_forward.1} parent=11 // pred_fallthru
        _
      // Predicated region
      $region109: #{dplm_forward.1} parent=11 // pred_check
        %p751 = pneg %p612
      $region110: #{dplm_forward.1} parent=11 // pred_check_branch
        %753 = sbr.rel (%p751) target = $region112
      $region111: #{dplm_forward.1} parent=11 // pred_region
        _
      $region112: #{dplm_forward.1} parent=11 // pred_fallthru
        _
    $region12: #{dplm_forward.1} parent=5 // pred_fallthru
      _
    %p754 = scmp.lt.s32.totalorder %s35, 2
    // Predicated region
    $region113: #{dplm_forward.1} parent=5 // pred_check
      %p755 = pneg %p754
    $region114: #{dplm_forward.1} parent=5 // pred_check_branch
      %757 = sbr.rel (%p755) target = $region116
    $region115: #{dplm_forward.1} parent=5 // pred_region
      // Predicated region
      $region117: #{dplm_forward.1} parent=115 // pred_check
        %p758 = pneg %p55
      $region118: #{dplm_forward.1} parent=115 // pred_check_branch
        %760 = sbr.rel (%p758) target = $region120
      $region119: #{dplm_forward.1} parent=115 // pred_region
        %p761 = scmp.lt.s32.totalorder %s35, 1
        %s762 = scalar_select %p761, %s35, 1
        %s763 = smul.addr %s762, 8
        %s764 = scalar_lea.vmem %s0, %s763
      $region120: #{dplm_forward.1} parent=115 // pred_fallthru
        _
      // Predicated region
      $region121: #{dplm_forward.1} parent=115 // pred_check
        %p765 = pneg %p81
      $region122: #{dplm_forward.1} parent=115 // pred_check_branch
        %767 = sbr.rel (%p765) target = $region124
      $region123: #{dplm_forward.1} parent=115 // pred_region
        %p768 = scmp.lt.s32.totalorder %s35, 1
        %s769 = scalar_select %p768, %s35, 1
        %s770 = smul.addr %s769, 8
        %s771 = scalar_lea.vmem %s1, %s770
      $region124: #{dplm_forward.1} parent=115 // pred_fallthru
        _
    $region116: #{dplm_forward.1} parent=5 // pred_fallthru
      _
    %p772 = scmp.le.s32.totalorder 1, %s35
    %p773 = scmp.lt.s32.totalorder %s35, 3
    %p774 = pnand %p772, %p773
    %p775 = pneg %p774
    // Predicated region
    $region125: #{dplm_forward.1} parent=5 // pred_check
      _
    $region126: #{dplm_forward.1} parent=5 // pred_check_branch
      %777 = sbr.rel (%p774) target = $region128
    $region127: #{dplm_forward.1} parent=5 // pred_region
      %s778 = ssub.s32 %s35, 1
      %p779 = scmp.lt.s32.totalorder %s40, 1
      %s780 = scalar_select %p779, %s40, 1
      %s781 = smul.addr %s780, 8
      %s782 = scalar_lea.vmem %s0, %s781
      %p783 = pneg %p61
      %p784 = pneg %p58
      %p785 = scmp.lt.s32.totalorder %s40, 1
      %s786 = scalar_select %p785, %s40, 1
      %s787 = smul.addr %s786, 8
      %s788 = scalar_lea.vmem %s1, %s787
      %p789 = pneg %p87
      %p790 = pneg %p84
      %p791 = pneg %p108
      %p792 = pneg %p105
      %p793 = pneg %p129
      %p794 = pneg %p126
      %p795 = pneg %p150
      %p796 = pneg %p147
      %p797 = pneg %p171
      %p798 = pneg %p168
      %p799 = pneg %p192
      %p800 = pneg %p189
      %p801 = pneg %p213
      %p802 = pneg %p210
      %p803 = pneg %p234
      %p804 = pneg %p231
      %p805 = pneg %p255
      %p806 = pneg %p252
      %p807 = pneg %p276
      %p808 = pneg %p273
      %p809 = pneg %p297
      %p810 = pneg %p294
      %p811 = pneg %p318
      %p812 = pneg %p315
      %p813 = pneg %p339
      %p814 = pneg %p336
      %p815 = pneg %p360
      %p816 = pneg %p357
      %p817 = pneg %p381
      %p818 = pneg %p378
      %p819 = pneg %p402
      %p820 = pneg %p399
      %p821 = pneg %p423
      %p822 = pneg %p420
      %p823 = pneg %p444
      %p824 = pneg %p441
      %p825 = pneg %p465
      %p826 = pneg %p462
      %p827 = pneg %p486
      %p828 = pneg %p483
      %p829 = pneg %p507
      %p830 = pneg %p504
      %p831 = pneg %p528
      %p832 = pneg %p525
      %p833 = pneg %p549
      %p834 = pneg %p546
      %p835 = pneg %p570
      %p836 = pneg %p567
      %p837 = pneg %p591
      %p838 = pneg %p588
      %p839 = pneg %p612
      %p840 = pneg %p609
      %p841 = pneg %p638
      %p842 = pneg %p635
      %p843 = scmp.lt.s32.totalorder %s40, 1
      %s844 = scalar_select %p843, %s40, 1
      %s845 = smul.addr %s844, 8
      %s846 = scalar_lea.vmem %s27, %s845
      %p847 = pneg %p664
      %p848 = pneg %p661
      %p849 = scmp.lt.s32.totalorder %s40, 1
      %s850 = scalar_select %p849, %s40, 1
      %s851 = smul.addr %s850, 8
      %s852 = scalar_lea.vmem %s28, %s851
      %p853 = scmp.lt.s32.totalorder %s40, 1
      %s854 = scalar_select %p853, %s40, 1
      %s855 = smul.addr %s854, 8
      %s856 = scalar_lea.vmem %s0, %s855
      %p857 = scmp.lt.s32.totalorder %s40, 1
      %s858 = scalar_select %p857, %s40, 1
      %s859 = smul.addr %s858, 8
      %s860 = scalar_lea.vmem %s1, %s859
      %p861 = scmp.lt.s32.totalorder %s40, 1
      %s862 = scalar_select %p861, %s40, 1
      %s863 = smul.addr %s862, 8
      %s864 = scalar_lea.vmem %s27, %s863
      %p865 = scmp.lt.s32.totalorder %s40, 1
      %s866 = scalar_select %p865, %s40, 1
      %s867 = smul.addr %s866, 8
      %s868 = scalar_lea.vmem %s28, %s867
      %v870 = vld [vmem:[%s856] sm:$0xff]
      %vm871 = vcmp.ne.s32.totalorder %v870, 1
      %v872 = vlaneseq
      %v873 = vand.u32 %v872, 127
      %874 = vset.pattern.permute.xlu0 0
      %875 = vperm.xlu0 %874, %v870
      %v876 = vpop.permute.xlu0 %875
      %vm877 = vcmp.eq.s32.totalorder %v876, %v873
      %v878 = vsel %vm871, 1, 0
      %879 = vset.pattern.permute.xlu0 0
      %880 = vperm.xlu0 %879, %v878
      %v881 = vpop.permute.xlu0 %880
      %vm882 = vcmp.eq.s32.totalorder %v881, 1
      %vm883 = vmand %vm877, %vm882
      %v884 = vsel %vm883, 1, 0
      %v885 = vcvt.s32.f32 %v884
      %v886 = vpack.c.bf16 %v885, %v885
      %v887 = vld [vmem:[%s2] sm:$0xf]
      %v888 = vld [vmem:[%s2 + $0x4] sm:$0xf]
      %v889 = vld [vmem:[%s2 + $0x8] sm:$0xf]
      %v890 = vld [vmem:[%s2 + $0xc] sm:$0xf]
      %v891 = vld [vmem:[%s2 + $0x10] sm:$0x3]
      %v897 = vunpack.c.l.b16 %v887
      %v898 = vunpack.c.l.b16 %v888
      %v899 = vunpack.c.l.b16 %v889
      %v900 = vunpack.c.l.b16 %v890
      %v901 = vunpack.c.l.b16 %v891
      %v902 = vpack.c.b16 %v898, %v897
      %v903 = vpack.c.b16 %v900, %v899
      %v904 = vpack.c.b16 %v901, %v901
      %vm907 = vcmask 293888
      %v909 = vsel %vm907, %v886, 0
      %vm911 = vcmask 1041408
      %v913 = vsel %vm911, %v904, 0
      %915 = vmatprep.subr.bf16.mxu0 0
      %916 = vmatpush1.bf16.msra.mxu0 %v902
      %917 = vmatprep.subr.bf16.mxu0 0
      %918 = vmatpush1.bf16.msra.mxu0 %v903
      %919 = vmatprep.subr.bf16.mxu0 0
      %920 = vmatpush1.bf16.msra.mxu0 %v913
      %921 = vmatprep.subr.bf16.mxu0 0
      %922 = vmatpush1.bf16.msra.mxu0 0
      %923 = vmatprep.subr.bf16.mxu0 0
      %924 = vmatpush1.bf16.msra.mxu0 0
      %925 = vmatprep.subr.bf16.mxu0 0
      %926 = vmatpush1.bf16.msra.mxu0 0
      %927 = vmatprep.subr.bf16.mxu0 0
      %928 = vmatpush1.bf16.msra.mxu0 0
      %929 = vmatprep.subr.bf16.mxu0 0
      %930 = vmatpush1.bf16.msra.mxu0 0
      %931 = vmatprep.subr.bf16.mxu0 0
      %932 = vmatpush1.bf16.msra.mxu0 0
      %933 = vmatprep.subr.bf16.mxu0 0
      %934 = vmatpush1.bf16.msra.mxu0 0
      %935 = vmatprep.subr.bf16.mxu0 0
      %936 = vmatpush1.bf16.msra.mxu0 0
      %937 = vmatprep.subr.bf16.mxu0 0
      %938 = vmatpush1.bf16.msra.mxu0 0
      %939 = vmatprep.subr.bf16.mxu0 0
      %940 = vmatpush1.bf16.msra.mxu0 0
      %941 = vmatprep.subr.bf16.mxu0 0
      %942 = vmatpush1.bf16.msra.mxu0 0
      %943 = vmatprep.subr.bf16.mxu0 0
      %944 = vmatpush1.bf16.msra.mxu0 0
      %945 = vmatprep.subr.bf16.mxu0 0
      %946 = vmatpush1.bf16.msra.mxu0 0
      %947 = vmatprep.mubr.bf16.mxu0 0
      %948 = vmatmul.mubr.bf16.gmra.mrb[0].mxu0 %v909
      %v949 = vpop.f32.mrb[0].mxu0
      %v950 = vadd.f32 0.0, %v949
      %v951 = vpop.f32.mrb[0].mxu0
      %v952 = vpop.f32.mrb[0].mxu0
      %v953 = vpop.f32.mrb[0].mxu0
      %954 = vdwg.mxu0
      %v955 = vld [vmem:[%s860] sm:$0xff]
      %v956 = vld [vmem:[%s4] sm:$0x1]
      %v957 = vld [vmem:[%s5] sm:$0x1]
      %vm958 = vcmask 261120
      %v959 = vsel %vm958, %v950, 0.0
      %960 = vadd.xlane.f32.xlu0 %v959
      %v961 = vpop.xlane.xlu0 %960
      %v962 = vrcp.pop 32.0
      %v963 = vmul.f32 %v961, %v962
      %v964 = vsub.f32 %v950, %v963
      %v965 = vmul.f32 %v964, %v964
      %v966 = vsel %vm958, %v965, 0.0
      %967 = vadd.xlane.f32.xlu0 %v966
      %v968 = vpop.xlane.xlu0 %967
      %v969 = vmul.f32 %v968, %v962
      %v970 = vadd.f32 %v969, 1e-05
      %v971 = vrsqrt.pop %v970
      %v972 = vmul.f32 %v964, %v971
      %v974 = vlaneseq
      %v975 = vshrl.u32 %v974, 7
      %v976 = vsub.s32 0, %v975
      %v977 = vrot.slane %v956, %v976
      %v979 = vmul.f32 %v972, %v977
      %v981 = vlaneseq
      %v982 = vshrl.u32 %v981, 7
      %v983 = vsub.s32 0, %v982
      %v984 = vrot.slane %v957, %v983
      %v986 = vadd.f32 %v979, %v984
      %v987 = vpack.c.bf16 %v986, %v986
      %v988 = vld [vmem:[%s6] sm:$0xf]
      %v989 = vld [vmem:[%s6 + $0x4] sm:$0xf]
      %v990 = vld [vmem:[%s6 + $0x8] sm:$0xf]
      %v991 = vld [vmem:[%s6 + $0xc] sm:$0xf]
      %v992 = vld [vmem:[%s6 + $0x10] sm:$0xf]
      %v993 = vld [vmem:[%s6 + $0x14] sm:$0xf]
      %v994 = vld [vmem:[%s6 + $0x18] sm:$0xf]
      %v995 = vld [vmem:[%s6 + $0x1c] sm:$0xf]
      %v996 = vld [vmem:[%s6 + $0x20] sm:$0xf]
      %v997 = vld [vmem:[%s6 + $0x24] sm:$0xf]
      %v998 = vld [vmem:[%s6 + $0x28] sm:$0xf]
      %v999 = vld [vmem:[%s6 + $0x2c] sm:$0xf]
      %v1000 = vld [vmem:[%s6 + $0x30] sm:$0xf]
      %v1001 = vld [vmem:[%s6 + $0x34] sm:$0xf]
      %v1002 = vld [vmem:[%s6 + $0x38] sm:$0xf]
      %v1003 = vld [vmem:[%s6 + $0x3c] sm:$0xf]
      %v1004 = vld [vmem:[%s7] sm:$0x1]
      %v1005 = vld [vmem:[%s7 + $0x1] sm:$0x1]
      %v1006 = vld [vmem:[%s7 + $0x2] sm:$0x1]
      %v1007 = vld [vmem:[%s7 + $0x3] sm:$0x1]
      %v1012 = vlaneseq
      %v1013 = vshrl.u32 %v1012, 7
      %v1014 = vsub.s32 0, %v1013
      %v1015 = vrot.slane %v1004, %v1014
      %v1016 = vlaneseq
      %v1017 = vshrl.u32 %v1016, 7
      %v1018 = vsub.s32 0, %v1017
      %v1019 = vrot.slane %v1005, %v1018
      %v1020 = vlaneseq
      %v1021 = vshrl.u32 %v1020, 7
      %v1022 = vsub.s32 0, %v1021
      %v1023 = vrot.slane %v1006, %v1022
      %v1024 = vlaneseq
      %v1025 = vshrl.u32 %v1024, 7
      %v1026 = vsub.s32 0, %v1025
      %v1027 = vrot.slane %v1007, %v1026
      %v1036 = vunpack.c.l.b16 %v988
      %v1037 = vunpack.c.l.b16 %v989
      %v1038 = vunpack.c.l.b16 %v990
      %v1039 = vunpack.c.l.b16 %v991
      %v1040 = vpack.c.b16 %v1037, %v1036
      %v1041 = vpack.c.b16 %v1039, %v1038
      %v1045 = vsel %vm958, %v987, 0
      %1047 = vmatprep.subr.bf16.mxu0 0
      %1048 = vmatpush1.bf16.msra.mxu0 %v1040
      %1049 = vmatprep.subr.bf16.mxu0 0
      %1050 = vmatpush1.bf16.msra.mxu0 %v1041
      %1051 = vmatprep.subr.bf16.mxu0 0
      %1052 = vmatpush1.bf16.msra.mxu0 0
      %1053 = vmatprep.subr.bf16.mxu0 0
      %1054 = vmatpush1.bf16.msra.mxu0 0
      %1055 = vmatprep.subr.bf16.mxu0 0
      %1056 = vmatpush1.bf16.msra.mxu0 0
      %1057 = vmatprep.subr.bf16.mxu0 0
      %1058 = vmatpush1.bf16.msra.mxu0 0
      %1059 = vmatprep.subr.bf16.mxu0 0
      %1060 = vmatpush1.bf16.msra.mxu0 0
      %1061 = vmatprep.subr.bf16.mxu0 0
      %1062 = vmatpush1.bf16.msra.mxu0 0
      %1063 = vmatprep.subr.bf16.mxu0 0
      %1064 = vmatpush1.bf16.msra.mxu0 0
      %1065 = vmatprep.subr.bf16.mxu0 0
      %1066 = vmatpush1.bf16.msra.mxu0 0
      %1067 = vmatprep.subr.bf16.mxu0 0
      %1068 = vmatpush1.bf16.msra.mxu0 0
      %1069 = vmatprep.subr.bf16.mxu0 0
      %1070 = vmatpush1.bf16.msra.mxu0 0
      %1071 = vmatprep.subr.bf16.mxu0 0
      %1072 = vmatpush1.bf16.msra.mxu0 0
      %1073 = vmatprep.subr.bf16.mxu0 0
      %1074 = vmatpush1.bf16.msra.mxu0 0
      %1075 = vmatprep.subr.bf16.mxu0 0
      %1076 = vmatpush1.bf16.msra.mxu0 0
      %1077 = vmatprep.subr.bf16.mxu0 0
      %1078 = vmatpush1.bf16.msra.mxu0 0
      %1079 = vmatprep.mubr.bf16.mxu0 0
      %1080 = vmatmul.mubr.bf16.gmra.mrb[0].mxu0 %v1045
      %v1081 = vpop.f32.mrb[0].mxu0
      %v1082 = vadd.f32 %v1015, %v1081
      %v1083 = vpop.f32.mrb[0].mxu0
      %v1084 = vpop.f32.mrb[0].mxu0
      %v1085 = vpop.f32.mrb[0].mxu0
      %1086 = vdwg.mxu0
      %v1091 = vunpack.c.l.b16 %v992
      %v1092 = vunpack.c.l.b16 %v993
      %v1093 = vunpack.c.l.b16 %v994
      %v1094 = vunpack.c.l.b16 %v995
      %v1095 = vpack.c.b16 %v1092, %v1091
      %v1096 = vpack.c.b16 %v1094, %v1093
      %1099 = vmatprep.subr.bf16.mxu0 0
      %1100 = vmatpush1.bf16.msra.mxu0 %v1095
      %1101 = vmatprep.subr.bf16.mxu0 0
      %1102 = vmatpush1.bf16.msra.mxu0 %v1096
      %1103 = vmatprep.subr.bf16.mxu0 0
      %1104 = vmatpush1.bf16.msra.mxu0 0
      %1105 = vmatprep.subr.bf16.mxu0 0
      %1106 = vmatpush1.bf16.msra.mxu0 0
      %1107 = vmatprep.subr.bf16.mxu0 0
      %1108 = vmatpush1.bf16.msra.mxu0 0
      %1109 = vmatprep.subr.bf16.mxu0 0
      %1110 = vmatpush1.bf16.msra.mxu0 0
      %1111 = vmatprep.subr.bf16.mxu0 0
      %1112 = vmatpush1.bf16.msra.mxu0 0
      %1113 = vmatprep.subr.bf16.mxu0 0
      %1114 = vmatpush1.bf16.msra.mxu0 0
      %1115 = vmatprep.subr.bf16.mxu0 0
      %1116 = vmatpush1.bf16.msra.mxu0 0
      %1117 = vmatprep.subr.bf16.mxu0 0
      %1118 = vmatpush1.bf16.msra.mxu0 0
      %1119 = vmatprep.subr.bf16.mxu0 0
      %1120 = vmatpush1.bf16.msra.mxu0 0
      %1121 = vmatprep.subr.bf16.mxu0 0
      %1122 = vmatpush1.bf16.msra.mxu0 0
      %1123 = vmatprep.subr.bf16.mxu0 0
      %1124 = vmatpush1.bf16.msra.mxu0 0
      %1125 = vmatprep.subr.bf16.mxu0 0
      %1126 = vmatpush1.bf16.msra.mxu0 0
      %1127 = vmatprep.subr.bf16.mxu0 0
      %1128 = vmatpush1.bf16.msra.mxu0 0
      %1129 = vmatprep.subr.bf16.mxu0 0
      %1130 = vmatpush1.bf16.msra.mxu0 0
      %1131 = vmatprep.mubr.bf16.mxu0 0
      %1132 = vmatmul.mubr.bf16.gmra.mrb[0].mxu0 %v1045
      %v1133 = vpop.f32.mrb[0].mxu0
      %v1134 = vadd.f32 %v1019, %v1133
      %v1135 = vpop.f32.mrb[0].mxu0
      %v1136 = vpop.f32.mrb[0].mxu0
      %v1137 = vpop.f32.mrb[0].mxu0
      %1138 = vdwg.mxu0
      %v1143 = vunpack.c.l.b16 %v996
      %v1144 = vunpack.c.l.b16 %v997
      %v1145 = vunpack.c.l.b16 %v998
      %v1146 = vunpack.c.l.b16 %v999
      %v1147 = vpack.c.b16 %v1144, %v1143
      %v1148 = vpack.c.b16 %v1146, %v1145
      %1151 = vmatprep.subr.bf16.mxu0 0
      %1152 = vmatpush1.bf16.msra.mxu0 %v1147
      %1153 = vmatprep.subr.bf16.mxu0 0
      %1154 = vmatpush1.bf16.msra.mxu0 %v1148
      %1155 = vmatprep.subr.bf16.mxu0 0
      %1156 = vmatpush1.bf16.msra.mxu0 0
      %1157 = vmatprep.subr.bf16.mxu0 0
      %1158 = vmatpush1.bf16.msra.mxu0 0
      %1159 = vmatprep.subr.bf16.mxu0 0
      %1160 = vmatpush1.bf16.msra.mxu0 0
      %1161 = vmatprep.subr.bf16.mxu0 0
      %1162 = vmatpush1.bf16.msra.mxu0 0
      %1163 = vmatprep.subr.bf16.mxu0 0
      %1164 = vmatpush1.bf16.msra.mxu0 0
      %1165 = vmatprep.subr.bf16.mxu0 0
      %1166 = vmatpush1.bf16.msra.mxu0 0
      %1167 = vmatprep.subr.bf16.mxu0 0
      %1168 = vmatpush1.bf16.msra.mxu0 0
      %1169 = vmatprep.subr.bf16.mxu0 0
      %1170 = vmatpush1.bf16.msra.mxu0 0
      %1171 = vmatprep.subr.bf16.mxu0 0
      %1172 = vmatpush1.bf16.msra.mxu0 0
      %1173 = vmatprep.subr.bf16.mxu0 0
      %1174 = vmatpush1.bf16.msra.mxu0 0
      %1175 = vmatprep.subr.bf16.mxu0 0
      %1176 = vmatpush1.bf16.msra.mxu0 0
      %1177 = vmatprep.subr.bf16.mxu0 0
      %1178 = vmatpush1.bf16.msra.mxu0 0
      %1179 = vmatprep.subr.bf16.mxu0 0
      %1180 = vmatpush1.bf16.msra.mxu0 0
      %1181 = vmatprep.subr.bf16.mxu0 0
      %1182 = vmatpush1.bf16.msra.mxu0 0
      %1183 = vmatprep.mubr.bf16.mxu0 0
      %1184 = vmatmul.mubr.bf16.gmra.mrb[0].mxu0 %v1045
      %v1185 = vpop.f32.mrb[0].mxu0
      %v1186 = vadd.f32 %v1023, %v1185
      %v1187 = vpop.f32.mrb[0].mxu0
      %v1188 = vpop.f32.mrb[0].mxu0
      %v1189 = vpop.f32.mrb[0].mxu0
      %1190 = vdwg.mxu0
      %v1195 = vunpack.c.l.b16 %v1000
      %v1196 = vunpack.c.l.b16 %v1001
      %v1197 = vunpack.c.l.b16 %v1002
      %v1198 = vunpack.c.l.b16 %v1003
      %v1199 = vpack.c.b16 %v1196, %v1195
      %v1200 = vpack.c.b16 %v1198, %v1197
      %1203 = vmatprep.subr.bf16.mxu0 0
      %1204 = vmatpush1.bf16.msra.mxu0 %v1199
      %1205 = vmatprep.subr.bf16.mxu0 0
      %1206 = vmatpush1.bf16.msra.mxu0 %v1200
      %1207 = vmatprep.subr.bf16.mxu0 0
      %1208 = vmatpush1.bf16.msra.mxu0 0
      %1209 = vmatprep.subr.bf16.mxu0 0
      %1210 = vmatpush1.bf16.msra.mxu0 0
      %1211 = vmatprep.subr.bf16.mxu0 0
      %1212 = vmatpush1.bf16.msra.mxu0 0
      %1213 = vmatprep.subr.bf16.mxu0 0
      %1214 = vmatpush1.bf16.msra.mxu0 0
      %1215 = vmatprep.subr.bf16.mxu0 0
      %1216 = vmatpush1.bf16.msra.mxu0 0
      %1217 = vmatprep.subr.bf16.mxu0 0
      %1218 = vmatpush1.bf16.msra.mxu0 0
      %1219 = vmatprep.subr.bf16.mxu0 0
      %1220 = vmatpush1.bf16.msra.mxu0 0
      %1221 = vmatprep.subr.bf16.mxu0 0
      %1222 = vmatpush1.bf16.msra.mxu0 0
      %1223 = vmatprep.subr.bf16.mxu0 0
      %1224 = vmatpush1.bf16.msra.mxu0 0
      %1225 = vmatprep.subr.bf16.mxu0 0
      %1226 = vmatpush1.bf16.msra.mxu0 0
      %1227 = vmatprep.subr.bf16.mxu0 0
      %1228 = vmatpush1.bf16.msra.mxu0 0
      %1229 = vmatprep.subr.bf16.mxu0 0
      %1230 = vmatpush1.bf16.msra.mxu0 0
      %1231 = vmatprep.subr.bf16.mxu0 0
      %1232 = vmatpush1.bf16.msra.mxu0 0
      %1233 = vmatprep.subr.bf16.mxu0 0
      %1234 = vmatpush1.bf16.msra.mxu0 0
      %1235 = vmatprep.mubr.bf16.mxu0 0
      %1236 = vmatmul.mubr.bf16.gmra.mrb[0].mxu0 %v1045
      %v1237 = vpop.f32.mrb[0].mxu0
      %v1238 = vadd.f32 %v1027, %v1237
      %v1239 = vpop.f32.mrb[0].mxu0
      %v1240 = vpop.f32.mrb[0].mxu0
      %v1241 = vpop.f32.mrb[0].mxu0
      %1242 = vdwg.mxu0
      %v1243 = vld [vmem:[%s8] sm:$0xf]
      %v1244 = vld [vmem:[%s8 + $0x4] sm:$0xf]
      %v1245 = vld [vmem:[%s8 + $0x8] sm:$0xf]
      %v1246 = vld [vmem:[%s8 + $0xc] sm:$0xf]
      %v1247 = vld [vmem:[%s8 + $0x10] sm:$0xf]
      %v1248 = vld [vmem:[%s8 + $0x14] sm:$0xf]
      %v1249 = vld [vmem:[%s8 + $0x18] sm:$0xf]
      %v1250 = vld [vmem:[%s8 + $0x1c] sm:$0xf]
      %v1251 = vld [vmem:[%s8 + $0x20] sm:$0xf]
      %v1252 = vld [vmem:[%s8 + $0x24] sm:$0xf]
      %v1253 = vld [vmem:[%s8 + $0x28] sm:$0xf]
      %v1254 = vld [vmem:[%s8 + $0x2c] sm:$0xf]
      %v1255 = vld [vmem:[%s8 + $0x30] sm:$0xf]
      %v1256 = vld [vmem:[%s8 + $0x34] sm:$0xf]
      %v1257 = vld [vmem:[%s8 + $0x38] sm:$0xf]
      %v1258 = vld [vmem:[%s8 + $0x3c] sm:$0xf]
      %v1259 = vld [vmem:[%s9] sm:$0x1]
      %v1260 = vld [vmem:[%s9 + $0x1] sm:$0x1]
      %v1261 = vld [vmem:[%s9 + $0x2] sm:$0x1]
      %v1262 = vld [vmem:[%s9 + $0x3] sm:$0x1]
      %v1267 = vlaneseq
      %v1268 = vshrl.u32 %v1267, 7
      %v1269 = vsub.s32 0, %v1268
      %v1270 = vrot.slane %v1259, %v1269
      %v1271 = vlaneseq
      %v1272 = vshrl.u32 %v1271, 7
      %v1273 = vsub.s32 0, %v1272
      %v1274 = vrot.slane %v1260, %v1273
      %v1275 = vlaneseq
      %v1276 = vshrl.u32 %v1275, 7
      %v1277 = vsub.s32 0, %v1276
      %v1278 = vrot.slane %v1261, %v1277
      %v1279 = vlaneseq
      %v1280 = vshrl.u32 %v1279, 7
      %v1281 = vsub.s32 0, %v1280
      %v1282 = vrot.slane %v1262, %v1281
      %v1291 = vunpack.c.l.b16 %v1243
      %v1292 = vunpack.c.l.b16 %v1244
      %v1293 = vunpack.c.l.b16 %v1245
      %v1294 = vunpack.c.l.b16 %v1246
      %v1295 = vpack.c.b16 %v1292, %v1291
      %v1296 = vpack.c.b16 %v1294, %v1293
      %1299 = vmatprep.subr.bf16.mxu0 0
      %1300 = vmatpush1.bf16.msra.mxu0 %v1295
      %1301 = vmatprep.subr.bf16.mxu0 0
      %1302 = vmatpush1.bf16.msra.mxu0 %v1296
      %1303 = vmatprep.subr.bf16.mxu0 0
      %1304 = vmatpush1.bf16.msra.mxu0 0
      %1305 = vmatprep.subr.bf16.mxu0 0
      %1306 = vmatpush1.bf16.msra.mxu0 0
      %1307 = vmatprep.subr.bf16.mxu0 0
      %1308 = vmatpush1.bf16.msra.mxu0 0
      %1309 = vmatprep.subr.bf16.mxu0 0
      %1310 = vmatpush1.bf16.msra.mxu0 0
      %1311 = vmatprep.subr.bf16.mxu0 0
      %1312 = vmatpush1.bf16.msra.mxu0 0
      %1313 = vmatprep.subr.bf16.mxu0 0
      %1314 = vmatpush1.bf16.msra.mxu0 0
      %1315 = vmatprep.subr.bf16.mxu0 0
      %1316 = vmatpush1.bf16.msra.mxu0 0
      %1317 = vmatprep.subr.bf16.mxu0 0
      %1318 = vmatpush1.bf16.msra.mxu0 0
      %1319 = vmatprep.subr.bf16.mxu0 0
      %1320 = vmatpush1.bf16.msra.mxu0 0
      %1321 = vmatprep.subr.bf16.mxu0 0
      %1322 = vmatpush1.bf16.msra.mxu0 0
      %1323 = vmatprep.subr.bf16.mxu0 0
      %1324 = vmatpush1.bf16.msra.mxu0 0
      %1325 = vmatprep.subr.bf16.mxu0 0
      %1326 = vmatpush1.bf16.msra.mxu0 0
      %1327 = vmatprep.subr.bf16.mxu0 0
      %1328 = vmatpush1.bf16.msra.mxu0 0
      %1329 = vmatprep.subr.bf16.mxu0 0
      %1330 = vmatpush1.bf16.msra.mxu0 0
      %1331 = vmatprep.mubr.bf16.mxu0 0
      %1332 = vmatmul.mubr.bf16.gmra.mrb[0].mxu0 %v1045
      %v1333 = vpop.f32.mrb[0].mxu0
      %v1334 = vadd.f32 %v1270, %v1333
      %v1335 = vpop.f32.mrb[0].mxu0
      %v1336 = vpop.f32.mrb[0].mxu0
      %v1337 = vpop.f32.mrb[0].mxu0
      %1338 = vdwg.mxu0
      %v1343 = vunpack.c.l.b16 %v1247
      %v1344 = vunpack.c.l.b16 %v1248
      %v1345 = vunpack.c.l.b16 %v1249
      %v1346 = vunpack.c.l.b16 %v1250
      %v1347 = vpack.c.b16 %v1344, %v1343
      %v1348 = vpack.c.b16 %v1346, %v1345
      %1351 = vmatprep.subr.bf16.mxu0 0
      %1352 = vmatpush1.bf16.msra.mxu0 %v1347
      %1353 = vmatprep.subr.bf16.mxu0 0
      %1354 = vmatpush1.bf16.msra.mxu0 %v1348
      %1355 = vmatprep.subr.bf16.mxu0 0
      %1356 = vmatpush1.bf16.msra.mxu0 0
      %1357 = vmatprep.subr.bf16.mxu0 0
      %1358 = vmatpush1.bf16.msra.mxu0 0
      %1359 = vmatprep.subr.bf16.mxu0 0
      %1360 = vmatpush1.bf16.msra.mxu0 0
      %1361 = vmatprep.subr.bf16.mxu0 0
      %1362 = vmatpush1.bf16.msra.mxu0 0
      %1363 = vmatprep.subr.bf16.mxu0 0
      %1364 = vmatpush1.bf16.msra.mxu0 0
      %1365 = vmatprep.subr.bf16.mxu0 0
      %1366 = vmatpush1.bf16.msra.mxu0 0
      %1367 = vmatprep.subr.bf16.mxu0 0
      %1368 = vmatpush1.bf16.msra.mxu0 0
      %1369 = vmatprep.subr.bf16.mxu0 0
      %1370 = vmatpush1.bf16.msra.mxu0 0
      %1371 = vmatprep.subr.bf16.mxu0 0
      %1372 = vmatpush1.bf16.msra.mxu0 0
      %1373 = vmatprep.subr.bf16.mxu0 0
      %1374 = vmatpush1.bf16.msra.mxu0 0
      %1375 = vmatprep.subr.bf16.mxu0 0
      %1376 = vmatpush1.bf16.msra.mxu0 0
      %1377 = vmatprep.subr.bf16.mxu0 0
      %1378 = vmatpush1.bf16.msra.mxu0 0
      %1379 = vmatprep.subr.bf16.mxu0 0
      %1380 = vmatpush1.bf16.msra.mxu0 0
      %1381 = vmatprep.subr.bf16.mxu0 0
      %1382 = vmatpush1.bf16.msra.mxu0 0
      %1383 = vmatprep.mubr.bf16.mxu0 0
      %1384 = vmatmul.mubr.bf16.gmra.mrb[0].mxu0 %v1045
      %v1385 = vpop.f32.mrb[0].mxu0
      %v1386 = vadd.f32 %v1274, %v1385
      %v1387 = vpop.f32.mrb[0].mxu0
      %v1388 = vpop.f32.mrb[0].mxu0
      %v1389 = vpop.f32.mrb[0].mxu0
      %1390 = vdwg.mxu0
      %v1395 = vunpack.c.l.b16 %v1251
      %v1396 = vunpack.c.l.b16 %v1252
      %v1397 = vunpack.c.l.b16 %v1253
      %v1398 = vunpack.c.l.b16 %v1254
      %v1399 = vpack.c.b16 %v1396, %v1395
      %v1400 = vpack.c.b16 %v1398, %v1397
      %1403 = vmatprep.subr.bf16.mxu0 0
      %1404 = vmatpush1.bf16.msra.mxu0 %v1399
      %1405 = vmatprep.subr.bf16.mxu0 0
      %1406 = vmatpush1.bf16.msra.mxu0 %v1400
      %1407 = vmatprep.subr.bf16.mxu0 0
      %1408 = vmatpush1.bf16.msra.mxu0 0
      %1409 = vmatprep.subr.bf16.mxu0 0
      %1410 = vmatpush1.bf16.msra.mxu0 0
      %1411 = vmatprep.subr.bf16.mxu0 0
      %1412 = vmatpush1.bf16.msra.mxu0 0
      %1413 = vmatprep.subr.bf16.mxu0 0
      %1414 = vmatpush1.bf16.msra.mxu0 0
      %1415 = vmatprep.subr.bf16.mxu0 0
      %1416 = vmatpush1.bf16.msra.mxu0 0
      %1417 = vmatprep.subr.bf16.mxu0 0
      %1418 = vmatpush1.bf16.msra.mxu0 0
      %1419 = vmatprep.subr.bf16.mxu0 0
      %1420 = vmatpush1.bf16.msra.mxu0 0
      %1421 = vmatprep.subr.bf16.mxu0 0
      %1422 = vmatpush1.bf16.msra.mxu0 0
      %1423 = vmatprep.subr.bf16.mxu0 0
      %1424 = vmatpush1.bf16.msra.mxu0 0
      %1425 = vmatprep.subr.bf16.mxu0 0
      %1426 = vmatpush1.bf16.msra.mxu0 0
      %1427 = vmatprep.subr.bf16.mxu0 0
      %1428 = vmatpush1.bf16.msra.mxu0 0
      %1429 = vmatprep.subr.bf16.mxu0 0
      %1430 = vmatpush1.bf16.msra.mxu0 0
      %1431 = vmatprep.subr.bf16.mxu0 0
      %1432 = vmatpush1.bf16.msra.mxu0 0
      %1433 = vmatprep.subr.bf16.mxu0 0
      %1434 = vmatpush1.bf16.msra.mxu0 0
      %1435 = vmatprep.mubr.bf16.mxu0 0
      %1436 = vmatmul.mubr.bf16.gmra.mrb[0].mxu0 %v1045
      %v1437 = vpop.f32.mrb[0].mxu0
      %v1438 = vadd.f32 %v1278, %v1437
      %v1439 = vpop.f32.mrb[0].mxu0
      %v1440 = vpop.f32.mrb[0].mxu0
      %v1441 = vpop.f32.mrb[0].mxu0
      %1442 = vdwg.mxu0
      %v1447 = vunpack.c.l.b16 %v1255
      %v1448 = vunpack.c.l.b16 %v1256
      %v1449 = vunpack.c.l.b16 %v1257
      %v1450 = vunpack.c.l.b16 %v1258
      %v1451 = vpack.c.b16 %v1448, %v1447
      %v1452 = vpack.c.b16 %v1450, %v1449
      %1455 = vmatprep.subr.bf16.mxu0 0
      %1456 = vmatpush1.bf16.msra.mxu0 %v1451
      %1457 = vmatprep.subr.bf16.mxu0 0
      %1458 = vmatpush1.bf16.msra.mxu0 %v1452
      %1459 = vmatprep.subr.bf16.mxu0 0
      %1460 = vmatpush1.bf16.msra.mxu0 0
      %1461 = vmatprep.subr.bf16.mxu0 0
      %1462 = vmatpush1.bf16.msra.mxu0 0
      %1463 = vmatprep.subr.bf16.mxu0 0
      %1464 = vmatpush1.bf16.msra.mxu0 0
      %1465 = vmatprep.subr.bf16.mxu0 0
      %1466 = vmatpush1.bf16.msra.mxu0 0
      %1467 = vmatprep.subr.bf16.mxu0 0
      %1468 = vmatpush1.bf16.msra.mxu0 0
      %1469 = vmatprep.subr.bf16.mxu0 0
      %1470 = vmatpush1.bf16.msra.mxu0 0
      %1471 = vmatprep.subr.bf16.mxu0 0
      %1472 = vmatpush1.bf16.msra.mxu0 0
      %1473 = vmatprep.subr.bf16.mxu0 0
      %1474 = vmatpush1.bf16.msra.mxu0 0
      %1475 = vmatprep.subr.bf16.mxu0 0
      %1476 = vmatpush1.bf16.msra.mxu0 0
      %1477 = vmatprep.subr.bf16.mxu0 0
      %1478 = vmatpush1.bf16.msra.mxu0 0
      %1479 = vmatprep.subr.bf16.mxu0 0
      %1480 = vmatpush1.bf16.msra.mxu0 0
      %1481 = vmatprep.subr.bf16.mxu0 0
      %1482 = vmatpush1.bf16.msra.mxu0 0
      %1483 = vmatprep.subr.bf16.mxu0 0
      %1484 = vmatpush1.bf16.msra.mxu0 0
      %1485 = vmatprep.subr.bf16.mxu0 0
      %1486 = vmatpush1.bf16.msra.mxu0 0
      %1487 = vmatprep.mubr.bf16.mxu0 0
      %1488 = vmatmul.mubr.bf16.gmra.mrb[0].mxu0 %v1045
      %v1489 = vpop.f32.mrb[0].mxu0
      %v1490 = vadd.f32 %v1282, %v1489
      %v1491 = vpop.f32.mrb[0].mxu0
      %v1492 = vpop.f32.mrb[0].mxu0
      %v1493 = vpop.f32.mrb[0].mxu0
      %1494 = vdwg.mxu0
      %v1495 = vld [vmem:[%s10] sm:$0xf]
      %v1496 = vld [vmem:[%s10 + $0x4] sm:$0xf]
      %v1497 = vld [vmem:[%s10 + $0x8] sm:$0xf]
      %v1498 = vld [vmem:[%s10 + $0xc] sm:$0xf]
      %v1499 = vld [vmem:[%s10 + $0x10] sm:$0xf]
      %v1500 = vld [vmem:[%s10 + $0x14] sm:$0xf]
      %v1501 = vld [vmem:[%s10 + $0x18] sm:$0xf]
      %v1502 = vld [vmem:[%s10 + $0x1c] sm:$0xf]
      %v1503 = vld [vmem:[%s10 + $0x20] sm:$0xf]
      %v1504 = vld [vmem:[%s10 + $0x24] sm:$0xf]
      %v1505 = vld [vmem:[%s10 + $0x28] sm:$0xf]
      %v1506 = vld [vmem:[%s10 + $0x2c] sm:$0xf]
      %v1507 = vld [vmem:[%s10 + $0x30] sm:$0xf]
      %v1508 = vld [vmem:[%s10 + $0x34] sm:$0xf]
      %v1509 = vld [vmem:[%s10 + $0x38] sm:$0xf]
      %v1510 = vld [vmem:[%s10 + $0x3c] sm:$0xf]
      %v1511 = vld [vmem:[%s11] sm:$0x1]
      %v1512 = vld [vmem:[%s11 + $0x1] sm:$0x1]
      %v1513 = vld [vmem:[%s11 + $0x2] sm:$0x1]
      %v1514 = vld [vmem:[%s11 + $0x3] sm:$0x1]
      %v1519 = vlaneseq
      %v1520 = vshrl.u32 %v1519, 7
      %v1521 = vsub.s32 0, %v1520
      %v1522 = vrot.slane %v1511, %v1521
      %v1523 = vlaneseq
      %v1524 = vshrl.u32 %v1523, 7
      %v1525 = vsub.s32 0, %v1524
      %v1526 = vrot.slane %v1512, %v1525
      %v1527 = vlaneseq
      %v1528 = vshrl.u32 %v1527, 7
      %v1529 = vsub.s32 0, %v1528
      %v1530 = vrot.slane %v1513, %v1529
      %v1531 = vlaneseq
      %v1532 = vshrl.u32 %v1531, 7
      %v1533 = vsub.s32 0, %v1532
      %v1534 = vrot.slane %v1514, %v1533
      %v1543 = vunpack.c.l.b16 %v1495
      %v1544 = vunpack.c.l.b16 %v1496
      %v1545 = vunpack.c.l.b16 %v1497
      %v1546 = vunpack.c.l.b16 %v1498
      %v1547 = vpack.c.b16 %v1544, %v1543
      %v1548 = vpack.c.b16 %v1546, %v1545
      %1551 = vmatprep.subr.bf16.mxu0 0
      %1552 = vmatpush1.bf16.msra.mxu0 %v1547
      %1553 = vmatprep.subr.bf16.mxu0 0
      %1554 = vmatpush1.bf16.msra.mxu0 %v1548
      %1555 = vmatprep.subr.bf16.mxu0 0
      %1556 = vmatpush1.bf16.msra.mxu0 0
      %1557 = vmatprep.subr.bf16.mxu0 0
      %1558 = vmatpush1.bf16.msra.mxu0 0
      %1559 = vmatprep.subr.bf16.mxu0 0
      %1560 = vmatpush1.bf16.msra.mxu0 0
      %1561 = vmatprep.subr.bf16.mxu0 0
      %1562 = vmatpush1.bf16.msra.mxu0 0
      %1563 = vmatprep.subr.bf16.mxu0 0
      %1564 = vmatpush1.bf16.msra.mxu0 0
      %1565 = vmatprep.subr.bf16.mxu0 0
      %1566 = vmatpush1.bf16.msra.mxu0 0
      %1567 = vmatprep.subr.bf16.mxu0 0
      %1568 = vmatpush1.bf16.msra.mxu0 0
      %1569 = vmatprep.subr.bf16.mxu0 0
      %1570 = vmatpush1.bf16.msra.mxu0 0
      %1571 = vmatprep.subr.bf16.mxu0 0
      %1572 = vmatpush1.bf16.msra.mxu0 0
      %1573 = vmatprep.subr.bf16.mxu0 0
      %1574 = vmatpush1.bf16.msra.mxu0 0
      %1575 = vmatprep.subr.bf16.mxu0 0
      %1576 = vmatpush1.bf16.msra.mxu0 0
      %1577 = vmatprep.subr.bf16.mxu0 0
      %1578 = vmatpush1.bf16.msra.mxu0 0
      %1579 = vmatprep.subr.bf16.mxu0 0
      %1580 = vmatpush1.bf16.msra.mxu0 0
      %1581 = vmatprep.subr.bf16.mxu0 0
      %1582 = vmatpush1.bf16.msra.mxu0 0
      %1583 = vmatprep.mubr.bf16.mxu0 0
      %1584 = vmatmul.mubr.bf16.gmra.mrb[0].mxu0 %v1045
      %v1585 = vpop.f32.mrb[0].mxu0
      %v1586 = vadd.f32 %v1522, %v1585
      %v1587 = vpop.f32.mrb[0].mxu0
      %v1588 = vpop.f32.mrb[0].mxu0
      %v1589 = vpop.f32.mrb[0].mxu0
      %1590 = vdwg.mxu0
      %v1595 = vunpack.c.l.b16 %v1499
      %v1596 = vunpack.c.l.b16 %v1500
      %v1597 = vunpack.c.l.b16 %v1501
      %v1598 = vunpack.c.l.b16 %v1502
      %v1599 = vpack.c.b16 %v1596, %v1595
      %v1600 = vpack.c.b16 %v1598, %v1597
      %1603 = vmatprep.subr.bf16.mxu0 0
      %1604 = vmatpush1.bf16.msra.mxu0 %v1599
      %1605 = vmatprep.subr.bf16.mxu0 0
      %1606 = vmatpush1.bf16.msra.mxu0 %v1600
      %1607 = vmatprep.subr.bf16.mxu0 0
      %1608 = vmatpush1.bf16.msra.mxu0 0
      %1609 = vmatprep.subr.bf16.mxu0 0
      %1610 = vmatpush1.bf16.msra.mxu0 0
      %1611 = vmatprep.subr.bf16.mxu0 0
      %1612 = vmatpush1.bf16.msra.mxu0 0
      %1613 = vmatprep.subr.bf16.mxu0 0
      %1614 = vmatpush1.bf16.msra.mxu0 0
      %1615 = vmatprep.subr.bf16.mxu0 0
      %1616 = vmatpush1.bf16.msra.mxu0 0
      %1617 = vmatprep.subr.bf16.mxu0 0
      %1618 = vmatpush1.bf16.msra.mxu0 0
      %1619 = vmatprep.subr.bf16.mxu0 0
      %1620 = vmatpush1.bf16.msra.mxu0 0
      %1621 = vmatprep.subr.bf16.mxu0 0
      %1622 = vmatpush1.bf16.msra.mxu0 0
      %1623 = vmatprep.subr.bf16.mxu0 0
      %1624 = vmatpush1.bf16.msra.mxu0 0
      %1625 = vmatprep.subr.bf16.mxu0 0
      %1626 = vmatpush1.bf16.msra.mxu0 0
      %1627 = vmatprep.subr.bf16.mxu0 0
      %1628 = vmatpush1.bf16.msra.mxu0 0
      %1629 = vmatprep.subr.bf16.mxu0 0
      %1630 = vmatpush1.bf16.msra.mxu0 0
      %1631 = vmatprep.subr.bf16.mxu0 0
      %1632 = vmatpush1.bf16.msra.mxu0 0
      %1633 = vmatprep.subr.bf16.mxu0 0
      %1634 = vmatpush1.bf16.msra.mxu0 0
      %1635 = vmatprep.mubr.bf16.mxu0 0
      %1636 = vmatmul.mubr.bf16.gmra.mrb[0].mxu0 %v1045
      %v1637 = vpop.f32.mrb[0].mxu0
      %v1638 = vadd.f32 %v1526, %v1637
      %v1639 = vpop.f32.mrb[0].mxu0
      %v1640 = vpop.f32.mrb[0].mxu0
      %v1641 = vpop.f32.mrb[0].mxu0
      %1642 = vdwg.mxu0
      %v1647 = vunpack.c.l.b16 %v1503
      %v1648 = vunpack.c.l.b16 %v1504
      %v1649 = vunpack.c.l.b16 %v1505
      %v1650 = vunpack.c.l.b16 %v1506
      %v1651 = vpack.c.b16 %v1648, %v1647
      %v1652 = vpack.c.b16 %v1650, %v1649
      %1655 = vmatprep.subr.bf16.mxu0 0
      %1656 = vmatpush1.bf16.msra.mxu0 %v1651
      %1657 = vmatprep.subr.bf16.mxu0 0
      %1658 = vmatpush1.bf16.msra.mxu0 %v1652
      %1659 = vmatprep.subr.bf16.mxu0 0
      %1660 = vmatpush1.bf16.msra.mxu0 0
      %1661 = vmatprep.subr.bf16.mxu0 0
      %1662 = vmatpush1.bf16.msra.mxu0 0
      %1663 = vmatprep.subr.bf16.mxu0 0
      %1664 = vmatpush1.bf16.msra.mxu0 0
      %1665 = vmatprep.subr.bf16.mxu0 0
      %1666 = vmatpush1.bf16.msra.mxu0 0
      %1667 = vmatprep.subr.bf16.mxu0 0
      %1668 = vmatpush1.bf16.msra.mxu0 0
      %1669 = vmatprep.subr.bf16.mxu0 0
      %1670 = vmatpush1.bf16.msra.mxu0 0
      %1671 = vmatprep.subr.bf16.mxu0 0
      %1672 = vmatpush1.bf16.msra.mxu0 0
      %1673 = vmatprep.subr.bf16.mxu0 0
      %1674 = vmatpush1.bf16.msra.mxu0 0
      %1675 = vmatprep.subr.bf16.mxu0 0
      %1676 = vmatpush1.bf16.msra.mxu0 0
      %1677 = vmatprep.subr.bf16.mxu0 0
      %1678 = vmatpush1.bf16.msra.mxu0 0
      %1679 = vmatprep.subr.bf16.mxu0 0
      %1680 = vmatpush1.bf16.msra.mxu0 0
      %1681 = vmatprep.subr.bf16.mxu0 0
      %1682 = vmatpush1.bf16.msra.mxu0 0
      %1683 = vmatprep.subr.bf16.mxu0 0
      %1684 = vmatpush1.bf16.msra.mxu0 0
      %1685 = vmatprep.subr.bf16.mxu0 0
      %1686 = vmatpush1.bf16.msra.mxu0 0
      %1687 = vmatprep.mubr.bf16.mxu0 0
      %1688 = vmatmul.mubr.bf16.gmra.mrb[0].mxu0 %v1045
      %v1689 = vpop.f32.mrb[0].mxu0
      %v1690 = vadd.f32 %v1530, %v1689
      %v1691 = vpop.f32.mrb[0].mxu0
      %v1692 = vpop.f32.mrb[0].mxu0
      %v1693 = vpop.f32.mrb[0].mxu0
      %1694 = vdwg.mxu0
      %v1699 = vunpack.c.l.b16 %v1507
      %v1700 = vunpack.c.l.b16 %v1508
      %v1701 = vunpack.c.l.b16 %v1509
      %v1702 = vunpack.c.l.b16 %v1510
      %v1703 = vpack.c.b16 %v1700, %v1699
      %v1704 = vpack.c.b16 %v1702, %v1701
      %1707 = vmatprep.subr.bf16.mxu0 0
      %1708 = vmatpush1.bf16.msra.mxu0 %v1703
      %1709 = vmatprep.subr.bf16.mxu0 0
      %1710 = vmatpush1.bf16.msra.mxu0 %v1704
      %1711 = vmatprep.subr.bf16.mxu0 0
      %1712 = vmatpush1.bf16.msra.mxu0 0
      %1713 = vmatprep.subr.bf16.mxu0 0
      %1714 = vmatpush1.bf16.msra.mxu0 0
      %1715 = vmatprep.subr.bf16.mxu0 0
      %1716 = vmatpush1.bf16.msra.mxu0 0
      %1717 = vmatprep.subr.bf16.mxu0 0
      %1718 = vmatpush1.bf16.msra.mxu0 0
      %1719 = vmatprep.subr.bf16.mxu0 0
      %1720 = vmatpush1.bf16.msra.mxu0 0
      %1721 = vmatprep.subr.bf16.mxu0 0
      %1722 = vmatpush1.bf16.msra.mxu0 0
      %1723 = vmatprep.subr.bf16.mxu0 0
      %1724 = vmatpush1.bf16.msra.mxu0 0
      %1725 = vmatprep.subr.bf16.mxu0 0
      %1726 = vmatpush1.bf16.msra.mxu0 0
      %1727 = vmatprep.subr.bf16.mxu0 0
      %1728 = vmatpush1.bf16.msra.mxu0 0
      %1729 = vmatprep.subr.bf16.mxu0 0
      %1730 = vmatpush1.bf16.msra.mxu0 0
      %1731 = vmatprep.subr.bf16.mxu0 0
      %1732 = vmatpush1.bf16.msra.mxu0 0
      %1733 = vmatprep.subr.bf16.mxu0 0
      %1734 = vmatpush1.bf16.msra.mxu0 0
      %1735 = vmatprep.subr.bf16.mxu0 0
      %1736 = vmatpush1.bf16.msra.mxu0 0
      %1737 = vmatprep.subr.bf16.mxu0 0
      %1738 = vmatpush1.bf16.msra.mxu0 0
      %1739 = vmatprep.mubr.bf16.mxu0 0
      %1740 = vmatmul.mubr.bf16.gmra.mrb[0].mxu0 %v1045
      %v1741 = vpop.f32.mrb[0].mxu0
      %v1742 = vadd.f32 %v1534, %v1741
      %v1743 = vpop.f32.mrb[0].mxu0
      %v1744 = vpop.f32.mrb[0].mxu0
      %v1745 = vpop.f32.mrb[0].mxu0
      %1746 = vdwg.mxu0
      %v1747 = vpack.c.bf16 %v1082, %v1082
      %v1748 = vpack.c.bf16 %v1134, %v1134
      %v1749 = vpack.c.bf16 %v1186, %v1186
      %v1750 = vpack.c.bf16 %v1238, %v1238
      %v1751 = vpack.c.bf16 %v1334, %v1334
      %v1752 = vpack.c.bf16 %v1386, %v1386
      %v1753 = vpack.c.bf16 %v1438, %v1438
      %v1754 = vpack.c.bf16 %v1490, %v1490
      %vm1755 = vcmask 64512
      %v1757 = vsel %vm1755, %v1747, 0
      %v1760 = vsel %vm1755, %v1751, 0
      %1762 = vmatprep.subr.bf16.mxu0 0
      %1763 = vmatpush1.bf16.xpose.msra.mxu0 %v1760
      %1764 = vmatprep.subr.bf16.mxu0 0
      %1765 = vmatpush1.bf16.xpose.msra.mxu0 0
      %1766 = vmatprep.subr.bf16.mxu0 0
      %1767 = vmatpush1.bf16.xpose.msra.mxu0 0
      %1768 = vmatprep.subr.bf16.mxu0 0
      %1769 = vmatpush1.bf16.xpose.msra.mxu0 0
      %1770 = vmatprep.subr.bf16.mxu0 0
      %1771 = vmatpush1.bf16.xpose.msra.mxu0 0
      %1772 = vmatprep.subr.bf16.mxu0 0
      %1773 = vmatpush1.bf16.xpose.msra.mxu0 0
      %1774 = vmatprep.subr.bf16.mxu0 0
      %1775 = vmatpush1.bf16.xpose.msra.mxu0 0
      %1776 = vmatprep.subr.bf16.mxu0 0
      %1777 = vmatpush1.bf16.xpose.msra.mxu0 0
      %1778 = vmatprep.subr.bf16.mxu0 0
      %1779 = vmatpush1.bf16.xpose.msra.mxu0 0
      %1780 = vmatprep.subr.bf16.mxu0 0
      %1781 = vmatpush1.bf16.xpose.msra.mxu0 0
      %1782 = vmatprep.subr.bf16.mxu0 0
      %1783 = vmatpush1.bf16.xpose.msra.mxu0 0
      %1784 = vmatprep.subr.bf16.mxu0 0
      %1785 = vmatpush1.bf16.xpose.msra.mxu0 0
      %1786 = vmatprep.subr.bf16.mxu0 0
      %1787 = vmatpush1.bf16.xpose.msra.mxu0 0
      %1788 = vmatprep.subr.bf16.mxu0 0
      %1789 = vmatpush1.bf16.xpose.msra.mxu0 0
      %1790 = vmatprep.subr.bf16.mxu0 0
      %1791 = vmatpush1.bf16.xpose.msra.mxu0 0
      %1792 = vmatprep.subr.bf16.mxu0 0
      %1793 = vmatpush1.bf16.xpose.msra.mxu0 0
      %1794 = vmatprep.mubr.bf16.mxu0 0
      %1795 = vmatmul.mubr.bf16.gmra.mrb[0].mxu0 %v1757
      %v1796 = vpop.f32.mrb[0].mxu0
      %v1797 = vadd.f32 %v955, %v1796
      %v1798 = vpop.f32.mrb[0].mxu0
      %v1799 = vpop.f32.mrb[0].mxu0
      %v1800 = vpop.f32.mrb[0].mxu0
      %1801 = vdwg.mxu0
      %v1803 = vsel %vm1755, %v1748, 0
      %v1806 = vsel %vm1755, %v1752, 0
      %1808 = vmatprep.subr.bf16.mxu0 0
      %1809 = vmatpush1.bf16.xpose.msra.mxu0 %v1806
      %1810 = vmatprep.subr.bf16.mxu0 0
      %1811 = vmatpush1.bf16.xpose.msra.mxu0 0
      %1812 = vmatprep.subr.bf16.mxu0 0
      %1813 = vmatpush1.bf16.xpose.msra.mxu0 0
      %1814 = vmatprep.subr.bf16.mxu0 0
      %1815 = vmatpush1.bf16.xpose.msra.mxu0 0
      %1816 = vmatprep.subr.bf16.mxu0 0
      %1817 = vmatpush1.bf16.xpose.msra.mxu0 0
      %1818 = vmatprep.subr.bf16.mxu0 0
      %1819 = vmatpush1.bf16.xpose.msra.mxu0 0
      %1820 = vmatprep.subr.bf16.mxu0 0
      %1821 = vmatpush1.bf16.xpose.msra.mxu0 0
      %1822 = vmatprep.subr.bf16.mxu0 0
      %1823 = vmatpush1.bf16.xpose.msra.mxu0 0
      %1824 = vmatprep.subr.bf16.mxu0 0
      %1825 = vmatpush1.bf16.xpose.msra.mxu0 0
      %1826 = vmatprep.subr.bf16.mxu0 0
      %1827 = vmatpush1.bf16.xpose.msra.mxu0 0
      %1828 = vmatprep.subr.bf16.mxu0 0
      %1829 = vmatpush1.bf16.xpose.msra.mxu0 0
      %1830 = vmatprep.subr.bf16.mxu0 0
      %1831 = vmatpush1.bf16.xpose.msra.mxu0 0
      %1832 = vmatprep.subr.bf16.mxu0 0
      %1833 = vmatpush1.bf16.xpose.msra.mxu0 0
      %1834 = vmatprep.subr.bf16.mxu0 0
      %1835 = vmatpush1.bf16.xpose.msra.mxu0 0
      %1836 = vmatprep.subr.bf16.mxu0 0
      %1837 = vmatpush1.bf16.xpose.msra.mxu0 0
      %1838 = vmatprep.subr.bf16.mxu0 0
      %1839 = vmatpush1.bf16.xpose.msra.mxu0 0
      %1840 = vmatprep.mubr.bf16.mxu0 0
      %1841 = vmatmul.mubr.bf16.gmra.mrb[0].mxu0 %v1803
      %v1842 = vpop.f32.mrb[0].mxu0
      %v1843 = vadd.f32 %v955, %v1842
      %v1844 = vpop.f32.mrb[0].mxu0
      %v1845 = vpop.f32.mrb[0].mxu0
      %v1846 = vpop.f32.mrb[0].mxu0
      %1847 = vdwg.mxu0
      %v1849 = vsel %vm1755, %v1749, 0
      %v1852 = vsel %vm1755, %v1753, 0
      %1854 = vmatprep.subr.bf16.mxu0 0
      %1855 = vmatpush1.bf16.xpose.msra.mxu0 %v1852
      %1856 = vmatprep.subr.bf16.mxu0 0
      %1857 = vmatpush1.bf16.xpose.msra.mxu0 0
      %1858 = vmatprep.subr.bf16.mxu0 0
      %1859 = vmatpush1.bf16.xpose.msra.mxu0 0
      %1860 = vmatprep.subr.bf16.mxu0 0
      %1861 = vmatpush1.bf16.xpose.msra.mxu0 0
      %1862 = vmatprep.subr.bf16.mxu0 0
      %1863 = vmatpush1.bf16.xpose.msra.mxu0 0
      %1864 = vmatprep.subr.bf16.mxu0 0
      %1865 = vmatpush1.bf16.xpose.msra.mxu0 0
      %1866 = vmatprep.subr.bf16.mxu0 0
      %1867 = vmatpush1.bf16.xpose.msra.mxu0 0
      %1868 = vmatprep.subr.bf16.mxu0 0
      %1869 = vmatpush1.bf16.xpose.msra.mxu0 0
      %1870 = vmatprep.subr.bf16.mxu0 0
      %1871 = vmatpush1.bf16.xpose.msra.mxu0 0
      %1872 = vmatprep.subr.bf16.mxu0 0
      %1873 = vmatpush1.bf16.xpose.msra.mxu0 0
      %1874 = vmatprep.subr.bf16.mxu0 0
      %1875 = vmatpush1.bf16.xpose.msra.mxu0 0
      %1876 = vmatprep.subr.bf16.mxu0 0
      %1877 = vmatpush1.bf16.xpose.msra.mxu0 0
      %1878 = vmatprep.subr.bf16.mxu0 0
      %1879 = vmatpush1.bf16.xpose.msra.mxu0 0
      %1880 = vmatprep.subr.bf16.mxu0 0
      %1881 = vmatpush1.bf16.xpose.msra.mxu0 0
      %1882 = vmatprep.subr.bf16.mxu0 0
      %1883 = vmatpush1.bf16.xpose.msra.mxu0 0
      %1884 = vmatprep.subr.bf16.mxu0 0
      %1885 = vmatpush1.bf16.xpose.msra.mxu0 0
      %1886 = vmatprep.mubr.bf16.mxu0 0
      %1887 = vmatmul.mubr.bf16.gmra.mrb[0].mxu0 %v1849
      %v1888 = vpop.f32.mrb[0].mxu0
      %v1889 = vadd.f32 %v955, %v1888
      %v1890 = vpop.f32.mrb[0].mxu0
      %v1891 = vpop.f32.mrb[0].mxu0
      %v1892 = vpop.f32.mrb[0].mxu0
      %1893 = vdwg.mxu0
      %v1895 = vsel %vm1755, %v1750, 0
      %v1898 = vsel %vm1755, %v1754, 0
      %1900 = vmatprep.subr.bf16.mxu0 0
      %1901 = vmatpush1.bf16.xpose.msra.mxu0 %v1898
      %1902 = vmatprep.subr.bf16.mxu0 0
      %1903 = vmatpush1.bf16.xpose.msra.mxu0 0
      %1904 = vmatprep.subr.bf16.mxu0 0
      %1905 = vmatpush1.bf16.xpose.msra.mxu0 0
      %1906 = vmatprep.subr.bf16.mxu0 0
      %1907 = vmatpush1.bf16.xpose.msra.mxu0 0
      %1908 = vmatprep.subr.bf16.mxu0 0
      %1909 = vmatpush1.bf16.xpose.msra.mxu0 0
      %1910 = vmatprep.subr.bf16.mxu0 0
      %1911 = vmatpush1.bf16.xpose.msra.mxu0 0
      %1912 = vmatprep.subr.bf16.mxu0 0
      %1913 = vmatpush1.bf16.xpose.msra.mxu0 0
      %1914 = vmatprep.subr.bf16.mxu0 0
      %1915 = vmatpush1.bf16.xpose.msra.mxu0 0
      %1916 = vmatprep.subr.bf16.mxu0 0
      %1917 = vmatpush1.bf16.xpose.msra.mxu0 0
      %1918 = vmatprep.subr.bf16.mxu0 0
      %1919 = vmatpush1.bf16.xpose.msra.mxu0 0
      %1920 = vmatprep.subr.bf16.mxu0 0
      %1921 = vmatpush1.bf16.xpose.msra.mxu0 0
      %1922 = vmatprep.subr.bf16.mxu0 0
      %1923 = vmatpush1.bf16.xpose.msra.mxu0 0
      %1924 = vmatprep.subr.bf16.mxu0 0
      %1925 = vmatpush1.bf16.xpose.msra.mxu0 0
      %1926 = vmatprep.subr.bf16.mxu0 0
      %1927 = vmatpush1.bf16.xpose.msra.mxu0 0
      %1928 = vmatprep.subr.bf16.mxu0 0
      %1929 = vmatpush1.bf16.xpose.msra.mxu0 0
      %1930 = vmatprep.subr.bf16.mxu0 0
      %1931 = vmatpush1.bf16.xpose.msra.mxu0 0
      %1932 = vmatprep.mubr.bf16.mxu0 0
      %1933 = vmatmul.mubr.bf16.gmra.mrb[0].mxu0 %v1895
      %v1934 = vpop.f32.mrb[0].mxu0
      %v1935 = vadd.f32 %v955, %v1934
      %v1936 = vpop.f32.mrb[0].mxu0
      %v1937 = vpop.f32.mrb[0].mxu0
      %v1938 = vpop.f32.mrb[0].mxu0
      %1939 = vdwg.mxu0
      %v1940 = vsel %vm1755, %v1797, -inf
      %1941 = vmax.xlane.f32.xlu0 %v1940
      %v1942 = vpop.xlane.xlu0 %1941
      %v1943 = vsel %vm1755, %v1843, -inf
      %1944 = vmax.xlane.f32.xlu0 %v1943
      %v1945 = vpop.xlane.xlu0 %1944
      %v1946 = vsel %vm1755, %v1889, -inf
      %1947 = vmax.xlane.f32.xlu0 %v1946
      %v1948 = vpop.xlane.xlu0 %1947
      %v1949 = vsel %vm1755, %v1935, -inf
      %1950 = vmax.xlane.f32.xlu0 %v1949
      %v1951 = vpop.xlane.xlu0 %1950
      %v1952 = vsub.f32 %v1797, %v1942
      %v1953 = vsub.f32 %v1843, %v1945
      %v1954 = vsub.f32 %v1889, %v1948
      %v1955 = vsub.f32 %v1935, %v1951
      %v1956 = vmul.f32 %v1952, 1.442695
      %v1957 = vpow.pop %v1956
      %v1958 = vmul.f32 %v1953, 1.442695
      %v1959 = vpow.pop %v1958
      %v1960 = vmul.f32 %v1954, 1.442695
      %v1961 = vpow.pop %v1960
      %v1962 = vmul.f32 %v1955, 1.442695
      %v1963 = vpow.pop %v1962
      %v1964 = vsel %vm1755, %v1957, 0.0
      %1965 = vadd.xlane.f32.xlu0 %v1964
      %v1966 = vpop.xlane.xlu0 %1965
      %v1967 = vsel %vm1755, %v1959, 0.0
      %1968 = vadd.xlane.f32.xlu0 %v1967
      %v1969 = vpop.xlane.xlu0 %1968
      %v1970 = vsel %vm1755, %v1961, 0.0
      %1971 = vadd.xlane.f32.xlu0 %v1970
      %v1972 = vpop.xlane.xlu0 %1971
      %v1973 = vsel %vm1755, %v1963, 0.0
      %1974 = vadd.xlane.f32.xlu0 %v1973
      %v1975 = vpop.xlane.xlu0 %1974
      %v1976 = vrcp.pop %v1966
      %v1977 = vrcp.pop %v1969
      %v1978 = vrcp.pop %v1972
      %v1979 = vrcp.pop %v1975
      %v1980 = vmul.f32 %v1957, %v1976
      %v1981 = vmul.f32 %v1959, %v1977
      %v1982 = vmul.f32 %v1961, %v1978
      %v1983 = vmul.f32 %v1963, %v1979
      %v1984 = vpack.c.bf16 %v1980, %v1980
      %v1985 = vpack.c.bf16 %v1981, %v1981
      %v1986 = vpack.c.bf16 %v1982, %v1982
      %v1987 = vpack.c.bf16 %v1983, %v1983
      %v1988 = vpack.c.bf16 %v1586, %v1586
      %v1989 = vpack.c.bf16 %v1638, %v1638
      %v1990 = vpack.c.bf16 %v1690, %v1690
      %v1991 = vpack.c.bf16 %v1742, %v1742
      %v1993 = vsel %vm1755, %v1984, 0
      %vm1995 = vcmask 1043456
      %v1997 = vsel %vm1995, %v1988, 0
      %1999 = vmatprep.subr.bf16.mxu0 0
      %2000 = vmatpush1.bf16.msra.mxu0 %v1997
      %2001 = vmatprep.subr.bf16.mxu0 0
      %2002 = vmatpush1.bf16.msra.mxu0 0
      %2003 = vmatprep.subr.bf16.mxu0 0
      %2004 = vmatpush1.bf16.msra.mxu0 0
      %2005 = vmatprep.subr.bf16.mxu0 0
      %2006 = vmatpush1.bf16.msra.mxu0 0
      %2007 = vmatprep.subr.bf16.mxu0 0
      %2008 = vmatpush1.bf16.msra.mxu0 0
      %2009 = vmatprep.subr.bf16.mxu0 0
      %2010 = vmatpush1.bf16.msra.mxu0 0
      %2011 = vmatprep.subr.bf16.mxu0 0
      %2012 = vmatpush1.bf16.msra.mxu0 0
      %2013 = vmatprep.subr.bf16.mxu0 0
      %2014 = vmatpush1.bf16.msra.mxu0 0
      %2015 = vmatprep.subr.bf16.mxu0 0
      %2016 = vmatpush1.bf16.msra.mxu0 0
      %2017 = vmatprep.subr.bf16.mxu0 0
      %2018 = vmatpush1.bf16.msra.mxu0 0
      %2019 = vmatprep.subr.bf16.mxu0 0
      %2020 = vmatpush1.bf16.msra.mxu0 0
      %2021 = vmatprep.subr.bf16.mxu0 0
      %2022 = vmatpush1.bf16.msra.mxu0 0
      %2023 = vmatprep.subr.bf16.mxu0 0
      %2024 = vmatpush1.bf16.msra.mxu0 0
      %2025 = vmatprep.subr.bf16.mxu0 0
      %2026 = vmatpush1.bf16.msra.mxu0 0
      %2027 = vmatprep.subr.bf16.mxu0 0
      %2028 = vmatpush1.bf16.msra.mxu0 0
      %2029 = vmatprep.subr.bf16.mxu0 0
      %2030 = vmatpush1.bf16.msra.mxu0 0
      %2031 = vmatprep.mubr.bf16.mxu0 0
      %2032 = vmatmul.mubr.bf16.gmra.mrb[0].mxu0 %v1993
      %v2033 = vpop.f32.mrb[0].mxu0
      %v2034 = vadd.f32 0.0, %v2033
      %v2035 = vpop.f32.mrb[0].mxu0
      %v2036 = vpop.f32.mrb[0].mxu0
      %v2037 = vpop.f32.mrb[0].mxu0
      %2038 = vdwg.mxu0
      %v2040 = vsel %vm1755, %v1985, 0
      %v2043 = vsel %vm1995, %v1989, 0
      %2045 = vmatprep.subr.bf16.mxu0 0
      %2046 = vmatpush1.bf16.msra.mxu0 %v2043
      %2047 = vmatprep.subr.bf16.mxu0 0
      %2048 = vmatpush1.bf16.msra.mxu0 0
      %2049 = vmatprep.subr.bf16.mxu0 0
      %2050 = vmatpush1.bf16.msra.mxu0 0
      %2051 = vmatprep.subr.bf16.mxu0 0
      %2052 = vmatpush1.bf16.msra.mxu0 0
      %2053 = vmatprep.subr.bf16.mxu0 0
      %2054 = vmatpush1.bf16.msra.mxu0 0
      %2055 = vmatprep.subr.bf16.mxu0 0
      %2056 = vmatpush1.bf16.msra.mxu0 0
      %2057 = vmatprep.subr.bf16.mxu0 0
      %2058 = vmatpush1.bf16.msra.mxu0 0
      %2059 = vmatprep.subr.bf16.mxu0 0
      %2060 = vmatpush1.bf16.msra.mxu0 0
      %2061 = vmatprep.subr.bf16.mxu0 0
      %2062 = vmatpush1.bf16.msra.mxu0 0
      %2063 = vmatprep.subr.bf16.mxu0 0
      %2064 = vmatpush1.bf16.msra.mxu0 0
      %2065 = vmatprep.subr.bf16.mxu0 0
      %2066 = vmatpush1.bf16.msra.mxu0 0
      %2067 = vmatprep.subr.bf16.mxu0 0
      %2068 = vmatpush1.bf16.msra.mxu0 0
      %2069 = vmatprep.subr.bf16.mxu0 0
      %2070 = vmatpush1.bf16.msra.mxu0 0
      %2071 = vmatprep.subr.bf16.mxu0 0
      %2072 = vmatpush1.bf16.msra.mxu0 0
      %2073 = vmatprep.subr.bf16.mxu0 0
      %2074 = vmatpush1.bf16.msra.mxu0 0
      %2075 = vmatprep.subr.bf16.mxu0 0
      %2076 = vmatpush1.bf16.msra.mxu0 0
      %2077 = vmatprep.mubr.bf16.mxu0 0
      %2078 = vmatmul.mubr.bf16.gmra.mrb[0].mxu0 %v2040
      %v2079 = vpop.f32.mrb[0].mxu0
      %v2080 = vadd.f32 0.0, %v2079
      %v2081 = vpop.f32.mrb[0].mxu0
      %v2082 = vpop.f32.mrb[0].mxu0
      %v2083 = vpop.f32.mrb[0].mxu0
      %2084 = vdwg.mxu0
      %v2086 = vsel %vm1755, %v1986, 0
      %v2089 = vsel %vm1995, %v1990, 0
      %2091 = vmatprep.subr.bf16.mxu0 0
      %2092 = vmatpush1.bf16.msra.mxu0 %v2089
      %2093 = vmatprep.subr.bf16.mxu0 0
      %2094 = vmatpush1.bf16.msra.mxu0 0
      %2095 = vmatprep.subr.bf16.mxu0 0
      %2096 = vmatpush1.bf16.msra.mxu0 0
      %2097 = vmatprep.subr.bf16.mxu0 0
      %2098 = vmatpush1.bf16.msra.mxu0 0
      %2099 = vmatprep.subr.bf16.mxu0 0
      %2100 = vmatpush1.bf16.msra.mxu0 0
      %2101 = vmatprep.subr.bf16.mxu0 0
      %2102 = vmatpush1.bf16.msra.mxu0 0
      %2103 = vmatprep.subr.bf16.mxu0 0
      %2104 = vmatpush1.bf16.msra.mxu0 0
      %2105 = vmatprep.subr.bf16.mxu0 0
      %2106 = vmatpush1.bf16.msra.mxu0 0
      %2107 = vmatprep.subr.bf16.mxu0 0
      %2108 = vmatpush1.bf16.msra.mxu0 0
      %2109 = vmatprep.subr.bf16.mxu0 0
      %2110 = vmatpush1.bf16.msra.mxu0 0
      %2111 = vmatprep.subr.bf16.mxu0 0
      %2112 = vmatpush1.bf16.msra.mxu0 0
      %2113 = vmatprep.subr.bf16.mxu0 0
      %2114 = vmatpush1.bf16.msra.mxu0 0
      %2115 = vmatprep.subr.bf16.mxu0 0
      %2116 = vmatpush1.bf16.msra.mxu0 0
      %2117 = vmatprep.subr.bf16.mxu0 0
      %2118 = vmatpush1.bf16.msra.mxu0 0
      %2119 = vmatprep.subr.bf16.mxu0 0
      %2120 = vmatpush1.bf16.msra.mxu0 0
      %2121 = vmatprep.subr.bf16.mxu0 0
      %2122 = vmatpush1.bf16.msra.mxu0 0
      %2123 = vmatprep.mubr.bf16.mxu0 0
      %2124 = vmatmul.mubr.bf16.gmra.mrb[0].mxu0 %v2086
      %v2125 = vpop.f32.mrb[0].mxu0
      %v2126 = vadd.f32 0.0, %v2125
      %v2127 = vpop.f32.mrb[0].mxu0
      %v2128 = vpop.f32.mrb[0].mxu0
      %v2129 = vpop.f32.mrb[0].mxu0
      %2130 = vdwg.mxu0
      %v2132 = vsel %vm1755, %v1987, 0
      %v2135 = vsel %vm1995, %v1991, 0
      %2137 = vmatprep.subr.bf16.mxu0 0
      %2138 = vmatpush1.bf16.msra.mxu0 %v2135
      %2139 = vmatprep.subr.bf16.mxu0 0
      %2140 = vmatpush1.bf16.msra.mxu0 0
      %2141 = vmatprep.subr.bf16.mxu0 0
      %2142 = vmatpush1.bf16.msra.mxu0 0
      %2143 = vmatprep.subr.bf16.mxu0 0
      %2144 = vmatpush1.bf16.msra.mxu0 0
      %2145 = vmatprep.subr.bf16.mxu0 0
      %2146 = vmatpush1.bf16.msra.mxu0 0
      %2147 = vmatprep.subr.bf16.mxu0 0
      %2148 = vmatpush1.bf16.msra.mxu0 0
      %2149 = vmatprep.subr.bf16.mxu0 0
      %2150 = vmatpush1.bf16.msra.mxu0 0
      %2151 = vmatprep.subr.bf16.mxu0 0
      %2152 = vmatpush1.bf16.msra.mxu0 0
      %2153 = vmatprep.subr.bf16.mxu0 0
      %2154 = vmatpush1.bf16.msra.mxu0 0
      %2155 = vmatprep.subr.bf16.mxu0 0
      %2156 = vmatpush1.bf16.msra.mxu0 0
      %2157 = vmatprep.subr.bf16.mxu0 0
      %2158 = vmatpush1.bf16.msra.mxu0 0
      %2159 = vmatprep.subr.bf16.mxu0 0
      %2160 = vmatpush1.bf16.msra.mxu0 0
      %2161 = vmatprep.subr.bf16.mxu0 0
      %2162 = vmatpush1.bf16.msra.mxu0 0
      %2163 = vmatprep.subr.bf16.mxu0 0
      %2164 = vmatpush1.bf16.msra.mxu0 0
      %2165 = vmatprep.subr.bf16.mxu0 0
      %2166 = vmatpush1.bf16.msra.mxu0 0
      %2167 = vmatprep.subr.bf16.mxu0 0
      %2168 = vmatpush1.bf16.msra.mxu0 0
      %2169 = vmatprep.mubr.bf16.mxu0 0
      %2170 = vmatmul.mubr.bf16.gmra.mrb[0].mxu0 %v2132
      %v2171 = vpop.f32.mrb[0].mxu0
      %v2172 = vadd.f32 0.0, %v2171
      %v2173 = vpop.f32.mrb[0].mxu0
      %v2174 = vpop.f32.mrb[0].mxu0
      %v2175 = vpop.f32.mrb[0].mxu0
      %2176 = vdwg.mxu0
      %v2177 = vld [vmem:[%s12] sm:$0xf]
      %v2178 = vld [vmem:[%s12 + $0x4] sm:$0xf]
      %v2179 = vld [vmem:[%s12 + $0x8] sm:$0xf]
      %v2180 = vld [vmem:[%s12 + $0xc] sm:$0xf]
      %v2181 = vpack.c.bf16 %v2034, %v2034
      %v2182 = vpack.c.bf16 %v2080, %v2080
      %v2183 = vpack.c.bf16 %v2126, %v2126
      %v2184 = vpack.c.bf16 %v2172, %v2172
      %v2186 = vsel %vm1755, %v2181, 0
      %v2189 = vsel %vm1995, %v2177, 0
      %2191 = vmatprep.subr.bf16.mxu0 0
      %2192 = vmatpush1.bf16.msra.mxu0 %v2189
      %2193 = vmatprep.subr.bf16.mxu0 0
      %2194 = vmatpush1.bf16.msra.mxu0 0
      %2195 = vmatprep.subr.bf16.mxu0 0
      %2196 = vmatpush1.bf16.msra.mxu0 0
      %2197 = vmatprep.subr.bf16.mxu0 0
      %2198 = vmatpush1.bf16.msra.mxu0 0
      %2199 = vmatprep.subr.bf16.mxu0 0
      %2200 = vmatpush1.bf16.msra.mxu0 0
      %2201 = vmatprep.subr.bf16.mxu0 0
      %2202 = vmatpush1.bf16.msra.mxu0 0
      %2203 = vmatprep.subr.bf16.mxu0 0
      %2204 = vmatpush1.bf16.msra.mxu0 0
      %2205 = vmatprep.subr.bf16.mxu0 0
      %2206 = vmatpush1.bf16.msra.mxu0 0
      %2207 = vmatprep.subr.bf16.mxu0 0
      %2208 = vmatpush1.bf16.msra.mxu0 0
      %2209 = vmatprep.subr.bf16.mxu0 0
      %2210 = vmatpush1.bf16.msra.mxu0 0
      %2211 = vmatprep.subr.bf16.mxu0 0
      %2212 = vmatpush1.bf16.msra.mxu0 0
      %2213 = vmatprep.subr.bf16.mxu0 0
      %2214 = vmatpush1.bf16.msra.mxu0 0
      %2215 = vmatprep.subr.bf16.mxu0 0
      %2216 = vmatpush1.bf16.msra.mxu0 0
      %2217 = vmatprep.subr.bf16.mxu0 0
      %2218 = vmatpush1.bf16.msra.mxu0 0
      %2219 = vmatprep.subr.bf16.mxu0 0
      %2220 = vmatpush1.bf16.msra.mxu0 0
      %2221 = vmatprep.subr.bf16.mxu0 0
      %2222 = vmatpush1.bf16.msra.mxu0 0
      %2223 = vmatprep.mubr.bf16.mxu0 0
      %2224 = vmatmul.mubr.bf16.gmra.mrb[0].mxu0 %v2186
      %v2225 = vpop.f32.mrb[0].mxu0
      %v2226 = vadd.f32 0.0, %v2225
      %v2227 = vpop.f32.mrb[0].mxu0
      %v2228 = vpop.f32.mrb[0].mxu0
      %v2229 = vpop.f32.mrb[0].mxu0
      %2230 = vdwg.mxu0
      %v2232 = vsel %vm1755, %v2182, 0
      %v2235 = vsel %vm1995, %v2178, 0
      %2237 = vmatprep.subr.bf16.mxu0 0
      %2238 = vmatpush1.bf16.msra.mxu0 %v2235
      %2239 = vmatprep.subr.bf16.mxu0 0
      %2240 = vmatpush1.bf16.msra.mxu0 0
      %2241 = vmatprep.subr.bf16.mxu0 0
      %2242 = vmatpush1.bf16.msra.mxu0 0
      %2243 = vmatprep.subr.bf16.mxu0 0
      %2244 = vmatpush1.bf16.msra.mxu0 0
      %2245 = vmatprep.subr.bf16.mxu0 0
      %2246 = vmatpush1.bf16.msra.mxu0 0
      %2247 = vmatprep.subr.bf16.mxu0 0
      %2248 = vmatpush1.bf16.msra.mxu0 0
      %2249 = vmatprep.subr.bf16.mxu0 0
      %2250 = vmatpush1.bf16.msra.mxu0 0
      %2251 = vmatprep.subr.bf16.mxu0 0
      %2252 = vmatpush1.bf16.msra.mxu0 0
      %2253 = vmatprep.subr.bf16.mxu0 0
      %2254 = vmatpush1.bf16.msra.mxu0 0
      %2255 = vmatprep.subr.bf16.mxu0 0
      %2256 = vmatpush1.bf16.msra.mxu0 0
      %2257 = vmatprep.subr.bf16.mxu0 0
      %2258 = vmatpush1.bf16.msra.mxu0 0
      %2259 = vmatprep.subr.bf16.mxu0 0
      %2260 = vmatpush1.bf16.msra.mxu0 0
      %2261 = vmatprep.subr.bf16.mxu0 0
      %2262 = vmatpush1.bf16.msra.mxu0 0
      %2263 = vmatprep.subr.bf16.mxu0 0
      %2264 = vmatpush1.bf16.msra.mxu0 0
      %2265 = vmatprep.subr.bf16.mxu0 0
      %2266 = vmatpush1.bf16.msra.mxu0 0
      %2267 = vmatprep.subr.bf16.mxu0 0
      %2268 = vmatpush1.bf16.msra.mxu0 0
      %2269 = vmatprep.mubr.bf16.mxu0 0
      %2270 = vmatmul.mubr.bf16.gmra.mrb[0].mxu0 %v2232
      %v2271 = vpop.f32.mrb[0].mxu0
      %v2272 = vadd.f32 0.0, %v2271
      %v2273 = vpop.f32.mrb[0].mxu0
      %v2274 = vpop.f32.mrb[0].mxu0
      %v2275 = vpop.f32.mrb[0].mxu0
      %2276 = vdwg.mxu0
      %v2278 = vsel %vm1755, %v2183, 0
      %v2281 = vsel %vm1995, %v2179, 0
      %2283 = vmatprep.subr.bf16.mxu0 0
      %2284 = vmatpush1.bf16.msra.mxu0 %v2281
      %2285 = vmatprep.subr.bf16.mxu0 0
      %2286 = vmatpush1.bf16.msra.mxu0 0
      %2287 = vmatprep.subr.bf16.mxu0 0
      %2288 = vmatpush1.bf16.msra.mxu0 0
      %2289 = vmatprep.subr.bf16.mxu0 0
      %2290 = vmatpush1.bf16.msra.mxu0 0
      %2291 = vmatprep.subr.bf16.mxu0 0
      %2292 = vmatpush1.bf16.msra.mxu0 0
      %2293 = vmatprep.subr.bf16.mxu0 0
      %2294 = vmatpush1.bf16.msra.mxu0 0
      %2295 = vmatprep.subr.bf16.mxu0 0
      %2296 = vmatpush1.bf16.msra.mxu0 0
      %2297 = vmatprep.subr.bf16.mxu0 0
      %2298 = vmatpush1.bf16.msra.mxu0 0
      %2299 = vmatprep.subr.bf16.mxu0 0
      %2300 = vmatpush1.bf16.msra.mxu0 0
      %2301 = vmatprep.subr.bf16.mxu0 0
      %2302 = vmatpush1.bf16.msra.mxu0 0
      %2303 = vmatprep.subr.bf16.mxu0 0
      %2304 = vmatpush1.bf16.msra.mxu0 0
      %2305 = vmatprep.subr.bf16.mxu0 0
      %2306 = vmatpush1.bf16.msra.mxu0 0
      %2307 = vmatprep.subr.bf16.mxu0 0
      %2308 = vmatpush1.bf16.msra.mxu0 0
      %2309 = vmatprep.subr.bf16.mxu0 0
      %2310 = vmatpush1.bf16.msra.mxu0 0
      %2311 = vmatprep.subr.bf16.mxu0 0
      %2312 = vmatpush1.bf16.msra.mxu0 0
      %2313 = vmatprep.subr.bf16.mxu0 0
      %2314 = vmatpush1.bf16.msra.mxu0 0
      %2315 = vmatprep.mubr.bf16.mxu0 0
      %2316 = vmatmul.mubr.bf16.gmra.mrb[0].mxu0 %v2278
      %v2317 = vpop.f32.mrb[0].mxu0
      %v2318 = vadd.f32 0.0, %v2317
      %v2319 = vpop.f32.mrb[0].mxu0
      %v2320 = vpop.f32.mrb[0].mxu0
      %v2321 = vpop.f32.mrb[0].mxu0
      %2322 = vdwg.mxu0
      %v2324 = vsel %vm1755, %v2184, 0
      %v2327 = vsel %vm1995, %v2180, 0
      %2329 = vmatprep.subr.bf16.mxu0 0
      %2330 = vmatpush1.bf16.msra.mxu0 %v2327
      %2331 = vmatprep.subr.bf16.mxu0 0
      %2332 = vmatpush1.bf16.msra.mxu0 0
      %2333 = vmatprep.subr.bf16.mxu0 0
      %2334 = vmatpush1.bf16.msra.mxu0 0
      %2335 = vmatprep.subr.bf16.mxu0 0
      %2336 = vmatpush1.bf16.msra.mxu0 0
      %2337 = vmatprep.subr.bf16.mxu0 0
      %2338 = vmatpush1.bf16.msra.mxu0 0
      %2339 = vmatprep.subr.bf16.mxu0 0
      %2340 = vmatpush1.bf16.msra.mxu0 0
      %2341 = vmatprep.subr.bf16.mxu0 0
      %2342 = vmatpush1.bf16.msra.mxu0 0
      %2343 = vmatprep.subr.bf16.mxu0 0
      %2344 = vmatpush1.bf16.msra.mxu0 0
      %2345 = vmatprep.subr.bf16.mxu0 0
      %2346 = vmatpush1.bf16.msra.mxu0 0
      %2347 = vmatprep.subr.bf16.mxu0 0
      %2348 = vmatpush1.bf16.msra.mxu0 0
      %2349 = vmatprep.subr.bf16.mxu0 0
      %2350 = vmatpush1.bf16.msra.mxu0 0
      %2351 = vmatprep.subr.bf16.mxu0 0
      %2352 = vmatpush1.bf16.msra.mxu0 0
      %2353 = vmatprep.subr.bf16.mxu0 0
      %2354 = vmatpush1.bf16.msra.mxu0 0
      %2355 = vmatprep.subr.bf16.mxu0 0
      %2356 = vmatpush1.bf16.msra.mxu0 0
      %2357 = vmatprep.subr.bf16.mxu0 0
      %2358 = vmatpush1.bf16.msra.mxu0 0
      %2359 = vmatprep.subr.bf16.mxu0 0
      %2360 = vmatpush1.bf16.msra.mxu0 0
      %2361 = vmatprep.mubr.bf16.mxu0 0
      %2362 = vmatmul.mubr.bf16.gmra.mrb[0].mxu0 %v2324
      %v2363 = vpop.f32.mrb[0].mxu0
      %v2364 = vadd.f32 0.0, %v2363
      %v2365 = vpop.f32.mrb[0].mxu0
      %v2366 = vpop.f32.mrb[0].mxu0
      %v2367 = vpop.f32.mrb[0].mxu0
      %2368 = vdwg.mxu0
      %v2369 = vsel %vm958, %v2226, 0.0
      %v2370 = vsel %vm958, %v2272, 0.0
      %v2371 = vadd.f32 %v2369, %v2370
      %v2372 = vsel %vm958, %v2318, 0.0
      %v2373 = vadd.f32 %v2371, %v2372
      %v2374 = vsel %vm958, %v2364, 0.0
      %v2375 = vadd.f32 %v2373, %v2374
      %v2376 = vadd.f32 %v950, %v2375
      %v2377 = vld [vmem:[%s13] sm:$0x1]
      %v2379 = vlaneseq
      %v2380 = vshrl.u32 %v2379, 7
      %v2381 = vsub.s32 0, %v2380
      %v2382 = vrot.slane %v2377, %v2381
      %v2384 = vadd.f32 %v2376, %v2382
      %v2385 = vld [vmem:[%s14] sm:$0x1]
      %v2386 = vld [vmem:[%s15] sm:$0x1]
      %v2387 = vsel %vm958, %v2384, 0.0
      %2388 = vadd.xlane.f32.xlu0 %v2387
      %v2389 = vpop.xlane.xlu0 %2388
      %v2390 = vmul.f32 %v2389, %v962
      %v2391 = vsub.f32 %v2384, %v2390
      %v2392 = vmul.f32 %v2391, %v2391
      %v2393 = vsel %vm958, %v2392, 0.0
      %2394 = vadd.xlane.f32.xlu0 %v2393
      %v2395 = vpop.xlane.xlu0 %2394
      %v2396 = vmul.f32 %v2395, %v962
      %v2397 = vadd.f32 %v2396, 1e-05
      %v2398 = vrsqrt.pop %v2397
      %v2399 = vmul.f32 %v2391, %v2398
      %v2401 = vlaneseq
      %v2402 = vshrl.u32 %v2401, 7
      %v2403 = vsub.s32 0, %v2402
      %v2404 = vrot.slane %v2385, %v2403
      %v2406 = vmul.f32 %v2399, %v2404
      %v2408 = vlaneseq
      %v2409 = vshrl.u32 %v2408, 7
      %v2410 = vsub.s32 0, %v2409
      %v2411 = vrot.slane %v2386, %v2410
      %v2413 = vadd.f32 %v2406, %v2411
      %v2414 = vld [vmem:[%s16] sm:$0xf]
      %v2415 = vld [vmem:[%s16 + $0x4] sm:$0xf]
      %v2416 = vld [vmem:[%s16 + $0x8] sm:$0xf]
      %v2417 = vld [vmem:[%s16 + $0xc] sm:$0xf]
      %v2418 = vpack.c.bf16 %v2413, %v2413
      %v2419 = vld [vmem:[%s17] sm:$0x1]
      %v2421 = vlaneseq
      %v2422 = vshrl.u32 %v2421, 7
      %v2423 = vsub.s32 0, %v2422
      %v2424 = vrot.slane %v2419, %v2423
      %v2430 = vunpack.c.l.b16 %v2414
      %v2431 = vunpack.c.l.b16 %v2415
      %v2432 = vunpack.c.l.b16 %v2416
      %v2433 = vunpack.c.l.b16 %v2417
      %v2434 = vpack.c.b16 %v2431, %v2430
      %v2435 = vpack.c.b16 %v2433, %v2432
      %v2439 = vsel %vm958, %v2418, 0
      %2441 = vmatprep.subr.bf16.mxu0 0
      %2442 = vmatpush1.bf16.msra.mxu0 %v2434
      %2443 = vmatprep.subr.bf16.mxu0 0
      %2444 = vmatpush1.bf16.msra.mxu0 %v2435
      %2445 = vmatprep.subr.bf16.mxu0 0
      %2446 = vmatpush1.bf16.msra.mxu0 0
      %2447 = vmatprep.subr.bf16.mxu0 0
      %2448 = vmatpush1.bf16.msra.mxu0 0
      %2449 = vmatprep.subr.bf16.mxu0 0
      %2450 = vmatpush1.bf16.msra.mxu0 0
      %2451 = vmatprep.subr.bf16.mxu0 0
      %2452 = vmatpush1.bf16.msra.mxu0 0
      %2453 = vmatprep.subr.bf16.mxu0 0
      %2454 = vmatpush1.bf16.msra.mxu0 0
      %2455 = vmatprep.subr.bf16.mxu0 0
      %2456 = vmatpush1.bf16.msra.mxu0 0
      %2457 = vmatprep.subr.bf16.mxu0 0
      %2458 = vmatpush1.bf16.msra.mxu0 0
      %2459 = vmatprep.subr.bf16.mxu0 0
      %2460 = vmatpush1.bf16.msra.mxu0 0
      %2461 = vmatprep.subr.bf16.mxu0 0
      %2462 = vmatpush1.bf16.msra.mxu0 0
      %2463 = vmatprep.subr.bf16.mxu0 0
      %2464 = vmatpush1.bf16.msra.mxu0 0
      %2465 = vmatprep.subr.bf16.mxu0 0
      %2466 = vmatpush1.bf16.msra.mxu0 0
      %2467 = vmatprep.subr.bf16.mxu0 0
      %2468 = vmatpush1.bf16.msra.mxu0 0
      %2469 = vmatprep.subr.bf16.mxu0 0
      %2470 = vmatpush1.bf16.msra.mxu0 0
      %2471 = vmatprep.subr.bf16.mxu0 0
      %2472 = vmatpush1.bf16.msra.mxu0 0
      %2473 = vmatprep.mubr.bf16.mxu0 0
      %2474 = vmatmul.mubr.bf16.gmra.mrb[0].mxu0 %v2439
      %v2475 = vpop.f32.mrb[0].mxu0
      %v2476 = vadd.f32 %v2424, %v2475
      %v2477 = vpop.f32.mrb[0].mxu0
      %v2478 = vpop.f32.mrb[0].mxu0
      %v2479 = vpop.f32.mrb[0].mxu0
      %2480 = vdwg.mxu0
      %v2481 = vmul.f32 %v2476, %v2476
      %v2482 = vmul.f32 %v2476, %v2481
      %v2483 = vmul.f32 %v2482, 0.044715
      %v2484 = vadd.f32 %v2476, %v2483
      %v2485 = vmul.f32 %v2484, 0.7978846
      %v2486 = vtanh.pop %v2485
      %v2487 = vadd.f32 %v2486, 1.0
      %v2488 = vmul.f32 %v2487, 0.5
      %v2489 = vmul.f32 %v2476, %v2488
      %v2490 = vld [vmem:[%s18] sm:$0xf]
      %v2491 = vld [vmem:[%s18 + $0x4] sm:$0xf]
      %v2492 = vld [vmem:[%s18 + $0x8] sm:$0xf]
      %v2493 = vld [vmem:[%s18 + $0xc] sm:$0xf]
      %v2494 = vld [vmem:[%s18 + $0x10] sm:$0xf]
      %v2495 = vld [vmem:[%s18 + $0x14] sm:$0xf]
      %v2496 = vld [vmem:[%s18 + $0x18] sm:$0xf]
      %v2497 = vld [vmem:[%s18 + $0x1c] sm:$0xf]
      %v2498 = vpack.c.bf16 %v2489, %v2489
      %v2507 = vunpack.c.l.b16 %v2490
      %v2508 = vunpack.c.l.b16 %v2491
      %v2509 = vunpack.c.l.b16 %v2492
      %v2510 = vunpack.c.l.b16 %v2493
      %v2511 = vunpack.c.l.b16 %v2494
      %v2512 = vunpack.c.l.b16 %v2495
      %v2513 = vunpack.c.l.b16 %v2496
      %v2514 = vunpack.c.l.b16 %v2497
      %v2515 = vpack.c.b16 %v2508, %v2507
      %v2516 = vpack.c.b16 %v2510, %v2509
      %v2517 = vpack.c.b16 %v2512, %v2511
      %v2518 = vpack.c.b16 %v2514, %v2513
      %vm2523 = vcmask 523264
      %v2525 = vsel %vm2523, %v2498, 0
      %2527 = vmatprep.subr.bf16.mxu0 0
      %2528 = vmatpush1.bf16.msra.mxu0 %v2515
      %2529 = vmatprep.subr.bf16.mxu0 0
      %2530 = vmatpush1.bf16.msra.mxu0 %v2516
      %2531 = vmatprep.subr.bf16.mxu0 0
      %2532 = vmatpush1.bf16.msra.mxu0 %v2517
      %2533 = vmatprep.subr.bf16.mxu0 0
      %2534 = vmatpush1.bf16.msra.mxu0 %v2518
      %2535 = vmatprep.subr.bf16.mxu0 0
      %2536 = vmatpush1.bf16.msra.mxu0 0
      %2537 = vmatprep.subr.bf16.mxu0 0
      %2538 = vmatpush1.bf16.msra.mxu0 0
      %2539 = vmatprep.subr.bf16.mxu0 0
      %2540 = vmatpush1.bf16.msra.mxu0 0
      %2541 = vmatprep.subr.bf16.mxu0 0
      %2542 = vmatpush1.bf16.msra.mxu0 0
      %2543 = vmatprep.subr.bf16.mxu0 0
      %2544 = vmatpush1.bf16.msra.mxu0 0
      %2545 = vmatprep.subr.bf16.mxu0 0
      %2546 = vmatpush1.bf16.msra.mxu0 0
      %2547 = vmatprep.subr.bf16.mxu0 0
      %2548 = vmatpush1.bf16.msra.mxu0 0
      %2549 = vmatprep.subr.bf16.mxu0 0
      %2550 = vmatpush1.bf16.msra.mxu0 0
      %2551 = vmatprep.subr.bf16.mxu0 0
      %2552 = vmatpush1.bf16.msra.mxu0 0
      %2553 = vmatprep.subr.bf16.mxu0 0
      %2554 = vmatpush1.bf16.msra.mxu0 0
      %2555 = vmatprep.subr.bf16.mxu0 0
      %2556 = vmatpush1.bf16.msra.mxu0 0
      %2557 = vmatprep.subr.bf16.mxu0 0
      %2558 = vmatpush1.bf16.msra.mxu0 0
      %2559 = vmatprep.mubr.bf16.mxu0 0
      %2560 = vmatmul.mubr.bf16.gmra.mrb[0].mxu0 %v2525
      %v2561 = vpop.f32.mrb[0].mxu0
      %v2562 = vadd.f32 0.0, %v2561
      %v2563 = vpop.f32.mrb[0].mxu0
      %v2564 = vpop.f32.mrb[0].mxu0
      %v2565 = vpop.f32.mrb[0].mxu0
      %2566 = vdwg.mxu0
      %v2567 = vadd.f32 %v2384, %v2562
      %v2568 = vld [vmem:[%s19] sm:$0x1]
      %v2570 = vlaneseq
      %v2571 = vshrl.u32 %v2570, 7
      %v2572 = vsub.s32 0, %v2571
      %v2573 = vrot.slane %v2568, %v2572
      %v2575 = vadd.f32 %v2567, %v2573
      %s2576 = scalar_lea.vmem %s4, 1
      %v2577 = vld [vmem:[%s2576] sm:$0x1]
      %s2578 = scalar_lea.vmem %s5, 1
      %v2579 = vld [vmem:[%s2578] sm:$0x1]
      %v2580 = vsel %vm958, %v2575, 0.0
      %2581 = vadd.xlane.f32.xlu0 %v2580
      %v2582 = vpop.xlane.xlu0 %2581
      %v2583 = vmul.f32 %v2582, %v962
      %v2584 = vsub.f32 %v2575, %v2583
      %v2585 = vmul.f32 %v2584, %v2584
      %v2586 = vsel %vm958, %v2585, 0.0
      %2587 = vadd.xlane.f32.xlu0 %v2586
      %v2588 = vpop.xlane.xlu0 %2587
      %v2589 = vmul.f32 %v2588, %v962
      %v2590 = vadd.f32 %v2589, 1e-05
      %v2591 = vrsqrt.pop %v2590
      %v2592 = vmul.f32 %v2584, %v2591
      %v2594 = vlaneseq
      %v2595 = vshrl.u32 %v2594, 7
      %v2596 = vsub.s32 0, %v2595
      %v2597 = vrot.slane %v2577, %v2596
      %v2599 = vmul.f32 %v2592, %v2597
      %v2601 = vlaneseq
      %v2602 = vshrl.u32 %v2601, 7
      %v2603 = vsub.s32 0, %v2602
      %v2604 = vrot.slane %v2579, %v2603
      %v2606 = vadd.f32 %v2599, %v2604
      %v2607 = vpack.c.bf16 %v2606, %v2606
      %s2608 = scalar_lea.vmem %s6, 64
      %v2609 = vld [vmem:[%s2608] sm:$0xf]
      %v2610 = vld [vmem:[%s2608 + $0x4] sm:$0xf]
      %v2611 = vld [vmem:[%s2608 + $0x8] sm:$0xf]
      %v2612 = vld [vmem:[%s2608 + $0xc] sm:$0xf]
      %v2613 = vld [vmem:[%s2608 + $0x10] sm:$0xf]
      %v2614 = vld [vmem:[%s2608 + $0x14] sm:$0xf]
      %v2615 = vld [vmem:[%s2608 + $0x18] sm:$0xf]
      %v2616 = vld [vmem:[%s2608 + $0x1c] sm:$0xf]
      %v2617 = vld [vmem:[%s2608 + $0x20] sm:$0xf]
      %v2618 = vld [vmem:[%s2608 + $0x24] sm:$0xf]
      %v2619 = vld [vmem:[%s2608 + $0x28] sm:$0xf]
      %v2620 = vld [vmem:[%s2608 + $0x2c] sm:$0xf]
      %v2621 = vld [vmem:[%s2608 + $0x30] sm:$0xf]
      %v2622 = vld [vmem:[%s2608 + $0x34] sm:$0xf]
      %v2623 = vld [vmem:[%s2608 + $0x38] sm:$0xf]
      %v2624 = vld [vmem:[%s2608 + $0x3c] sm:$0xf]
      %s2625 = scalar_lea.vmem %s7, 4
      %v2626 = vld [vmem:[%s2625] sm:$0x1]
      %v2627 = vld [vmem:[%s2625 + $0x1] sm:$0x1]
      %v2628 = vld [vmem:[%s2625 + $0x2] sm:$0x1]
      %v2629 = vld [vmem:[%s2625 + $0x3] sm:$0x1]
      %v2634 = vlaneseq
      %v2635 = vshrl.u32 %v2634, 7
      %v2636 = vsub.s32 0, %v2635
      %v2637 = vrot.slane %v2626, %v2636
      %v2638 = vlaneseq
      %v2639 = vshrl.u32 %v2638, 7
      %v2640 = vsub.s32 0, %v2639
      %v2641 = vrot.slane %v2627, %v2640
      %v2642 = vlaneseq
      %v2643 = vshrl.u32 %v2642, 7
      %v2644 = vsub.s32 0, %v2643
      %v2645 = vrot.slane %v2628, %v2644
      %v2646 = vlaneseq
      %v2647 = vshrl.u32 %v2646, 7
      %v2648 = vsub.s32 0, %v2647
      %v2649 = vrot.slane %v2629, %v2648
      %v2658 = vunpack.c.l.b16 %v2609
      %v2659 = vunpack.c.l.b16 %v2610
      %v2660 = vunpack.c.l.b16 %v2611
      %v2661 = vunpack.c.l.b16 %v2612
      %v2662 = vpack.c.b16 %v2659, %v2658
      %v2663 = vpack.c.b16 %v2661, %v2660
      %v2667 = vsel %vm958, %v2607, 0
      %2669 = vmatprep.subr.bf16.mxu0 0
      %2670 = vmatpush1.bf16.msra.mxu0 %v2662
      %2671 = vmatprep.subr.bf16.mxu0 0
      %2672 = vmatpush1.bf16.msra.mxu0 %v2663
      %2673 = vmatprep.subr.bf16.mxu0 0
      %2674 = vmatpush1.bf16.msra.mxu0 0
      %2675 = vmatprep.subr.bf16.mxu0 0
      %2676 = vmatpush1.bf16.msra.mxu0 0
      %2677 = vmatprep.subr.bf16.mxu0 0
      %2678 = vmatpush1.bf16.msra.mxu0 0
      %2679 = vmatprep.subr.bf16.mxu0 0
      %2680 = vmatpush1.bf16.msra.mxu0 0
      %2681 = vmatprep.subr.bf16.mxu0 0
      %2682 = vmatpush1.bf16.msra.mxu0 0
      %2683 = vmatprep.subr.bf16.mxu0 0
      %2684 = vmatpush1.bf16.msra.mxu0 0
      %2685 = vmatprep.subr.bf16.mxu0 0
      %2686 = vmatpush1.bf16.msra.mxu0 0
      %2687 = vmatprep.subr.bf16.mxu0 0
      %2688 = vmatpush1.bf16.msra.mxu0 0
      %2689 = vmatprep.subr.bf16.mxu0 0
      %2690 = vmatpush1.bf16.msra.mxu0 0
      %2691 = vmatprep.subr.bf16.mxu0 0
      %2692 = vmatpush1.bf16.msra.mxu0 0
      %2693 = vmatprep.subr.bf16.mxu0 0
      %2694 = vmatpush1.bf16.msra.mxu0 0
      %2695 = vmatprep.subr.bf16.mxu0 0
      %2696 = vmatpush1.bf16.msra.mxu0 0
      %2697 = vmatprep.subr.bf16.mxu0 0
      %2698 = vmatpush1.bf16.msra.mxu0 0
      %2699 = vmatprep.subr.bf16.mxu0 0
      %2700 = vmatpush1.bf16.msra.mxu0 0
      %2701 = vmatprep.mubr.bf16.mxu0 0
      %2702 = vmatmul.mubr.bf16.gmra.mrb[0].mxu0 %v2667
      %v2703 = vpop.f32.mrb[0].mxu0
      %v2704 = vadd.f32 %v2637, %v2703
      %v2705 = vpop.f32.mrb[0].mxu0
      %v2706 = vpop.f32.mrb[0].mxu0
      %v2707 = vpop.f32.mrb[0].mxu0
      %2708 = vdwg.mxu0
      %v2713 = vunpack.c.l.b16 %v2613
      %v2714 = vunpack.c.l.b16 %v2614
      %v2715 = vunpack.c.l.b16 %v2615
      %v2716 = vunpack.c.l.b16 %v2616
      %v2717 = vpack.c.b16 %v2714, %v2713
      %v2718 = vpack.c.b16 %v2716, %v2715
      %2721 = vmatprep.subr.bf16.mxu0 0
      %2722 = vmatpush1.bf16.msra.mxu0 %v2717
      %2723 = vmatprep.subr.bf16.mxu0 0
      %2724 = vmatpush1.bf16.msra.mxu0 %v2718
      %2725 = vmatprep.subr.bf16.mxu0 0
      %2726 = vmatpush1.bf16.msra.mxu0 0
      %2727 = vmatprep.subr.bf16.mxu0 0
      %2728 = vmatpush1.bf16.msra.mxu0 0
      %2729 = vmatprep.subr.bf16.mxu0 0
      %2730 = vmatpush1.bf16.msra.mxu0 0
      %2731 = vmatprep.subr.bf16.mxu0 0
      %2732 = vmatpush1.bf16.msra.mxu0 0
      %2733 = vmatprep.subr.bf16.mxu0 0
      %2734 = vmatpush1.bf16.msra.mxu0 0
      %2735 = vmatprep.subr.bf16.mxu0 0
      %2736 = vmatpush1.bf16.msra.mxu0 0
      %2737 = vmatprep.subr.bf16.mxu0 0
      %2738 = vmatpush1.bf16.msra.mxu0 0
      %2739 = vmatprep.subr.bf16.mxu0 0
      %2740 = vmatpush1.bf16.msra.mxu0 0
      %2741 = vmatprep.subr.bf16.mxu0 0
      %2742 = vmatpush1.bf16.msra.mxu0 0
      %2743 = vmatprep.subr.bf16.mxu0 0
      %2744 = vmatpush1.bf16.msra.mxu0 0
      %2745 = vmatprep.subr.bf16.mxu0 0
      %2746 = vmatpush1.bf16.msra.mxu0 0
      %2747 = vmatprep.subr.bf16.mxu0 0
      %2748 = vmatpush1.bf16.msra.mxu0 0
      %2749 = vmatprep.subr.bf16.mxu0 0
      %2750 = vmatpush1.bf16.msra.mxu0 0
      %2751 = vmatprep.subr.bf16.mxu0 0
      %2752 = vmatpush1.bf16.msra.mxu0 0
      %2753 = vmatprep.mubr.bf16.mxu0 0
      %2754 = vmatmul.mubr.bf16.gmra.mrb[0].mxu0 %v2667
      %v2755 = vpop.f32.mrb[0].mxu0
      %v2756 = vadd.f32 %v2641, %v2755
      %v2757 = vpop.f32.mrb[0].mxu0
      %v2758 = vpop.f32.mrb[0].mxu0
      %v2759 = vpop.f32.mrb[0].mxu0
      %2760 = vdwg.mxu0
      %v2765 = vunpack.c.l.b16 %v2617
      %v2766 = vunpack.c.l.b16 %v2618
      %v2767 = vunpack.c.l.b16 %v2619
      %v2768 = vunpack.c.l.b16 %v2620
      %v2769 = vpack.c.b16 %v2766, %v2765
      %v2770 = vpack.c.b16 %v2768, %v2767
      %2773 = vmatprep.subr.bf16.mxu0 0
      %2774 = vmatpush1.bf16.msra.mxu0 %v2769
      %2775 = vmatprep.subr.bf16.mxu0 0
      %2776 = vmatpush1.bf16.msra.mxu0 %v2770
      %2777 = vmatprep.subr.bf16.mxu0 0
      %2778 = vmatpush1.bf16.msra.mxu0 0
      %2779 = vmatprep.subr.bf16.mxu0 0
      %2780 = vmatpush1.bf16.msra.mxu0 0
      %2781 = vmatprep.subr.bf16.mxu0 0
      %2782 = vmatpush1.bf16.msra.mxu0 0
      %2783 = vmatprep.subr.bf16.mxu0 0
      %2784 = vmatpush1.bf16.msra.mxu0 0
      %2785 = vmatprep.subr.bf16.mxu0 0
      %2786 = vmatpush1.bf16.msra.mxu0 0
      %2787 = vmatprep.subr.bf16.mxu0 0
      %2788 = vmatpush1.bf16.msra.mxu0 0
      %2789 = vmatprep.subr.bf16.mxu0 0
      %2790 = vmatpush1.bf16.msra.mxu0 0
      %2791 = vmatprep.subr.bf16.mxu0 0
      %2792 = vmatpush1.bf16.msra.mxu0 0
      %2793 = vmatprep.subr.bf16.mxu0 0
      %2794 = vmatpush1.bf16.msra.mxu0 0
      %2795 = vmatprep.subr.bf16.mxu0 0
      %2796 = vmatpush1.bf16.msra.mxu0 0
      %2797 = vmatprep.subr.bf16.mxu0 0
      %2798 = vmatpush1.bf16.msra.mxu0 0
      %2799 = vmatprep.subr.bf16.mxu0 0
      %2800 = vmatpush1.bf16.msra.mxu0 0
      %2801 = vmatprep.subr.bf16.mxu0 0
      %2802 = vmatpush1.bf16.msra.mxu0 0
      %2803 = vmatprep.subr.bf16.mxu0 0
      %2804 = vmatpush1.bf16.msra.mxu0 0
      %2805 = vmatprep.mubr.bf16.mxu0 0
      %2806 = vmatmul.mubr.bf16.gmra.mrb[0].mxu0 %v2667
      %v2807 = vpop.f32.mrb[0].mxu0
      %v2808 = vadd.f32 %v2645, %v2807
      %v2809 = vpop.f32.mrb[0].mxu0
      %v2810 = vpop.f32.mrb[0].mxu0
      %v2811 = vpop.f32.mrb[0].mxu0
      %2812 = vdwg.mxu0
      %v2817 = vunpack.c.l.b16 %v2621
      %v2818 = vunpack.c.l.b16 %v2622
      %v2819 = vunpack.c.l.b16 %v2623
      %v2820 = vunpack.c.l.b16 %v2624
      %v2821 = vpack.c.b16 %v2818, %v2817
      %v2822 = vpack.c.b16 %v2820, %v2819
      %2825 = vmatprep.subr.bf16.mxu0 0
      %2826 = vmatpush1.bf16.msra.mxu0 %v2821
      %2827 = vmatprep.subr.bf16.mxu0 0
      %2828 = vmatpush1.bf16.msra.mxu0 %v2822
      %2829 = vmatprep.subr.bf16.mxu0 0
      %2830 = vmatpush1.bf16.msra.mxu0 0
      %2831 = vmatprep.subr.bf16.mxu0 0
      %2832 = vmatpush1.bf16.msra.mxu0 0
      %2833 = vmatprep.subr.bf16.mxu0 0
      %2834 = vmatpush1.bf16.msra.mxu0 0
      %2835 = vmatprep.subr.bf16.mxu0 0
      %2836 = vmatpush1.bf16.msra.mxu0 0
      %2837 = vmatprep.subr.bf16.mxu0 0
      %2838 = vmatpush1.bf16.msra.mxu0 0
      %2839 = vmatprep.subr.bf16.mxu0 0
      %2840 = vmatpush1.bf16.msra.mxu0 0
      %2841 = vmatprep.subr.bf16.mxu0 0
      %2842 = vmatpush1.bf16.msra.mxu0 0
      %2843 = vmatprep.subr.bf16.mxu0 0
      %2844 = vmatpush1.bf16.msra.mxu0 0
      %2845 = vmatprep.subr.bf16.mxu0 0
      %2846 = vmatpush1.bf16.msra.mxu0 0
      %2847 = vmatprep.subr.bf16.mxu0 0
      %2848 = vmatpush1.bf16.msra.mxu0 0
      %2849 = vmatprep.subr.bf16.mxu0 0
      %2850 = vmatpush1.bf16.msra.mxu0 0
      %2851 = vmatprep.subr.bf16.mxu0 0
      %2852 = vmatpush1.bf16.msra.mxu0 0
      %2853 = vmatprep.subr.bf16.mxu0 0
      %2854 = vmatpush1.bf16.msra.mxu0 0
      %2855 = vmatprep.subr.bf16.mxu0 0
      %2856 = vmatpush1.bf16.msra.mxu0 0
      %2857 = vmatprep.mubr.bf16.mxu0 0
      %2858 = vmatmul.mubr.bf16.gmra.mrb[0].mxu0 %v2667
      %v2859 = vpop.f32.mrb[0].mxu0
      %v2860 = vadd.f32 %v2649, %v2859
      %v2861 = vpop.f32.mrb[0].mxu0
      %v2862 = vpop.f32.mrb[0].mxu0
      %v2863 = vpop.f32.mrb[0].mxu0
      %2864 = vdwg.mxu0
      %s2865 = scalar_lea.vmem %s8, 64
      %v2866 = vld [vmem:[%s2865] sm:$0xf]
      %v2867 = vld [vmem:[%s2865 + $0x4] sm:$0xf]
      %v2868 = vld [vmem:[%s2865 + $0x8] sm:$0xf]
      %v2869 = vld [vmem:[%s2865 + $0xc] sm:$0xf]
      %v2870 = vld [vmem:[%s2865 + $0x10] sm:$0xf]
      %v2871 = vld [vmem:[%s2865 + $0x14] sm:$0xf]
      %v2872 = vld [vmem:[%s2865 + $0x18] sm:$0xf]
      %v2873 = vld [vmem:[%s2865 + $0x1c] sm:$0xf]
      %v2874 = vld [vmem:[%s2865 + $0x20] sm:$0xf]
      %v2875 = vld [vmem:[%s2865 + $0x24] sm:$0xf]
      %v2876 = vld [vmem:[%s2865 + $0x28] sm:$0xf]
      %v2877 = vld [vmem:[%s2865 + $0x2c] sm:$0xf]
      %v2878 = vld [vmem:[%s2865 + $0x30] sm:$0xf]
      %v2879 = vld [vmem:[%s2865 + $0x34] sm:$0xf]
      %v2880 = vld [vmem:[%s2865 + $0x38] sm:$0xf]
      %v2881 = vld [vmem:[%s2865 + $0x3c] sm:$0xf]
      %s2882 = scalar_lea.vmem %s9, 4
      %v2883 = vld [vmem:[%s2882] sm:$0x1]
      %v2884 = vld [vmem:[%s2882 + $0x1] sm:$0x1]
      %v2885 = vld [vmem:[%s2882 + $0x2] sm:$0x1]
      %v2886 = vld [vmem:[%s2882 + $0x3] sm:$0x1]
      %v2891 = vlaneseq
      %v2892 = vshrl.u32 %v2891, 7
      %v2893 = vsub.s32 0, %v2892
      %v2894 = vrot.slane %v2883, %v2893
      %v2895 = vlaneseq
      %v2896 = vshrl.u32 %v2895, 7
      %v2897 = vsub.s32 0, %v2896
      %v2898 = vrot.slane %v2884, %v2897
      %v2899 = vlaneseq
      %v2900 = vshrl.u32 %v2899, 7
      %v2901 = vsub.s32 0, %v2900
      %v2902 = vrot.slane %v2885, %v2901
      %v2903 = vlaneseq
      %v2904 = vshrl.u32 %v2903, 7
      %v2905 = vsub.s32 0, %v2904
      %v2906 = vrot.slane %v2886, %v2905
      %v2915 = vunpack.c.l.b16 %v2866
      %v2916 = vunpack.c.l.b16 %v2867
      %v2917 = vunpack.c.l.b16 %v2868
      %v2918 = vunpack.c.l.b16 %v2869
      %v2919 = vpack.c.b16 %v2916, %v2915
      %v2920 = vpack.c.b16 %v2918, %v2917
      %2923 = vmatprep.subr.bf16.mxu0 0
      %2924 = vmatpush1.bf16.msra.mxu0 %v2919
      %2925 = vmatprep.subr.bf16.mxu0 0
      %2926 = vmatpush1.bf16.msra.mxu0 %v2920
      %2927 = vmatprep.subr.bf16.mxu0 0
      %2928 = vmatpush1.bf16.msra.mxu0 0
      %2929 = vmatprep.subr.bf16.mxu0 0
      %2930 = vmatpush1.bf16.msra.mxu0 0
      %2931 = vmatprep.subr.bf16.mxu0 0
      %2932 = vmatpush1.bf16.msra.mxu0 0
      %2933 = vmatprep.subr.bf16.mxu0 0
      %2934 = vmatpush1.bf16.msra.mxu0 0
      %2935 = vmatprep.subr.bf16.mxu0 0
      %2936 = vmatpush1.bf16.msra.mxu0 0
      %2937 = vmatprep.subr.bf16.mxu0 0
      %2938 = vmatpush1.bf16.msra.mxu0 0
      %2939 = vmatprep.subr.bf16.mxu0 0
      %2940 = vmatpush1.bf16.msra.mxu0 0
      %2941 = vmatprep.subr.bf16.mxu0 0
      %2942 = vmatpush1.bf16.msra.mxu0 0
      %2943 = vmatprep.subr.bf16.mxu0 0
      %2944 = vmatpush1.bf16.msra.mxu0 0
      %2945 = vmatprep.subr.bf16.mxu0 0
      %2946 = vmatpush1.bf16.msra.mxu0 0
      %2947 = vmatprep.subr.bf16.mxu0 0
      %2948 = vmatpush1.bf16.msra.mxu0 0
      %2949 = vmatprep.subr.bf16.mxu0 0
      %2950 = vmatpush1.bf16.msra.mxu0 0
      %2951 = vmatprep.subr.bf16.mxu0 0
      %2952 = vmatpush1.bf16.msra.mxu0 0
      %2953 = vmatprep.subr.bf16.mxu0 0
      %2954 = vmatpush1.bf16.msra.mxu0 0
      %2955 = vmatprep.mubr.bf16.mxu0 0
      %2956 = vmatmul.mubr.bf16.gmra.mrb[0].mxu0 %v2667
      %v2957 = vpop.f32.mrb[0].mxu0
      %v2958 = vadd.f32 %v2894, %v2957
      %v2959 = vpop.f32.mrb[0].mxu0
      %v2960 = vpop.f32.mrb[0].mxu0
      %v2961 = vpop.f32.mrb[0].mxu0
      %2962 = vdwg.mxu0
      %v2967 = vunpack.c.l.b16 %v2870
      %v2968 = vunpack.c.l.b16 %v2871
      %v2969 = vunpack.c.l.b16 %v2872
      %v2970 = vunpack.c.l.b16 %v2873
      %v2971 = vpack.c.b16 %v2968, %v2967
      %v2972 = vpack.c.b16 %v2970, %v2969
      %2975 = vmatprep.subr.bf16.mxu0 0
      %2976 = vmatpush1.bf16.msra.mxu0 %v2971
      %2977 = vmatprep.subr.bf16.mxu0 0
      %2978 = vmatpush1.bf16.msra.mxu0 %v2972
      %2979 = vmatprep.subr.bf16.mxu0 0
      %2980 = vmatpush1.bf16.msra.mxu0 0
      %2981 = vmatprep.subr.bf16.mxu0 0
      %2982 = vmatpush1.bf16.msra.mxu0 0
      %2983 = vmatprep.subr.bf16.mxu0 0
      %2984 = vmatpush1.bf16.msra.mxu0 0
      %2985 = vmatprep.subr.bf16.mxu0 0
      %2986 = vmatpush1.bf16.msra.mxu0 0
      %2987 = vmatprep.subr.bf16.mxu0 0
      %2988 = vmatpush1.bf16.msra.mxu0 0
      %2989 = vmatprep.subr.bf16.mxu0 0
      %2990 = vmatpush1.bf16.msra.mxu0 0
      %2991 = vmatprep.subr.bf16.mxu0 0
      %2992 = vmatpush1.bf16.msra.mxu0 0
      %2993 = vmatprep.subr.bf16.mxu0 0
      %2994 = vmatpush1.bf16.msra.mxu0 0
      %2995 = vmatprep.subr.bf16.mxu0 0
      %2996 = vmatpush1.bf16.msra.mxu0 0
      %2997 = vmatprep.subr.bf16.mxu0 0
      %2998 = vmatpush1.bf16.msra.mxu0 0
      %2999 = vmatprep.subr.bf16.mxu0 0
      %3000 = vmatpush1.bf16.msra.mxu0 0
      %3001 = vmatprep.subr.bf16.mxu0 0
      %3002 = vmatpush1.bf16.msra.mxu0 0
      %3003 = vmatprep.subr.bf16.mxu0 0
      %3004 = vmatpush1.bf16.msra.mxu0 0
      %3005 = vmatprep.subr.bf16.mxu0 0
      %3006 = vmatpush1.bf16.msra.mxu0 0
      %3007 = vmatprep.mubr.bf16.mxu0 0
      %3008 = vmatmul.mubr.bf16.gmra.mrb[0].mxu0 %v2667
      %v3009 = vpop.f32.mrb[0].mxu0
      %v3010 = vadd.f32 %v2898, %v3009
      %v3011 = vpop.f32.mrb[0].mxu0
      %v3012 = vpop.f32.mrb[0].mxu0
      %v3013 = vpop.f32.mrb[0].mxu0
      %3014 = vdwg.mxu0
      %v3019 = vunpack.c.l.b16 %v2874
      %v3020 = vunpack.c.l.b16 %v2875
      %v3021 = vunpack.c.l.b16 %v2876
      %v3022 = vunpack.c.l.b16 %v2877
      %v3023 = vpack.c.b16 %v3020, %v3019
      %v3024 = vpack.c.b16 %v3022, %v3021
      %3027 = vmatprep.subr.bf16.mxu0 0
      %3028 = vmatpush1.bf16.msra.mxu0 %v3023
      %3029 = vmatprep.subr.bf16.mxu0 0
      %3030 = vmatpush1.bf16.msra.mxu0 %v3024
      %3031 = vmatprep.subr.bf16.mxu0 0
      %3032 = vmatpush1.bf16.msra.mxu0 0
      %3033 = vmatprep.subr.bf16.mxu0 0
      %3034 = vmatpush1.bf16.msra.mxu0 0
      %3035 = vmatprep.subr.bf16.mxu0 0
      %3036 = vmatpush1.bf16.msra.mxu0 0
      %3037 = vmatprep.subr.bf16.mxu0 0
      %3038 = vmatpush1.bf16.msra.mxu0 0
      %3039 = vmatprep.subr.bf16.mxu0 0
      %3040 = vmatpush1.bf16.msra.mxu0 0
      %3041 = vmatprep.subr.bf16.mxu0 0
      %3042 = vmatpush1.bf16.msra.mxu0 0
      %3043 = vmatprep.subr.bf16.mxu0 0
      %3044 = vmatpush1.bf16.msra.mxu0 0
      %3045 = vmatprep.subr.bf16.mxu0 0
      %3046 = vmatpush1.bf16.msra.mxu0 0
      %3047 = vmatprep.subr.bf16.mxu0 0
      %3048 = vmatpush1.bf16.msra.mxu0 0
      %3049 = vmatprep.subr.bf16.mxu0 0
      %3050 = vmatpush1.bf16.msra.mxu0 0
      %3051 = vmatprep.subr.bf16.mxu0 0
      %3052 = vmatpush1.bf16.msra.mxu0 0
      %3053 = vmatprep.subr.bf16.mxu0 0
      %3054 = vmatpush1.bf16.msra.mxu0 0
      %3055 = vmatprep.subr.bf16.mxu0 0
      %3056 = vmatpush1.bf16.msra.mxu0 0
      %3057 = vmatprep.subr.bf16.mxu0 0
      %3058 = vmatpush1.bf16.msra.mxu0 0
      %3059 = vmatprep.mubr.bf16.mxu0 0
      %3060 = vmatmul.mubr.bf16.gmra.mrb[0].mxu0 %v2667
      %v3061 = vpop.f32.mrb[0].mxu0
      %v3062 = vadd.f32 %v2902, %v3061
      %v3063 = vpop.f32.mrb[0].mxu0
      %v3064 = vpop.f32.mrb[0].mxu0
      %v3065 = vpop.f32.mrb[0].mxu0
      %3066 = vdwg.mxu0
      %v3071 = vunpack.c.l.b16 %v2878
      %v3072 = vunpack.c.l.b16 %v2879
      %v3073 = vunpack.c.l.b16 %v2880
      %v3074 = vunpack.c.l.b16 %v2881
      %v3075 = vpack.c.b16 %v3072, %v3071
      %v3076 = vpack.c.b16 %v3074, %v3073
      %3079 = vmatprep.subr.bf16.mxu0 0
      %3080 = vmatpush1.bf16.msra.mxu0 %v3075
      %3081 = vmatprep.subr.bf16.mxu0 0
      %3082 = vmatpush1.bf16.msra.mxu0 %v3076
      %3083 = vmatprep.subr.bf16.mxu0 0
      %3084 = vmatpush1.bf16.msra.mxu0 0
      %3085 = vmatprep.subr.bf16.mxu0 0
      %3086 = vmatpush1.bf16.msra.mxu0 0
      %3087 = vmatprep.subr.bf16.mxu0 0
      %3088 = vmatpush1.bf16.msra.mxu0 0
      %3089 = vmatprep.subr.bf16.mxu0 0
      %3090 = vmatpush1.bf16.msra.mxu0 0
      %3091 = vmatprep.subr.bf16.mxu0 0
      %3092 = vmatpush1.bf16.msra.mxu0 0
      %3093 = vmatprep.subr.bf16.mxu0 0
      %3094 = vmatpush1.bf16.msra.mxu0 0
      %3095 = vmatprep.subr.bf16.mxu0 0
      %3096 = vmatpush1.bf16.msra.mxu0 0
      %3097 = vmatprep.subr.bf16.mxu0 0
      %3098 = vmatpush1.bf16.msra.mxu0 0
      %3099 = vmatprep.subr.bf16.mxu0 0
      %3100 = vmatpush1.bf16.msra.mxu0 0
      %3101 = vmatprep.subr.bf16.mxu0 0
      %3102 = vmatpush1.bf16.msra.mxu0 0
      %3103 = vmatprep.subr.bf16.mxu0 0
      %3104 = vmatpush1.bf16.msra.mxu0 0
      %3105 = vmatprep.subr.bf16.mxu0 0
      %3106 = vmatpush1.bf16.msra.mxu0 0
      %3107 = vmatprep.subr.bf16.mxu0 0
      %3108 = vmatpush1.bf16.msra.mxu0 0
      %3109 = vmatprep.subr.bf16.mxu0 0
      %3110 = vmatpush1.bf16.msra.mxu0 0
      %3111 = vmatprep.mubr.bf16.mxu0 0
      %3112 = vmatmul.mubr.bf16.gmra.mrb[0].mxu0 %v2667
      %v3113 = vpop.f32.mrb[0].mxu0
      %v3114 = vadd.f32 %v2906, %v3113
      %v3115 = vpop.f32.mrb[0].mxu0
      %v3116 = vpop.f32.mrb[0].mxu0
      %v3117 = vpop.f32.mrb[0].mxu0
      %3118 = vdwg.mxu0
      %s3119 = scalar_lea.vmem %s10, 64
      %v3120 = vld [vmem:[%s3119] sm:$0xf]
      %v3121 = vld [vmem:[%s3119 + $0x4] sm:$0xf]
      %v3122 = vld [vmem:[%s3119 + $0x8] sm:$0xf]
      %v3123 = vld [vmem:[%s3119 + $0xc] sm:$0xf]
      %v3124 = vld [vmem:[%s3119 + $0x10] sm:$0xf]
      %v3125 = vld [vmem:[%s3119 + $0x14] sm:$0xf]
      %v3126 = vld [vmem:[%s3119 + $0x18] sm:$0xf]
      %v3127 = vld [vmem:[%s3119 + $0x1c] sm:$0xf]
      %v3128 = vld [vmem:[%s3119 + $0x20] sm:$0xf]
      %v3129 = vld [vmem:[%s3119 + $0x24] sm:$0xf]
      %v3130 = vld [vmem:[%s3119 + $0x28] sm:$0xf]
      %v3131 = vld [vmem:[%s3119 + $0x2c] sm:$0xf]
      %v3132 = vld [vmem:[%s3119 + $0x30] sm:$0xf]
      %v3133 = vld [vmem:[%s3119 + $0x34] sm:$0xf]
      %v3134 = vld [vmem:[%s3119 + $0x38] sm:$0xf]
      %v3135 = vld [vmem:[%s3119 + $0x3c] sm:$0xf]
      %s3136 = scalar_lea.vmem %s11, 4
      %v3137 = vld [vmem:[%s3136] sm:$0x1]
      %v3138 = vld [vmem:[%s3136 + $0x1] sm:$0x1]
      %v3139 = vld [vmem:[%s3136 + $0x2] sm:$0x1]
      %v3140 = vld [vmem:[%s3136 + $0x3] sm:$0x1]
      %v3145 = vlaneseq
      %v3146 = vshrl.u32 %v3145, 7
      %v3147 = vsub.s32 0, %v3146
      %v3148 = vrot.slane %v3137, %v3147
      %v3149 = vlaneseq
      %v3150 = vshrl.u32 %v3149, 7
      %v3151 = vsub.s32 0, %v3150
      %v3152 = vrot.slane %v3138, %v3151
      %v3153 = vlaneseq
      %v3154 = vshrl.u32 %v3153, 7
      %v3155 = vsub.s32 0, %v3154
      %v3156 = vrot.slane %v3139, %v3155
      %v3157 = vlaneseq
      %v3158 = vshrl.u32 %v3157, 7
      %v3159 = vsub.s32 0, %v3158
      %v3160 = vrot.slane %v3140, %v3159
      %v3169 = vunpack.c.l.b16 %v3120
      %v3170 = vunpack.c.l.b16 %v3121
      %v3171 = vunpack.c.l.b16 %v3122
      %v3172 = vunpack.c.l.b16 %v3123
      %v3173 = vpack.c.b16 %v3170, %v3169
      %v3174 = vpack.c.b16 %v3172, %v3171
      %3177 = vmatprep.subr.bf16.mxu0 0
      %3178 = vmatpush1.bf16.msra.mxu0 %v3173
      %3179 = vmatprep.subr.bf16.mxu0 0
      %3180 = vmatpush1.bf16.msra.mxu0 %v3174
      %3181 = vmatprep.subr.bf16.mxu0 0
      %3182 = vmatpush1.bf16.msra.mxu0 0
      %3183 = vmatprep.subr.bf16.mxu0 0
      %3184 = vmatpush1.bf16.msra.mxu0 0
      %3185 = vmatprep.subr.bf16.mxu0 0
      %3186 = vmatpush1.bf16.msra.mxu0 0
      %3187 = vmatprep.subr.bf16.mxu0 0
      %3188 = vmatpush1.bf16.msra.mxu0 0
      %3189 = vmatprep.subr.bf16.mxu0 0
      %3190 = vmatpush1.bf16.msra.mxu0 0
      %3191 = vmatprep.subr.bf16.mxu0 0
      %3192 = vmatpush1.bf16.msra.mxu0 0
      %3193 = vmatprep.subr.bf16.mxu0 0
      %3194 = vmatpush1.bf16.msra.mxu0 0
      %3195 = vmatprep.subr.bf16.mxu0 0
      %3196 = vmatpush1.bf16.msra.mxu0 0
      %3197 = vmatprep.subr.bf16.mxu0 0
      %3198 = vmatpush1.bf16.msra.mxu0 0
      %3199 = vmatprep.subr.bf16.mxu0 0
      %3200 = vmatpush1.bf16.msra.mxu0 0
      %3201 = vmatprep.subr.bf16.mxu0 0
      %3202 = vmatpush1.bf16.msra.mxu0 0
      %3203 = vmatprep.subr.bf16.mxu0 0
      %3204 = vmatpush1.bf16.msra.mxu0 0
      %3205 = vmatprep.subr.bf16.mxu0 0
      %3206 = vmatpush1.bf16.msra.mxu0 0
      %3207 = vmatprep.subr.bf16.mxu0 0
      %3208 = vmatpush1.bf16.msra.mxu0 0
      %3209 = vmatprep.mubr.bf16.mxu0 0
      %3210 = vmatmul.mubr.bf16.gmra.mrb[0].mxu0 %v2667
      %v3211 = vpop.f32.mrb[0].mxu0
      %v3212 = vadd.f32 %v3148, %v3211
      %v3213 = vpop.f32.mrb[0].mxu0
      %v3214 = vpop.f32.mrb[0].mxu0
      %v3215 = vpop.f32.mrb[0].mxu0
      %3216 = vdwg.mxu0
      %v3221 = vunpack.c.l.b16 %v3124
      %v3222 = vunpack.c.l.b16 %v3125
      %v3223 = vunpack.c.l.b16 %v3126
      %v3224 = vunpack.c.l.b16 %v3127
      %v3225 = vpack.c.b16 %v3222, %v3221
      %v3226 = vpack.c.b16 %v3224, %v3223
      %3229 = vmatprep.subr.bf16.mxu0 0
      %3230 = vmatpush1.bf16.msra.mxu0 %v3225
      %3231 = vmatprep.subr.bf16.mxu0 0
      %3232 = vmatpush1.bf16.msra.mxu0 %v3226
      %3233 = vmatprep.subr.bf16.mxu0 0
      %3234 = vmatpush1.bf16.msra.mxu0 0
      %3235 = vmatprep.subr.bf16.mxu0 0
      %3236 = vmatpush1.bf16.msra.mxu0 0
      %3237 = vmatprep.subr.bf16.mxu0 0
      %3238 = vmatpush1.bf16.msra.mxu0 0
      %3239 = vmatprep.subr.bf16.mxu0 0
      %3240 = vmatpush1.bf16.msra.mxu0 0
      %3241 = vmatprep.subr.bf16.mxu0 0
      %3242 = vmatpush1.bf16.msra.mxu0 0
      %3243 = vmatprep.subr.bf16.mxu0 0
      %3244 = vmatpush1.bf16.msra.mxu0 0
      %3245 = vmatprep.subr.bf16.mxu0 0
      %3246 = vmatpush1.bf16.msra.mxu0 0
      %3247 = vmatprep.subr.bf16.mxu0 0
      %3248 = vmatpush1.bf16.msra.mxu0 0
      %3249 = vmatprep.subr.bf16.mxu0 0
      %3250 = vmatpush1.bf16.msra.mxu0 0
      %3251 = vmatprep.subr.bf16.mxu0 0
      %3252 = vmatpush1.bf16.msra.mxu0 0
      %3253 = vmatprep.subr.bf16.mxu0 0
      %3254 = vmatpush1.bf16.msra.mxu0 0
      %3255 = vmatprep.subr.bf16.mxu0 0
      %3256 = vmatpush1.bf16.msra.mxu0 0
      %3257 = vmatprep.subr.bf16.mxu0 0
      %3258 = vmatpush1.bf16.msra.mxu0 0
      %3259 = vmatprep.subr.bf16.mxu0 0
      %3260 = vmatpush1.bf16.msra.mxu0 0
      %3261 = vmatprep.mubr.bf16.mxu0 0
      %3262 = vmatmul.mubr.bf16.gmra.mrb[0].mxu0 %v2667
      %v3263 = vpop.f32.mrb[0].mxu0
      %v3264 = vadd.f32 %v3152, %v3263
      %v3265 = vpop.f32.mrb[0].mxu0
      %v3266 = vpop.f32.mrb[0].mxu0
      %v3267 = vpop.f32.mrb[0].mxu0
      %3268 = vdwg.mxu0
      %v3273 = vunpack.c.l.b16 %v3128
      %v3274 = vunpack.c.l.b16 %v3129
      %v3275 = vunpack.c.l.b16 %v3130
      %v3276 = vunpack.c.l.b16 %v3131
      %v3277 = vpack.c.b16 %v3274, %v3273
      %v3278 = vpack.c.b16 %v3276, %v3275
      %3281 = vmatprep.subr.bf16.mxu0 0
      %3282 = vmatpush1.bf16.msra.mxu0 %v3277
      %3283 = vmatprep.subr.bf16.mxu0 0
      %3284 = vmatpush1.bf16.msra.mxu0 %v3278
      %3285 = vmatprep.subr.bf16.mxu0 0
      %3286 = vmatpush1.bf16.msra.mxu0 0
      %3287 = vmatprep.subr.bf16.mxu0 0
      %3288 = vmatpush1.bf16.msra.mxu0 0
      %3289 = vmatprep.subr.bf16.mxu0 0
      %3290 = vmatpush1.bf16.msra.mxu0 0
      %3291 = vmatprep.subr.bf16.mxu0 0
      %3292 = vmatpush1.bf16.msra.mxu0 0
      %3293 = vmatprep.subr.bf16.mxu0 0
      %3294 = vmatpush1.bf16.msra.mxu0 0
      %3295 = vmatprep.subr.bf16.mxu0 0
      %3296 = vmatpush1.bf16.msra.mxu0 0
      %3297 = vmatprep.subr.bf16.mxu0 0
      %3298 = vmatpush1.bf16.msra.mxu0 0
      %3299 = vmatprep.subr.bf16.mxu0 0
      %3300 = vmatpush1.bf16.msra.mxu0 0
      %3301 = vmatprep.subr.bf16.mxu0 0
      %3302 = vmatpush1.bf16.msra.mxu0 0
      %3303 = vmatprep.subr.bf16.mxu0 0
      %3304 = vmatpush1.bf16.msra.mxu0 0
      %3305 = vmatprep.subr.bf16.mxu0 0
      %3306 = vmatpush1.bf16.msra.mxu0 0
      %3307 = vmatprep.subr.bf16.mxu0 0
      %3308 = vmatpush1.bf16.msra.mxu0 0
      %3309 = vmatprep.subr.bf16.mxu0 0
      %3310 = vmatpush1.bf16.msra.mxu0 0
      %3311 = vmatprep.subr.bf16.mxu0 0
      %3312 = vmatpush1.bf16.msra.mxu0 0
      %3313 = vmatprep.mubr.bf16.mxu0 0
      %3314 = vmatmul.mubr.bf16.gmra.mrb[0].mxu0 %v2667
      %v3315 = vpop.f32.mrb[0].mxu0
      %v3316 = vadd.f32 %v3156, %v3315
      %v3317 = vpop.f32.mrb[0].mxu0
      %v3318 = vpop.f32.mrb[0].mxu0
      %v3319 = vpop.f32.mrb[0].mxu0
      %3320 = vdwg.mxu0
      %v3325 = vunpack.c.l.b16 %v3132
      %v3326 = vunpack.c.l.b16 %v3133
      %v3327 = vunpack.c.l.b16 %v3134
      %v3328 = vunpack.c.l.b16 %v3135
      %v3329 = vpack.c.b16 %v3326, %v3325
      %v3330 = vpack.c.b16 %v3328, %v3327
      %3333 = vmatprep.subr.bf16.mxu0 0
      %3334 = vmatpush1.bf16.msra.mxu0 %v3329
      %3335 = vmatprep.subr.bf16.mxu0 0
      %3336 = vmatpush1.bf16.msra.mxu0 %v3330
      %3337 = vmatprep.subr.bf16.mxu0 0
      %3338 = vmatpush1.bf16.msra.mxu0 0
      %3339 = vmatprep.subr.bf16.mxu0 0
      %3340 = vmatpush1.bf16.msra.mxu0 0
      %3341 = vmatprep.subr.bf16.mxu0 0
      %3342 = vmatpush1.bf16.msra.mxu0 0
      %3343 = vmatprep.subr.bf16.mxu0 0
      %3344 = vmatpush1.bf16.msra.mxu0 0
      %3345 = vmatprep.subr.bf16.mxu0 0
      %3346 = vmatpush1.bf16.msra.mxu0 0
      %3347 = vmatprep.subr.bf16.mxu0 0
      %3348 = vmatpush1.bf16.msra.mxu0 0
      %3349 = vmatprep.subr.bf16.mxu0 0
      %3350 = vmatpush1.bf16.msra.mxu0 0
      %3351 = vmatprep.subr.bf16.mxu0 0
      %3352 = vmatpush1.bf16.msra.mxu0 0
      %3353 = vmatprep.subr.bf16.mxu0 0
      %3354 = vmatpush1.bf16.msra.mxu0 0
      %3355 = vmatprep.subr.bf16.mxu0 0
      %3356 = vmatpush1.bf16.msra.mxu0 0
      %3357 = vmatprep.subr.bf16.mxu0 0
      %3358 = vmatpush1.bf16.msra.mxu0 0
      %3359 = vmatprep.subr.bf16.mxu0 0
      %3360 = vmatpush1.bf16.msra.mxu0 0
      %3361 = vmatprep.subr.bf16.mxu0 0
      %3362 = vmatpush1.bf16.msra.mxu0 0
      %3363 = vmatprep.subr.bf16.mxu0 0
      %3364 = vmatpush1.bf16.msra.mxu0 0
      %3365 = vmatprep.mubr.bf16.mxu0 0
      %3366 = vmatmul.mubr.bf16.gmra.mrb[0].mxu0 %v2667
      %v3367 = vpop.f32.mrb[0].mxu0
      %v3368 = vadd.f32 %v3160, %v3367
      %v3369 = vpop.f32.mrb[0].mxu0
      %v3370 = vpop.f32.mrb[0].mxu0
      %v3371 = vpop.f32.mrb[0].mxu0
      %3372 = vdwg.mxu0
      %v3373 = vpack.c.bf16 %v2704, %v2704
      %v3374 = vpack.c.bf16 %v2756, %v2756
      %v3375 = vpack.c.bf16 %v2808, %v2808
      %v3376 = vpack.c.bf16 %v2860, %v2860
      %v3377 = vpack.c.bf16 %v2958, %v2958
      %v3378 = vpack.c.bf16 %v3010, %v3010
      %v3379 = vpack.c.bf16 %v3062, %v3062
      %v3380 = vpack.c.bf16 %v3114, %v3114
      %v3382 = vsel %vm1755, %v3373, 0
      %v3385 = vsel %vm1755, %v3377, 0
      %3387 = vmatprep.subr.bf16.mxu0 0
      %3388 = vmatpush1.bf16.xpose.msra.mxu0 %v3385
      %3389 = vmatprep.subr.bf16.mxu0 0
      %3390 = vmatpush1.bf16.xpose.msra.mxu0 0
      %3391 = vmatprep.subr.bf16.mxu0 0
      %3392 = vmatpush1.bf16.xpose.msra.mxu0 0
      %3393 = vmatprep.subr.bf16.mxu0 0
      %3394 = vmatpush1.bf16.xpose.msra.mxu0 0
      %3395 = vmatprep.subr.bf16.mxu0 0
      %3396 = vmatpush1.bf16.xpose.msra.mxu0 0
      %3397 = vmatprep.subr.bf16.mxu0 0
      %3398 = vmatpush1.bf16.xpose.msra.mxu0 0
      %3399 = vmatprep.subr.bf16.mxu0 0
      %3400 = vmatpush1.bf16.xpose.msra.mxu0 0
      %3401 = vmatprep.subr.bf16.mxu0 0
      %3402 = vmatpush1.bf16.xpose.msra.mxu0 0
      %3403 = vmatprep.subr.bf16.mxu0 0
      %3404 = vmatpush1.bf16.xpose.msra.mxu0 0
      %3405 = vmatprep.subr.bf16.mxu0 0
      %3406 = vmatpush1.bf16.xpose.msra.mxu0 0
      %3407 = vmatprep.subr.bf16.mxu0 0
      %3408 = vmatpush1.bf16.xpose.msra.mxu0 0
      %3409 = vmatprep.subr.bf16.mxu0 0
      %3410 = vmatpush1.bf16.xpose.msra.mxu0 0
      %3411 = vmatprep.subr.bf16.mxu0 0
      %3412 = vmatpush1.bf16.xpose.msra.mxu0 0
      %3413 = vmatprep.subr.bf16.mxu0 0
      %3414 = vmatpush1.bf16.xpose.msra.mxu0 0
      %3415 = vmatprep.subr.bf16.mxu0 0
      %3416 = vmatpush1.bf16.xpose.msra.mxu0 0
      %3417 = vmatprep.subr.bf16.mxu0 0
      %3418 = vmatpush1.bf16.xpose.msra.mxu0 0
      %3419 = vmatprep.mubr.bf16.mxu0 0
      %3420 = vmatmul.mubr.bf16.gmra.mrb[0].mxu0 %v3382
      %v3421 = vpop.f32.mrb[0].mxu0
      %v3422 = vadd.f32 %v955, %v3421
      %v3423 = vpop.f32.mrb[0].mxu0
      %v3424 = vpop.f32.mrb[0].mxu0
      %v3425 = vpop.f32.mrb[0].mxu0
      %3426 = vdwg.mxu0
      %v3428 = vsel %vm1755, %v3374, 0
      %v3431 = vsel %vm1755, %v3378, 0
      %3433 = vmatprep.subr.bf16.mxu0 0
      %3434 = vmatpush1.bf16.xpose.msra.mxu0 %v3431
      %3435 = vmatprep.subr.bf16.mxu0 0
      %3436 = vmatpush1.bf16.xpose.msra.mxu0 0
      %3437 = vmatprep.subr.bf16.mxu0 0
      %3438 = vmatpush1.bf16.xpose.msra.mxu0 0
      %3439 = vmatprep.subr.bf16.mxu0 0
      %3440 = vmatpush1.bf16.xpose.msra.mxu0 0
      %3441 = vmatprep.subr.bf16.mxu0 0
      %3442 = vmatpush1.bf16.xpose.msra.mxu0 0
      %3443 = vmatprep.subr.bf16.mxu0 0
      %3444 = vmatpush1.bf16.xpose.msra.mxu0 0
      %3445 = vmatprep.subr.bf16.mxu0 0
      %3446 = vmatpush1.bf16.xpose.msra.mxu0 0
      %3447 = vmatprep.subr.bf16.mxu0 0
      %3448 = vmatpush1.bf16.xpose.msra.mxu0 0
      %3449 = vmatprep.subr.bf16.mxu0 0
      %3450 = vmatpush1.bf16.xpose.msra.mxu0 0
      %3451 = vmatprep.subr.bf16.mxu0 0
      %3452 = vmatpush1.bf16.xpose.msra.mxu0 0
      %3453 = vmatprep.subr.bf16.mxu0 0
      %3454 = vmatpush1.bf16.xpose.msra.mxu0 0
      %3455 = vmatprep.subr.bf16.mxu0 0
      %3456 = vmatpush1.bf16.xpose.msra.mxu0 0
      %3457 = vmatprep.subr.bf16.mxu0 0
      %3458 = vmatpush1.bf16.xpose.msra.mxu0 0
      %3459 = vmatprep.subr.bf16.mxu0 0
      %3460 = vmatpush1.bf16.xpose.msra.mxu0 0
      %3461 = vmatprep.subr.bf16.mxu0 0
      %3462 = vmatpush1.bf16.xpose.msra.mxu0 0
      %3463 = vmatprep.subr.bf16.mxu0 0
      %3464 = vmatpush1.bf16.xpose.msra.mxu0 0
      %3465 = vmatprep.mubr.bf16.mxu0 0
      %3466 = vmatmul.mubr.bf16.gmra.mrb[0].mxu0 %v3428
      %v3467 = vpop.f32.mrb[0].mxu0
      %v3468 = vadd.f32 %v955, %v3467
      %v3469 = vpop.f32.mrb[0].mxu0
      %v3470 = vpop.f32.mrb[0].mxu0
      %v3471 = vpop.f32.mrb[0].mxu0
      %3472 = vdwg.mxu0
      %v3474 = vsel %vm1755, %v3375, 0
      %v3477 = vsel %vm1755, %v3379, 0
      %3479 = vmatprep.subr.bf16.mxu0 0
      %3480 = vmatpush1.bf16.xpose.msra.mxu0 %v3477
      %3481 = vmatprep.subr.bf16.mxu0 0
      %3482 = vmatpush1.bf16.xpose.msra.mxu0 0
      %3483 = vmatprep.subr.bf16.mxu0 0
      %3484 = vmatpush1.bf16.xpose.msra.mxu0 0
      %3485 = vmatprep.subr.bf16.mxu0 0
      %3486 = vmatpush1.bf16.xpose.msra.mxu0 0
      %3487 = vmatprep.subr.bf16.mxu0 0
      %3488 = vmatpush1.bf16.xpose.msra.mxu0 0
      %3489 = vmatprep.subr.bf16.mxu0 0
      %3490 = vmatpush1.bf16.xpose.msra.mxu0 0
      %3491 = vmatprep.subr.bf16.mxu0 0
      %3492 = vmatpush1.bf16.xpose.msra.mxu0 0
      %3493 = vmatprep.subr.bf16.mxu0 0
      %3494 = vmatpush1.bf16.xpose.msra.mxu0 0
      %3495 = vmatprep.subr.bf16.mxu0 0
      %3496 = vmatpush1.bf16.xpose.msra.mxu0 0
      %3497 = vmatprep.subr.bf16.mxu0 0
      %3498 = vmatpush1.bf16.xpose.msra.mxu0 0
      %3499 = vmatprep.subr.bf16.mxu0 0
      %3500 = vmatpush1.bf16.xpose.msra.mxu0 0
      %3501 = vmatprep.subr.bf16.mxu0 0
      %3502 = vmatpush1.bf16.xpose.msra.mxu0 0
      %3503 = vmatprep.subr.bf16.mxu0 0
      %3504 = vmatpush1.bf16.xpose.msra.mxu0 0
      %3505 = vmatprep.subr.bf16.mxu0 0
      %3506 = vmatpush1.bf16.xpose.msra.mxu0 0
      %3507 = vmatprep.subr.bf16.mxu0 0
      %3508 = vmatpush1.bf16.xpose.msra.mxu0 0
      %3509 = vmatprep.subr.bf16.mxu0 0
      %3510 = vmatpush1.bf16.xpose.msra.mxu0 0
      %3511 = vmatprep.mubr.bf16.mxu0 0
      %3512 = vmatmul.mubr.bf16.gmra.mrb[0].mxu0 %v3474
      %v3513 = vpop.f32.mrb[0].mxu0
      %v3514 = vadd.f32 %v955, %v3513
      %v3515 = vpop.f32.mrb[0].mxu0
      %v3516 = vpop.f32.mrb[0].mxu0
      %v3517 = vpop.f32.mrb[0].mxu0
      %3518 = vdwg.mxu0
      %v3520 = vsel %vm1755, %v3376, 0
      %v3523 = vsel %vm1755, %v3380, 0
      %3525 = vmatprep.subr.bf16.mxu0 0
      %3526 = vmatpush1.bf16.xpose.msra.mxu0 %v3523
      %3527 = vmatprep.subr.bf16.mxu0 0
      %3528 = vmatpush1.bf16.xpose.msra.mxu0 0
      %3529 = vmatprep.subr.bf16.mxu0 0
      %3530 = vmatpush1.bf16.xpose.msra.mxu0 0
      %3531 = vmatprep.subr.bf16.mxu0 0
      %3532 = vmatpush1.bf16.xpose.msra.mxu0 0
      %3533 = vmatprep.subr.bf16.mxu0 0
      %3534 = vmatpush1.bf16.xpose.msra.mxu0 0
      %3535 = vmatprep.subr.bf16.mxu0 0
      %3536 = vmatpush1.bf16.xpose.msra.mxu0 0
      %3537 = vmatprep.subr.bf16.mxu0 0
      %3538 = vmatpush1.bf16.xpose.msra.mxu0 0
      %3539 = vmatprep.subr.bf16.mxu0 0
      %3540 = vmatpush1.bf16.xpose.msra.mxu0 0
      %3541 = vmatprep.subr.bf16.mxu0 0
      %3542 = vmatpush1.bf16.xpose.msra.mxu0 0
      %3543 = vmatprep.subr.bf16.mxu0 0
      %3544 = vmatpush1.bf16.xpose.msra.mxu0 0
      %3545 = vmatprep.subr.bf16.mxu0 0
      %3546 = vmatpush1.bf16.xpose.msra.mxu0 0
      %3547 = vmatprep.subr.bf16.mxu0 0
      %3548 = vmatpush1.bf16.xpose.msra.mxu0 0
      %3549 = vmatprep.subr.bf16.mxu0 0
      %3550 = vmatpush1.bf16.xpose.msra.mxu0 0
      %3551 = vmatprep.subr.bf16.mxu0 0
      %3552 = vmatpush1.bf16.xpose.msra.mxu0 0
      %3553 = vmatprep.subr.bf16.mxu0 0
      %3554 = vmatpush1.bf16.xpose.msra.mxu0 0
      %3555 = vmatprep.subr.bf16.mxu0 0
      %3556 = vmatpush1.bf16.xpose.msra.mxu0 0
      %3557 = vmatprep.mubr.bf16.mxu0 0
      %3558 = vmatmul.mubr.bf16.gmra.mrb[0].mxu0 %v3520
      %v3559 = vpop.f32.mrb[0].mxu0
      %v3560 = vadd.f32 %v955, %v3559
      %v3561 = vpop.f32.mrb[0].mxu0
      %v3562 = vpop.f32.mrb[0].mxu0
      %v3563 = vpop.f32.mrb[0].mxu0
      %3564 = vdwg.mxu0
      %v3565 = vsel %vm1755, %v3422, -inf
      %3566 = vmax.xlane.f32.xlu0 %v3565
      %v3567 = vpop.xlane.xlu0 %3566
      %v3568 = vsel %vm1755, %v3468, -inf
      %3569 = vmax.xlane.f32.xlu0 %v3568
      %v3570 = vpop.xlane.xlu0 %3569
      %v3571 = vsel %vm1755, %v3514, -inf
      %3572 = vmax.xlane.f32.xlu0 %v3571
      %v3573 = vpop.xlane.xlu0 %3572
      %v3574 = vsel %vm1755, %v3560, -inf
      %3575 = vmax.xlane.f32.xlu0 %v3574
      %v3576 = vpop.xlane.xlu0 %3575
      %v3577 = vsub.f32 %v3422, %v3567
      %v3578 = vsub.f32 %v3468, %v3570
      %v3579 = vsub.f32 %v3514, %v3573
      %v3580 = vsub.f32 %v3560, %v3576
      %v3581 = vmul.f32 %v3577, 1.442695
      %v3582 = vpow.pop %v3581
      %v3583 = vmul.f32 %v3578, 1.442695
      %v3584 = vpow.pop %v3583
      %v3585 = vmul.f32 %v3579, 1.442695
      %v3586 = vpow.pop %v3585
      %v3587 = vmul.f32 %v3580, 1.442695
      %v3588 = vpow.pop %v3587
      %v3589 = vsel %vm1755, %v3582, 0.0
      %3590 = vadd.xlane.f32.xlu0 %v3589
      %v3591 = vpop.xlane.xlu0 %3590
      %v3592 = vsel %vm1755, %v3584, 0.0
      %3593 = vadd.xlane.f32.xlu0 %v3592
      %v3594 = vpop.xlane.xlu0 %3593
      %v3595 = vsel %vm1755, %v3586, 0.0
      %3596 = vadd.xlane.f32.xlu0 %v3595
      %v3597 = vpop.xlane.xlu0 %3596
      %v3598 = vsel %vm1755, %v3588, 0.0
      %3599 = vadd.xlane.f32.xlu0 %v3598
      %v3600 = vpop.xlane.xlu0 %3599
      %v3601 = vrcp.pop %v3591
      %v3602 = vrcp.pop %v3594
      %v3603 = vrcp.pop %v3597
      %v3604 = vrcp.pop %v3600
      %v3605 = vmul.f32 %v3582, %v3601
      %v3606 = vmul.f32 %v3584, %v3602
      %v3607 = vmul.f32 %v3586, %v3603
      %v3608 = vmul.f32 %v3588, %v3604
      %v3609 = vpack.c.bf16 %v3605, %v3605
      %v3610 = vpack.c.bf16 %v3606, %v3606
      %v3611 = vpack.c.bf16 %v3607, %v3607
      %v3612 = vpack.c.bf16 %v3608, %v3608
      %v3613 = vpack.c.bf16 %v3212, %v3212
      %v3614 = vpack.c.bf16 %v3264, %v3264
      %v3615 = vpack.c.bf16 %v3316, %v3316
      %v3616 = vpack.c.bf16 %v3368, %v3368
      %v3618 = vsel %vm1755, %v3609, 0
      %v3621 = vsel %vm1995, %v3613, 0
      %3623 = vmatprep.subr.bf16.mxu0 0
      %3624 = vmatpush1.bf16.msra.mxu0 %v3621
      %3625 = vmatprep.subr.bf16.mxu0 0
      %3626 = vmatpush1.bf16.msra.mxu0 0
      %3627 = vmatprep.subr.bf16.mxu0 0
      %3628 = vmatpush1.bf16.msra.mxu0 0
      %3629 = vmatprep.subr.bf16.mxu0 0
      %3630 = vmatpush1.bf16.msra.mxu0 0
      %3631 = vmatprep.subr.bf16.mxu0 0
      %3632 = vmatpush1.bf16.msra.mxu0 0
      %3633 = vmatprep.subr.bf16.mxu0 0
      %3634 = vmatpush1.bf16.msra.mxu0 0
      %3635 = vmatprep.subr.bf16.mxu0 0
      %3636 = vmatpush1.bf16.msra.mxu0 0
      %3637 = vmatprep.subr.bf16.mxu0 0
      %3638 = vmatpush1.bf16.msra.mxu0 0
      %3639 = vmatprep.subr.bf16.mxu0 0
      %3640 = vmatpush1.bf16.msra.mxu0 0
      %3641 = vmatprep.subr.bf16.mxu0 0
      %3642 = vmatpush1.bf16.msra.mxu0 0
      %3643 = vmatprep.subr.bf16.mxu0 0
      %3644 = vmatpush1.bf16.msra.mxu0 0
      %3645 = vmatprep.subr.bf16.mxu0 0
      %3646 = vmatpush1.bf16.msra.mxu0 0
      %3647 = vmatprep.subr.bf16.mxu0 0
      %3648 = vmatpush1.bf16.msra.mxu0 0
      %3649 = vmatprep.subr.bf16.mxu0 0
      %3650 = vmatpush1.bf16.msra.mxu0 0
      %3651 = vmatprep.subr.bf16.mxu0 0
      %3652 = vmatpush1.bf16.msra.mxu0 0
      %3653 = vmatprep.subr.bf16.mxu0 0
      %3654 = vmatpush1.bf16.msra.mxu0 0
      %3655 = vmatprep.mubr.bf16.mxu0 0
      %3656 = vmatmul.mubr.bf16.gmra.mrb[0].mxu0 %v3618
      %v3657 = vpop.f32.mrb[0].mxu0
      %v3658 = vadd.f32 0.0, %v3657
      %v3659 = vpop.f32.mrb[0].mxu0
      %v3660 = vpop.f32.mrb[0].mxu0
      %v3661 = vpop.f32.mrb[0].mxu0
      %3662 = vdwg.mxu0
      %v3664 = vsel %vm1755, %v3610, 0
      %v3667 = vsel %vm1995, %v3614, 0
      %3669 = vmatprep.subr.bf16.mxu0 0
      %3670 = vmatpush1.bf16.msra.mxu0 %v3667
      %3671 = vmatprep.subr.bf16.mxu0 0
      %3672 = vmatpush1.bf16.msra.mxu0 0
      %3673 = vmatprep.subr.bf16.mxu0 0
      %3674 = vmatpush1.bf16.msra.mxu0 0
      %3675 = vmatprep.subr.bf16.mxu0 0
      %3676 = vmatpush1.bf16.msra.mxu0 0
      %3677 = vmatprep.subr.bf16.mxu0 0
      %3678 = vmatpush1.bf16.msra.mxu0 0
      %3679 = vmatprep.subr.bf16.mxu0 0
      %3680 = vmatpush1.bf16.msra.mxu0 0
      %3681 = vmatprep.subr.bf16.mxu0 0
      %3682 = vmatpush1.bf16.msra.mxu0 0
      %3683 = vmatprep.subr.bf16.mxu0 0
      %3684 = vmatpush1.bf16.msra.mxu0 0
      %3685 = vmatprep.subr.bf16.mxu0 0
      %3686 = vmatpush1.bf16.msra.mxu0 0
      %3687 = vmatprep.subr.bf16.mxu0 0
      %3688 = vmatpush1.bf16.msra.mxu0 0
      %3689 = vmatprep.subr.bf16.mxu0 0
      %3690 = vmatpush1.bf16.msra.mxu0 0
      %3691 = vmatprep.subr.bf16.mxu0 0
      %3692 = vmatpush1.bf16.msra.mxu0 0
      %3693 = vmatprep.subr.bf16.mxu0 0
      %3694 = vmatpush1.bf16.msra.mxu0 0
      %3695 = vmatprep.subr.bf16.mxu0 0
      %3696 = vmatpush1.bf16.msra.mxu0 0
      %3697 = vmatprep.subr.bf16.mxu0 0
      %3698 = vmatpush1.bf16.msra.mxu0 0
      %3699 = vmatprep.subr.bf16.mxu0 0
      %3700 = vmatpush1.bf16.msra.mxu0 0
      %3701 = vmatprep.mubr.bf16.mxu0 0
      %3702 = vmatmul.mubr.bf16.gmra.mrb[0].mxu0 %v3664
      %v3703 = vpop.f32.mrb[0].mxu0
      %v3704 = vadd.f32 0.0, %v3703
      %v3705 = vpop.f32.mrb[0].mxu0
      %v3706 = vpop.f32.mrb[0].mxu0
      %v3707 = vpop.f32.mrb[0].mxu0
      %3708 = vdwg.mxu0
      %v3710 = vsel %vm1755, %v3611, 0
      %v3713 = vsel %vm1995, %v3615, 0
      %3715 = vmatprep.subr.bf16.mxu0 0
      %3716 = vmatpush1.bf16.msra.mxu0 %v3713
      %3717 = vmatprep.subr.bf16.mxu0 0
      %3718 = vmatpush1.bf16.msra.mxu0 0
      %3719 = vmatprep.subr.bf16.mxu0 0
      %3720 = vmatpush1.bf16.msra.mxu0 0
      %3721 = vmatprep.subr.bf16.mxu0 0
      %3722 = vmatpush1.bf16.msra.mxu0 0
      %3723 = vmatprep.subr.bf16.mxu0 0
      %3724 = vmatpush1.bf16.msra.mxu0 0
      %3725 = vmatprep.subr.bf16.mxu0 0
      %3726 = vmatpush1.bf16.msra.mxu0 0
      %3727 = vmatprep.subr.bf16.mxu0 0
      %3728 = vmatpush1.bf16.msra.mxu0 0
      %3729 = vmatprep.subr.bf16.mxu0 0
      %3730 = vmatpush1.bf16.msra.mxu0 0
      %3731 = vmatprep.subr.bf16.mxu0 0
      %3732 = vmatpush1.bf16.msra.mxu0 0
      %3733 = vmatprep.subr.bf16.mxu0 0
      %3734 = vmatpush1.bf16.msra.mxu0 0
      %3735 = vmatprep.subr.bf16.mxu0 0
      %3736 = vmatpush1.bf16.msra.mxu0 0
      %3737 = vmatprep.subr.bf16.mxu0 0
      %3738 = vmatpush1.bf16.msra.mxu0 0
      %3739 = vmatprep.subr.bf16.mxu0 0
      %3740 = vmatpush1.bf16.msra.mxu0 0
      %3741 = vmatprep.subr.bf16.mxu0 0
      %3742 = vmatpush1.bf16.msra.mxu0 0
      %3743 = vmatprep.subr.bf16.mxu0 0
      %3744 = vmatpush1.bf16.msra.mxu0 0
      %3745 = vmatprep.subr.bf16.mxu0 0
      %3746 = vmatpush1.bf16.msra.mxu0 0
      %3747 = vmatprep.mubr.bf16.mxu0 0
      %3748 = vmatmul.mubr.bf16.gmra.mrb[0].mxu0 %v3710
      %v3749 = vpop.f32.mrb[0].mxu0
      %v3750 = vadd.f32 0.0, %v3749
      %v3751 = vpop.f32.mrb[0].mxu0
      %v3752 = vpop.f32.mrb[0].mxu0
      %v3753 = vpop.f32.mrb[0].mxu0
      %3754 = vdwg.mxu0
      %v3756 = vsel %vm1755, %v3612, 0
      %v3759 = vsel %vm1995, %v3616, 0
      %3761 = vmatprep.subr.bf16.mxu0 0
      %3762 = vmatpush1.bf16.msra.mxu0 %v3759
      %3763 = vmatprep.subr.bf16.mxu0 0
      %3764 = vmatpush1.bf16.msra.mxu0 0
      %3765 = vmatprep.subr.bf16.mxu0 0
      %3766 = vmatpush1.bf16.msra.mxu0 0
      %3767 = vmatprep.subr.bf16.mxu0 0
      %3768 = vmatpush1.bf16.msra.mxu0 0
      %3769 = vmatprep.subr.bf16.mxu0 0
      %3770 = vmatpush1.bf16.msra.mxu0 0
      %3771 = vmatprep.subr.bf16.mxu0 0
      %3772 = vmatpush1.bf16.msra.mxu0 0
      %3773 = vmatprep.subr.bf16.mxu0 0
      %3774 = vmatpush1.bf16.msra.mxu0 0
      %3775 = vmatprep.subr.bf16.mxu0 0
      %3776 = vmatpush1.bf16.msra.mxu0 0
      %3777 = vmatprep.subr.bf16.mxu0 0
      %3778 = vmatpush1.bf16.msra.mxu0 0
      %3779 = vmatprep.subr.bf16.mxu0 0
      %3780 = vmatpush1.bf16.msra.mxu0 0
      %3781 = vmatprep.subr.bf16.mxu0 0
      %3782 = vmatpush1.bf16.msra.mxu0 0
      %3783 = vmatprep.subr.bf16.mxu0 0
      %3784 = vmatpush1.bf16.msra.mxu0 0
      %3785 = vmatprep.subr.bf16.mxu0 0
      %3786 = vmatpush1.bf16.msra.mxu0 0
      %3787 = vmatprep.subr.bf16.mxu0 0
      %3788 = vmatpush1.bf16.msra.mxu0 0
      %3789 = vmatprep.subr.bf16.mxu0 0
      %3790 = vmatpush1.bf16.msra.mxu0 0
      %3791 = vmatprep.subr.bf16.mxu0 0
      %3792 = vmatpush1.bf16.msra.mxu0 0
      %3793 = vmatprep.mubr.bf16.mxu0 0
      %3794 = vmatmul.mubr.bf16.gmra.mrb[0].mxu0 %v3756
      %v3795 = vpop.f32.mrb[0].mxu0
      %v3796 = vadd.f32 0.0, %v3795
      %v3797 = vpop.f32.mrb[0].mxu0
      %v3798 = vpop.f32.mrb[0].mxu0
      %v3799 = vpop.f32.mrb[0].mxu0
      %3800 = vdwg.mxu0
      %s3801 = scalar_lea.vmem %s12, 16
      %v3802 = vld [vmem:[%s3801] sm:$0xf]
      %v3803 = vld [vmem:[%s3801 + $0x4] sm:$0xf]
      %v3804 = vld [vmem:[%s3801 + $0x8] sm:$0xf]
      %v3805 = vld [vmem:[%s3801 + $0xc] sm:$0xf]
      %v3806 = vpack.c.bf16 %v3658, %v3658
      %v3807 = vpack.c.bf16 %v3704, %v3704
      %v3808 = vpack.c.bf16 %v3750, %v3750
      %v3809 = vpack.c.bf16 %v3796, %v3796
      %v3811 = vsel %vm1755, %v3806, 0
      %v3814 = vsel %vm1995, %v3802, 0
      %3816 = vmatprep.subr.bf16.mxu0 0
      %3817 = vmatpush1.bf16.msra.mxu0 %v3814
      %3818 = vmatprep.subr.bf16.mxu0 0
      %3819 = vmatpush1.bf16.msra.mxu0 0
      %3820 = vmatprep.subr.bf16.mxu0 0
      %3821 = vmatpush1.bf16.msra.mxu0 0
      %3822 = vmatprep.subr.bf16.mxu0 0
      %3823 = vmatpush1.bf16.msra.mxu0 0
      %3824 = vmatprep.subr.bf16.mxu0 0
      %3825 = vmatpush1.bf16.msra.mxu0 0
      %3826 = vmatprep.subr.bf16.mxu0 0
      %3827 = vmatpush1.bf16.msra.mxu0 0
      %3828 = vmatprep.subr.bf16.mxu0 0
      %3829 = vmatpush1.bf16.msra.mxu0 0
      %3830 = vmatprep.subr.bf16.mxu0 0
      %3831 = vmatpush1.bf16.msra.mxu0 0
      %3832 = vmatprep.subr.bf16.mxu0 0
      %3833 = vmatpush1.bf16.msra.mxu0 0
      %3834 = vmatprep.subr.bf16.mxu0 0
      %3835 = vmatpush1.bf16.msra.mxu0 0
      %3836 = vmatprep.subr.bf16.mxu0 0
      %3837 = vmatpush1.bf16.msra.mxu0 0
      %3838 = vmatprep.subr.bf16.mxu0 0
      %3839 = vmatpush1.bf16.msra.mxu0 0
      %3840 = vmatprep.subr.bf16.mxu0 0
      %3841 = vmatpush1.bf16.msra.mxu0 0
      %3842 = vmatprep.subr.bf16.mxu0 0
      %3843 = vmatpush1.bf16.msra.mxu0 0
      %3844 = vmatprep.subr.bf16.mxu0 0
      %3845 = vmatpush1.bf16.msra.mxu0 0
      %3846 = vmatprep.subr.bf16.mxu0 0
      %3847 = vmatpush1.bf16.msra.mxu0 0
      %3848 = vmatprep.mubr.bf16.mxu0 0
      %3849 = vmatmul.mubr.bf16.gmra.mrb[0].mxu0 %v3811
      %v3850 = vpop.f32.mrb[0].mxu0
      %v3851 = vadd.f32 0.0, %v3850
      %v3852 = vpop.f32.mrb[0].mxu0
      %v3853 = vpop.f32.mrb[0].mxu0
      %v3854 = vpop.f32.mrb[0].mxu0
      %3855 = vdwg.mxu0
      %v3857 = vsel %vm1755, %v3807, 0
      %v3860 = vsel %vm1995, %v3803, 0
      %3862 = vmatprep.subr.bf16.mxu0 0
      %3863 = vmatpush1.bf16.msra.mxu0 %v3860
      %3864 = vmatprep.subr.bf16.mxu0 0
      %3865 = vmatpush1.bf16.msra.mxu0 0
      %3866 = vmatprep.subr.bf16.mxu0 0
      %3867 = vmatpush1.bf16.msra.mxu0 0
      %3868 = vmatprep.subr.bf16.mxu0 0
      %3869 = vmatpush1.bf16.msra.mxu0 0
      %3870 = vmatprep.subr.bf16.mxu0 0
      %3871 = vmatpush1.bf16.msra.mxu0 0
      %3872 = vmatprep.subr.bf16.mxu0 0
      %3873 = vmatpush1.bf16.msra.mxu0 0
      %3874 = vmatprep.subr.bf16.mxu0 0
      %3875 = vmatpush1.bf16.msra.mxu0 0
      %3876 = vmatprep.subr.bf16.mxu0 0
      %3877 = vmatpush1.bf16.msra.mxu0 0
      %3878 = vmatprep.subr.bf16.mxu0 0
      %3879 = vmatpush1.bf16.msra.mxu0 0
      %3880 = vmatprep.subr.bf16.mxu0 0
      %3881 = vmatpush1.bf16.msra.mxu0 0
      %3882 = vmatprep.subr.bf16.mxu0 0
      %3883 = vmatpush1.bf16.msra.mxu0 0
      %3884 = vmatprep.subr.bf16.mxu0 0
      %3885 = vmatpush1.bf16.msra.mxu0 0
      %3886 = vmatprep.subr.bf16.mxu0 0
      %3887 = vmatpush1.bf16.msra.mxu0 0
      %3888 = vmatprep.subr.bf16.mxu0 0
      %3889 = vmatpush1.bf16.msra.mxu0 0
      %3890 = vmatprep.subr.bf16.mxu0 0
      %3891 = vmatpush1.bf16.msra.mxu0 0
      %3892 = vmatprep.subr.bf16.mxu0 0
      %3893 = vmatpush1.bf16.msra.mxu0 0
      %3894 = vmatprep.mubr.bf16.mxu0 0
      %3895 = vmatmul.mubr.bf16.gmra.mrb[0].mxu0 %v3857
      %v3896 = vpop.f32.mrb[0].mxu0
      %v3897 = vadd.f32 0.0, %v3896
      %v3898 = vpop.f32.mrb[0].mxu0
      %v3899 = vpop.f32.mrb[0].mxu0
      %v3900 = vpop.f32.mrb[0].mxu0
      %3901 = vdwg.mxu0
      %v3903 = vsel %vm1755, %v3808, 0
      %v3906 = vsel %vm1995, %v3804, 0
      %3908 = vmatprep.subr.bf16.mxu0 0
      %3909 = vmatpush1.bf16.msra.mxu0 %v3906
      %3910 = vmatprep.subr.bf16.mxu0 0
      %3911 = vmatpush1.bf16.msra.mxu0 0
      %3912 = vmatprep.subr.bf16.mxu0 0
      %3913 = vmatpush1.bf16.msra.mxu0 0
      %3914 = vmatprep.subr.bf16.mxu0 0
      %3915 = vmatpush1.bf16.msra.mxu0 0
      %3916 = vmatprep.subr.bf16.mxu0 0
      %3917 = vmatpush1.bf16.msra.mxu0 0
      %3918 = vmatprep.subr.bf16.mxu0 0
      %3919 = vmatpush1.bf16.msra.mxu0 0
      %3920 = vmatprep.subr.bf16.mxu0 0
      %3921 = vmatpush1.bf16.msra.mxu0 0
      %3922 = vmatprep.subr.bf16.mxu0 0
      %3923 = vmatpush1.bf16.msra.mxu0 0
      %3924 = vmatprep.subr.bf16.mxu0 0
      %3925 = vmatpush1.bf16.msra.mxu0 0
      %3926 = vmatprep.subr.bf16.mxu0 0
      %3927 = vmatpush1.bf16.msra.mxu0 0
      %3928 = vmatprep.subr.bf16.mxu0 0
      %3929 = vmatpush1.bf16.msra.mxu0 0
      %3930 = vmatprep.subr.bf16.mxu0 0
      %3931 = vmatpush1.bf16.msra.mxu0 0
      %3932 = vmatprep.subr.bf16.mxu0 0
      %3933 = vmatpush1.bf16.msra.mxu0 0
      %3934 = vmatprep.subr.bf16.mxu0 0
      %3935 = vmatpush1.bf16.msra.mxu0 0
      %3936 = vmatprep.subr.bf16.mxu0 0
      %3937 = vmatpush1.bf16.msra.mxu0 0
      %3938 = vmatprep.subr.bf16.mxu0 0
      %3939 = vmatpush1.bf16.msra.mxu0 0
      %3940 = vmatprep.mubr.bf16.mxu0 0
      %3941 = vmatmul.mubr.bf16.gmra.mrb[0].mxu0 %v3903
      %v3942 = vpop.f32.mrb[0].mxu0
      %v3943 = vadd.f32 0.0, %v3942
      %v3944 = vpop.f32.mrb[0].mxu0
      %v3945 = vpop.f32.mrb[0].mxu0
      %v3946 = vpop.f32.mrb[0].mxu0
      %3947 = vdwg.mxu0
      %v3949 = vsel %vm1755, %v3809, 0
      %v3952 = vsel %vm1995, %v3805, 0
      %3954 = vmatprep.subr.bf16.mxu0 0
      %3955 = vmatpush1.bf16.msra.mxu0 %v3952
      %3956 = vmatprep.subr.bf16.mxu0 0
      %3957 = vmatpush1.bf16.msra.mxu0 0
      %3958 = vmatprep.subr.bf16.mxu0 0
      %3959 = vmatpush1.bf16.msra.mxu0 0
      %3960 = vmatprep.subr.bf16.mxu0 0
      %3961 = vmatpush1.bf16.msra.mxu0 0
      %3962 = vmatprep.subr.bf16.mxu0 0
      %3963 = vmatpush1.bf16.msra.mxu0 0
      %3964 = vmatprep.subr.bf16.mxu0 0
      %3965 = vmatpush1.bf16.msra.mxu0 0
      %3966 = vmatprep.subr.bf16.mxu0 0
      %3967 = vmatpush1.bf16.msra.mxu0 0
      %3968 = vmatprep.subr.bf16.mxu0 0
      %3969 = vmatpush1.bf16.msra.mxu0 0
      %3970 = vmatprep.subr.bf16.mxu0 0
      %3971 = vmatpush1.bf16.msra.mxu0 0
      %3972 = vmatprep.subr.bf16.mxu0 0
      %3973 = vmatpush1.bf16.msra.mxu0 0
      %3974 = vmatprep.subr.bf16.mxu0 0
      %3975 = vmatpush1.bf16.msra.mxu0 0
      %3976 = vmatprep.subr.bf16.mxu0 0
      %3977 = vmatpush1.bf16.msra.mxu0 0
      %3978 = vmatprep.subr.bf16.mxu0 0
      %3979 = vmatpush1.bf16.msra.mxu0 0
      %3980 = vmatprep.subr.bf16.mxu0 0
      %3981 = vmatpush1.bf16.msra.mxu0 0
      %3982 = vmatprep.subr.bf16.mxu0 0
      %3983 = vmatpush1.bf16.msra.mxu0 0
      %3984 = vmatprep.subr.bf16.mxu0 0
      %3985 = vmatpush1.bf16.msra.mxu0 0
      %3986 = vmatprep.mubr.bf16.mxu0 0
      %3987 = vmatmul.mubr.bf16.gmra.mrb[0].mxu0 %v3949
      %v3988 = vpop.f32.mrb[0].mxu0
      %v3989 = vadd.f32 0.0, %v3988
      %v3990 = vpop.f32.mrb[0].mxu0
      %v3991 = vpop.f32.mrb[0].mxu0
      %v3992 = vpop.f32.mrb[0].mxu0
      %3993 = vdwg.mxu0
      %v3994 = vsel %vm958, %v3851, 0.0
      %v3995 = vsel %vm958, %v3897, 0.0
      %v3996 = vadd.f32 %v3994, %v3995
      %v3997 = vsel %vm958, %v3943, 0.0
      %v3998 = vadd.f32 %v3996, %v3997
      %v3999 = vsel %vm958, %v3989, 0.0
      %v4000 = vadd.f32 %v3998, %v3999
      %v4001 = vadd.f32 %v2575, %v4000
      %s4002 = scalar_lea.vmem %s13, 1
      %v4003 = vld [vmem:[%s4002] sm:$0x1]
      %v4005 = vlaneseq
      %v4006 = vshrl.u32 %v4005, 7
      %v4007 = vsub.s32 0, %v4006
      %v4008 = vrot.slane %v4003, %v4007
      %v4010 = vadd.f32 %v4001, %v4008
      %s4011 = scalar_lea.vmem %s14, 1
      %v4012 = vld [vmem:[%s4011] sm:$0x1]
      %s4013 = scalar_lea.vmem %s15, 1
      %v4014 = vld [vmem:[%s4013] sm:$0x1]
      %v4015 = vsel %vm958, %v4010, 0.0
      %4016 = vadd.xlane.f32.xlu0 %v4015
      %v4017 = vpop.xlane.xlu0 %4016
      %v4018 = vmul.f32 %v4017, %v962
      %v4019 = vsub.f32 %v4010, %v4018
      %v4020 = vmul.f32 %v4019, %v4019
      %v4021 = vsel %vm958, %v4020, 0.0
      %4022 = vadd.xlane.f32.xlu0 %v4021
      %v4023 = vpop.xlane.xlu0 %4022
      %v4024 = vmul.f32 %v4023, %v962
      %v4025 = vadd.f32 %v4024, 1e-05
      %v4026 = vrsqrt.pop %v4025
      %v4027 = vmul.f32 %v4019, %v4026
      %v4029 = vlaneseq
      %v4030 = vshrl.u32 %v4029, 7
      %v4031 = vsub.s32 0, %v4030
      %v4032 = vrot.slane %v4012, %v4031
      %v4034 = vmul.f32 %v4027, %v4032
      %v4036 = vlaneseq
      %v4037 = vshrl.u32 %v4036, 7
      %v4038 = vsub.s32 0, %v4037
      %v4039 = vrot.slane %v4014, %v4038
      %v4041 = vadd.f32 %v4034, %v4039
      %s4042 = scalar_lea.vmem %s16, 16
      %v4043 = vld [vmem:[%s4042] sm:$0xf]
      %v4044 = vld [vmem:[%s4042 + $0x4] sm:$0xf]
      %v4045 = vld [vmem:[%s4042 + $0x8] sm:$0xf]
      %v4046 = vld [vmem:[%s4042 + $0xc] sm:$0xf]
      %v4047 = vpack.c.bf16 %v4041, %v4041
      %s4048 = scalar_lea.vmem %s17, 1
      %v4049 = vld [vmem:[%s4048] sm:$0x1]
      %v4051 = vlaneseq
      %v4052 = vshrl.u32 %v4051, 7
      %v4053 = vsub.s32 0, %v4052
      %v4054 = vrot.slane %v4049, %v4053
      %v4060 = vunpack.c.l.b16 %v4043
      %v4061 = vunpack.c.l.b16 %v4044
      %v4062 = vunpack.c.l.b16 %v4045
      %v4063 = vunpack.c.l.b16 %v4046
      %v4064 = vpack.c.b16 %v4061, %v4060
      %v4065 = vpack.c.b16 %v4063, %v4062
      %v4069 = vsel %vm958, %v4047, 0
      %4071 = vmatprep.subr.bf16.mxu0 0
      %4072 = vmatpush1.bf16.msra.mxu0 %v4064
      %4073 = vmatprep.subr.bf16.mxu0 0
      %4074 = vmatpush1.bf16.msra.mxu0 %v4065
      %4075 = vmatprep.subr.bf16.mxu0 0
      %4076 = vmatpush1.bf16.msra.mxu0 0
      %4077 = vmatprep.subr.bf16.mxu0 0
      %4078 = vmatpush1.bf16.msra.mxu0 0
      %4079 = vmatprep.subr.bf16.mxu0 0
      %4080 = vmatpush1.bf16.msra.mxu0 0
      %4081 = vmatprep.subr.bf16.mxu0 0
      %4082 = vmatpush1.bf16.msra.mxu0 0
      %4083 = vmatprep.subr.bf16.mxu0 0
      %4084 = vmatpush1.bf16.msra.mxu0 0
      %4085 = vmatprep.subr.bf16.mxu0 0
      %4086 = vmatpush1.bf16.msra.mxu0 0
      %4087 = vmatprep.subr.bf16.mxu0 0
      %4088 = vmatpush1.bf16.msra.mxu0 0
      %4089 = vmatprep.subr.bf16.mxu0 0
      %4090 = vmatpush1.bf16.msra.mxu0 0
      %4091 = vmatprep.subr.bf16.mxu0 0
      %4092 = vmatpush1.bf16.msra.mxu0 0
      %4093 = vmatprep.subr.bf16.mxu0 0
      %4094 = vmatpush1.bf16.msra.mxu0 0
      %4095 = vmatprep.subr.bf16.mxu0 0
      %4096 = vmatpush1.bf16.msra.mxu0 0
      %4097 = vmatprep.subr.bf16.mxu0 0
      %4098 = vmatpush1.bf16.msra.mxu0 0
      %4099 = vmatprep.subr.bf16.mxu0 0
      %4100 = vmatpush1.bf16.msra.mxu0 0
      %4101 = vmatprep.subr.bf16.mxu0 0
      %4102 = vmatpush1.bf16.msra.mxu0 0
      %4103 = vmatprep.mubr.bf16.mxu0 0
      %4104 = vmatmul.mubr.bf16.gmra.mrb[0].mxu0 %v4069
      %v4105 = vpop.f32.mrb[0].mxu0
      %v4106 = vadd.f32 %v4054, %v4105
      %v4107 = vpop.f32.mrb[0].mxu0
      %v4108 = vpop.f32.mrb[0].mxu0
      %v4109 = vpop.f32.mrb[0].mxu0
      %4110 = vdwg.mxu0
      %v4111 = vmul.f32 %v4106, %v4106
      %v4112 = vmul.f32 %v4106, %v4111
      %v4113 = vmul.f32 %v4112, 0.044715
      %v4114 = vadd.f32 %v4106, %v4113
      %v4115 = vmul.f32 %v4114, 0.7978846
      %v4116 = vtanh.pop %v4115
      %v4117 = vadd.f32 %v4116, 1.0
      %v4118 = vmul.f32 %v4117, 0.5
      %v4119 = vmul.f32 %v4106, %v4118
      %s4120 = scalar_lea.vmem %s18, 32
      %v4121 = vld [vmem:[%s4120] sm:$0xf]
      %v4122 = vld [vmem:[%s4120 + $0x4] sm:$0xf]
      %v4123 = vld [vmem:[%s4120 + $0x8] sm:$0xf]
      %v4124 = vld [vmem:[%s4120 + $0xc] sm:$0xf]
      %v4125 = vld [vmem:[%s4120 + $0x10] sm:$0xf]
      %v4126 = vld [vmem:[%s4120 + $0x14] sm:$0xf]
      %v4127 = vld [vmem:[%s4120 + $0x18] sm:$0xf]
      %v4128 = vld [vmem:[%s4120 + $0x1c] sm:$0xf]
      %v4129 = vpack.c.bf16 %v4119, %v4119
      %v4138 = vunpack.c.l.b16 %v4121
      %v4139 = vunpack.c.l.b16 %v4122
      %v4140 = vunpack.c.l.b16 %v4123
      %v4141 = vunpack.c.l.b16 %v4124
      %v4142 = vunpack.c.l.b16 %v4125
      %v4143 = vunpack.c.l.b16 %v4126
      %v4144 = vunpack.c.l.b16 %v4127
      %v4145 = vunpack.c.l.b16 %v4128
      %v4146 = vpack.c.b16 %v4139, %v4138
      %v4147 = vpack.c.b16 %v4141, %v4140
      %v4148 = vpack.c.b16 %v4143, %v4142
      %v4149 = vpack.c.b16 %v4145, %v4144
      %v4155 = vsel %vm2523, %v4129, 0
      %4157 = vmatprep.subr.bf16.mxu0 0
      %4158 = vmatpush1.bf16.msra.mxu0 %v4146
      %4159 = vmatprep.subr.bf16.mxu0 0
      %4160 = vmatpush1.bf16.msra.mxu0 %v4147
      %4161 = vmatprep.subr.bf16.mxu0 0
      %4162 = vmatpush1.bf16.msra.mxu0 %v4148
      %4163 = vmatprep.subr.bf16.mxu0 0
      %4164 = vmatpush1.bf16.msra.mxu0 %v4149
      %4165 = vmatprep.subr.bf16.mxu0 0
      %4166 = vmatpush1.bf16.msra.mxu0 0
      %4167 = vmatprep.subr.bf16.mxu0 0
      %4168 = vmatpush1.bf16.msra.mxu0 0
      %4169 = vmatprep.subr.bf16.mxu0 0
      %4170 = vmatpush1.bf16.msra.mxu0 0
      %4171 = vmatprep.subr.bf16.mxu0 0
      %4172 = vmatpush1.bf16.msra.mxu0 0
      %4173 = vmatprep.subr.bf16.mxu0 0
      %4174 = vmatpush1.bf16.msra.mxu0 0
      %4175 = vmatprep.subr.bf16.mxu0 0
      %4176 = vmatpush1.bf16.msra.mxu0 0
      %4177 = vmatprep.subr.bf16.mxu0 0
      %4178 = vmatpush1.bf16.msra.mxu0 0
      %4179 = vmatprep.subr.bf16.mxu0 0
      %4180 = vmatpush1.bf16.msra.mxu0 0
      %4181 = vmatprep.subr.bf16.mxu0 0
      %4182 = vmatpush1.bf16.msra.mxu0 0
      %4183 = vmatprep.subr.bf16.mxu0 0
      %4184 = vmatpush1.bf16.msra.mxu0 0
      %4185 = vmatprep.subr.bf16.mxu0 0
      %4186 = vmatpush1.bf16.msra.mxu0 0
      %4187 = vmatprep.subr.bf16.mxu0 0
      %4188 = vmatpush1.bf16.msra.mxu0 0
      %4189 = vmatprep.mubr.bf16.mxu0 0
      %4190 = vmatmul.mubr.bf16.gmra.mrb[0].mxu0 %v4155
      %v4191 = vpop.f32.mrb[0].mxu0
      %v4192 = vadd.f32 0.0, %v4191
      %v4193 = vpop.f32.mrb[0].mxu0
      %v4194 = vpop.f32.mrb[0].mxu0
      %v4195 = vpop.f32.mrb[0].mxu0
      %4196 = vdwg.mxu0
      %v4197 = vadd.f32 %v4010, %v4192
      %s4198 = scalar_lea.vmem %s19, 1
      %v4199 = vld [vmem:[%s4198] sm:$0x1]
      %v4201 = vlaneseq
      %v4202 = vshrl.u32 %v4201, 7
      %v4203 = vsub.s32 0, %v4202
      %v4204 = vrot.slane %v4199, %v4203
      %v4206 = vadd.f32 %v4197, %v4204
      %v4207 = vld [vmem:[%s20] sm:$0x1]
      %v4208 = vld [vmem:[%s21] sm:$0x1]
      %v4209 = vsel %vm958, %v4206, 0.0
      %4210 = vadd.xlane.f32.xlu0 %v4209
      %v4211 = vpop.xlane.xlu0 %4210
      %v4212 = vmul.f32 %v4211, %v962
      %v4213 = vsub.f32 %v4206, %v4212
      %v4214 = vmul.f32 %v4213, %v4213
      %v4215 = vsel %vm958, %v4214, 0.0
      %4216 = vadd.xlane.f32.xlu0 %v4215
      %v4217 = vpop.xlane.xlu0 %4216
      %v4218 = vmul.f32 %v4217, %v962
      %v4219 = vadd.f32 %v4218, 1e-05
      %v4220 = vrsqrt.pop %v4219
      %v4221 = vmul.f32 %v4213, %v4220
      %v4223 = vlaneseq
      %v4224 = vshrl.u32 %v4223, 7
      %v4225 = vsub.s32 0, %v4224
      %v4226 = vrot.slane %v4207, %v4225
      %v4228 = vmul.f32 %v4221, %v4226
      %v4230 = vlaneseq
      %v4231 = vshrl.u32 %v4230, 7
      %v4232 = vsub.s32 0, %v4231
      %v4233 = vrot.slane %v4208, %v4232
      %v4235 = vadd.f32 %v4228, %v4233
      %v4236 = vsel %vm958, %v4235, 0.0
      %4237 = vst [vmem:[%s868] sm:$0xff] %v4236
      %v4238 = vld [vmem:[%s22] sm:$0xf]
      %v4239 = vld [vmem:[%s22 + $0x4] sm:$0xf]
      %v4240 = vld [vmem:[%s22 + $0x8] sm:$0xf]
      %v4241 = vld [vmem:[%s22 + $0xc] sm:$0xf]
      %v4242 = vpack.c.bf16 %v4235, %v4235
      %v4243 = vld [vmem:[%s23] sm:$0x1]
      %v4245 = vlaneseq
      %v4246 = vshrl.u32 %v4245, 7
      %v4247 = vsub.s32 0, %v4246
      %v4248 = vrot.slane %v4243, %v4247
      %v4254 = vunpack.c.l.b16 %v4238
      %v4255 = vunpack.c.l.b16 %v4239
      %v4256 = vunpack.c.l.b16 %v4240
      %v4257 = vunpack.c.l.b16 %v4241
      %v4258 = vpack.c.b16 %v4255, %v4254
      %v4259 = vpack.c.b16 %v4257, %v4256
      %v4263 = vsel %vm958, %v4242, 0
      %4265 = vmatprep.subr.bf16.mxu0 0
      %4266 = vmatpush1.bf16.msra.mxu0 %v4258
      %4267 = vmatprep.subr.bf16.mxu0 0
      %4268 = vmatpush1.bf16.msra.mxu0 %v4259
      %4269 = vmatprep.subr.bf16.mxu0 0
      %4270 = vmatpush1.bf16.msra.mxu0 0
      %4271 = vmatprep.subr.bf16.mxu0 0
      %4272 = vmatpush1.bf16.msra.mxu0 0
      %4273 = vmatprep.subr.bf16.mxu0 0
      %4274 = vmatpush1.bf16.msra.mxu0 0
      %4275 = vmatprep.subr.bf16.mxu0 0
      %4276 = vmatpush1.bf16.msra.mxu0 0
      %4277 = vmatprep.subr.bf16.mxu0 0
      %4278 = vmatpush1.bf16.msra.mxu0 0
      %4279 = vmatprep.subr.bf16.mxu0 0
      %4280 = vmatpush1.bf16.msra.mxu0 0
      %4281 = vmatprep.subr.bf16.mxu0 0
      %4282 = vmatpush1.bf16.msra.mxu0 0
      %4283 = vmatprep.subr.bf16.mxu0 0
      %4284 = vmatpush1.bf16.msra.mxu0 0
      %4285 = vmatprep.subr.bf16.mxu0 0
      %4286 = vmatpush1.bf16.msra.mxu0 0
      %4287 = vmatprep.subr.bf16.mxu0 0
      %4288 = vmatpush1.bf16.msra.mxu0 0
      %4289 = vmatprep.subr.bf16.mxu0 0
      %4290 = vmatpush1.bf16.msra.mxu0 0
      %4291 = vmatprep.subr.bf16.mxu0 0
      %4292 = vmatpush1.bf16.msra.mxu0 0
      %4293 = vmatprep.subr.bf16.mxu0 0
      %4294 = vmatpush1.bf16.msra.mxu0 0
      %4295 = vmatprep.subr.bf16.mxu0 0
      %4296 = vmatpush1.bf16.msra.mxu0 0
      %4297 = vmatprep.mubr.bf16.mxu0 0
      %4298 = vmatmul.mubr.bf16.gmra.mrb[0].mxu0 %v4263
      %v4299 = vpop.f32.mrb[0].mxu0
      %v4300 = vadd.f32 %v4248, %v4299
      %v4301 = vpop.f32.mrb[0].mxu0
      %v4302 = vpop.f32.mrb[0].mxu0
      %v4303 = vpop.f32.mrb[0].mxu0
      %4304 = vdwg.mxu0
      %v4305 = vmul.f32 %v4300, %v4300
      %v4306 = vmul.f32 %v4300, %v4305
      %v4307 = vmul.f32 %v4306, 0.044715
      %v4308 = vadd.f32 %v4300, %v4307
      %v4309 = vmul.f32 %v4308, 0.7978846
      %v4310 = vtanh.pop %v4309
      %v4311 = vadd.f32 %v4310, 1.0
      %v4312 = vmul.f32 %v4311, 0.5
      %v4313 = vmul.f32 %v4300, %v4312
      %v4314 = vld [vmem:[%s24] sm:$0x1]
      %v4315 = vld [vmem:[%s25] sm:$0x1]
      %v4316 = vsel %vm958, %v4313, 0.0
      %4317 = vadd.xlane.f32.xlu0 %v4316
      %v4318 = vpop.xlane.xlu0 %4317
      %v4319 = vmul.f32 %v4318, %v962
      %v4320 = vsub.f32 %v4313, %v4319
      %v4321 = vmul.f32 %v4320, %v4320
      %v4322 = vsel %vm958, %v4321, 0.0
      %4323 = vadd.xlane.f32.xlu0 %v4322
      %v4324 = vpop.xlane.xlu0 %4323
      %v4325 = vmul.f32 %v4324, %v962
      %v4326 = vadd.f32 %v4325, 1e-05
      %v4327 = vrsqrt.pop %v4326
      %v4328 = vmul.f32 %v4320, %v4327
      %v4330 = vlaneseq
      %v4331 = vshrl.u32 %v4330, 7
      %v4332 = vsub.s32 0, %v4331
      %v4333 = vrot.slane %v4314, %v4332
      %v4335 = vmul.f32 %v4328, %v4333
      %v4337 = vlaneseq
      %v4338 = vshrl.u32 %v4337, 7
      %v4339 = vsub.s32 0, %v4338
      %v4340 = vrot.slane %v4315, %v4339
      %v4342 = vadd.f32 %v4335, %v4340
      %v4343 = vld [vmem:[%s3] sm:$0xf]
      %v4344 = vld [vmem:[%s3 + $0x4] sm:$0xf]
      %v4345 = vld [vmem:[%s3 + $0x8] sm:$0xf]
      %v4346 = vld [vmem:[%s3 + $0xc] sm:$0xf]
      %v4347 = vpack.c.bf16 %v4342, %v4342
      %v4348 = vld [vmem:[%s26] sm:$0x1]
      %v4350 = vlaneseq
      %v4351 = vshrl.u32 %v4350, 7
      %v4352 = vsub.s32 0, %v4351
      %v4353 = vrot.slane %v4348, %v4352
      %v4359 = vunpack.c.l.b16 %v4343
      %v4360 = vunpack.c.l.b16 %v4344
      %v4361 = vunpack.c.l.b16 %v4345
      %v4362 = vunpack.c.l.b16 %v4346
      %v4363 = vpack.c.b16 %v4360, %v4359
      %v4364 = vpack.c.b16 %v4362, %v4361
      %v4368 = vsel %vm958, %v4347, 0
      %4370 = vmatprep.subr.bf16.mxu0 0
      %4371 = vmatpush1.bf16.msra.mxu0 %v4363
      %4372 = vmatprep.subr.bf16.mxu0 0
      %4373 = vmatpush1.bf16.msra.mxu0 %v4364
      %4374 = vmatprep.subr.bf16.mxu0 0
      %4375 = vmatpush1.bf16.msra.mxu0 0
      %4376 = vmatprep.subr.bf16.mxu0 0
      %4377 = vmatpush1.bf16.msra.mxu0 0
      %4378 = vmatprep.subr.bf16.mxu0 0
      %4379 = vmatpush1.bf16.msra.mxu0 0
      %4380 = vmatprep.subr.bf16.mxu0 0
      %4381 = vmatpush1.bf16.msra.mxu0 0
      %4382 = vmatprep.subr.bf16.mxu0 0
      %4383 = vmatpush1.bf16.msra.mxu0 0
      %4384 = vmatprep.subr.bf16.mxu0 0
      %4385 = vmatpush1.bf16.msra.mxu0 0
      %4386 = vmatprep.subr.bf16.mxu0 0
      %4387 = vmatpush1.bf16.msra.mxu0 0
      %4388 = vmatprep.subr.bf16.mxu0 0
      %4389 = vmatpush1.bf16.msra.mxu0 0
      %4390 = vmatprep.subr.bf16.mxu0 0
      %4391 = vmatpush1.bf16.msra.mxu0 0
      %4392 = vmatprep.subr.bf16.mxu0 0
      %4393 = vmatpush1.bf16.msra.mxu0 0
      %4394 = vmatprep.subr.bf16.mxu0 0
      %4395 = vmatpush1.bf16.msra.mxu0 0
      %4396 = vmatprep.subr.bf16.mxu0 0
      %4397 = vmatpush1.bf16.msra.mxu0 0
      %4398 = vmatprep.subr.bf16.mxu0 0
      %4399 = vmatpush1.bf16.msra.mxu0 0
      %4400 = vmatprep.subr.bf16.mxu0 0
      %4401 = vmatpush1.bf16.msra.mxu0 0
      %4402 = vmatprep.mubr.bf16.mxu0 0
      %4403 = vmatmul.mubr.bf16.gmra.mrb[0].mxu0 %v4368
      %v4404 = vpop.f32.mrb[0].mxu0
      %v4405 = vadd.f32 %v4353, %v4404
      %v4406 = vpop.f32.mrb[0].mxu0
      %v4407 = vpop.f32.mrb[0].mxu0
      %v4408 = vpop.f32.mrb[0].mxu0
      %4409 = vdwg.mxu0
      %4410 = vst [vmem:[%s864] sm:$0xff] %v4405
      %p4411 = scmp.lt.s32.totalorder %s40, 1
      %s4412 = scalar_select %p4411, %s40, 1
      %s4413 = smul.addr %s4412, 8
      %s4414 = scalar_lea.vmem %s27, %s4413
      %p4415 = scmp.lt.s32.totalorder %s40, 1
      %s4416 = scalar_select %p4415, %s40, 1
      %s4417 = smul.addr %s4416, 8
      %s4418 = scalar_lea.vmem %s28, %s4417
      // Predicated region
      $region129: #{dplm_forward.1} parent=127 // pred_check
        %p4419 = pneg %p635
      $region130: #{dplm_forward.1} parent=127 // pred_check_branch
        %4421 = sbr.rel (%p4419) target = $region132
      $region131: #{dplm_forward.1} parent=127 // pred_region
        _
      $region132: #{dplm_forward.1} parent=127 // pred_fallthru
        _
      // Predicated region
      $region133: #{dplm_forward.1} parent=127 // pred_check
        %p4422 = pneg %p661
      $region134: #{dplm_forward.1} parent=127 // pred_check_branch
        %4424 = sbr.rel (%p4422) target = $region136
      $region135: #{dplm_forward.1} parent=127 // pred_region
        _
      $region136: #{dplm_forward.1} parent=127 // pred_fallthru
        _
    $region128: #{dplm_forward.1} parent=5 // pred_fallthru
      _
    %p4425 = scmp.le.s32.totalorder 2, %s35
    // Predicated region
    $region137: #{dplm_forward.1} parent=5 // pred_check
      %p4426 = pneg %p4425
    $region138: #{dplm_forward.1} parent=5 // pred_check_branch
      %4428 = sbr.rel (%p4426) target = $region140
    $region139: #{dplm_forward.1} parent=5 // pred_region
      %s4429 = ssub.s32 %s35, 2
      // Predicated region
      $region141: #{dplm_forward.1} parent=139 // pred_check
        %p4430 = pneg %p641
      $region142: #{dplm_forward.1} parent=139 // pred_check_branch
        %4432 = sbr.rel (%p4430) target = $region144
      $region143: #{dplm_forward.1} parent=139 // pred_region
        %p4433 = scmp.lt.s32.totalorder %s41, 1
        %s4434 = scalar_select %p4433, %s41, 1
        %s4435 = smul.addr %s4434, 8
        %s4436 = scalar_lea.vmem %s27, %s4435
      $region144: #{dplm_forward.1} parent=139 // pred_fallthru
        _
      // Predicated region
      $region145: #{dplm_forward.1} parent=139 // pred_check
        %p4437 = pneg %p667
      $region146: #{dplm_forward.1} parent=139 // pred_check_branch
        %4439 = sbr.rel (%p4437) target = $region148
      $region147: #{dplm_forward.1} parent=139 // pred_region
        %p4440 = scmp.lt.s32.totalorder %s41, 1
        %s4441 = scalar_select %p4440, %s41, 1
        %s4442 = smul.addr %s4441, 8
        %s4443 = scalar_lea.vmem %s28, %s4442
      $region148: #{dplm_forward.1} parent=139 // pred_fallthru
        _
    $region140: #{dplm_forward.1} parent=5 // pred_fallthru
      _
  $region6: #{dplm_forward.1} parent=0 // loop_footer
    %s39 = sadd.s32 1, %s35
  $region7: #{dplm_forward.1} parent=0 // loop_footer_branch
    %34 = sbr.rel target = $region3
  $region8: #{dplm_forward.1} parent=0 // loop_exit
    _

</llo_original>
